<compile_context>
chip_gen: v7x
topology: tpu7x:2x2x1
jax: 0.10.0
libtpu: 0.0.40
codegen_flags: <defaults>
</compile_context>

<pallas_src>
import math

import numpy as np
import jax
import jax.numpy as jnp
from jax.experimental import pallas as pl
from jax.experimental.pallas import tpu as pltpu


# --------------------------------------------------------------------------
# Resampling matrices (PyTorch semantics), numpy at parameter-prep time
# --------------------------------------------------------------------------
def adaptive_pool_matrix(in_size, out_size):
    # F.adaptive_avg_pool2d window along one axis:
    #   [floor(i*in/out), ceil((i+1)*in/out)), uniform weights.
    mat = np.zeros((out_size, in_size), dtype=np.float32)
    for i in range(out_size):
        start = (i * in_size) // out_size
        end = -((-(i + 1) * in_size) // out_size)          # ceil division
        mat[i, start:end] = 1.0 / (end - start)
    return mat


def bilinear_upsample_matrix(in_size, out_size):
    # F.interpolate(mode='bilinear', align_corners=True), separable per axis.
    mat = np.zeros((out_size, in_size), dtype=np.float32)
    if in_size == 1:
        mat[:, 0] = 1.0
        return mat
    if out_size == 1:
        mat[0, 0] = 1.0
        return mat
    scale = (in_size - 1) / (out_size - 1)
    for i in range(out_size):
        src = i * scale
        lo = min(int(math.floor(src)), in_size - 2)
        frac = src - lo
        mat[i, lo] = 1.0 - frac
        mat[i, lo + 1] = frac
    return mat


# --------------------------------------------------------------------------
# Fused SPP kernel
# --------------------------------------------------------------------------
def _make_spp_kernel(num_levels):
    """Ref order (L = b_blk*H*W, GPb = b_blk*128 packed/padded grid cells):
         x      (Cin, L)        f32
         bn0    (2, Cin, 1)     f32   spp_bn folded BN scale/shift
         w0     (bt, Cin)       bf16  spp_bn 1x1 conv weight
         pt     (L, GPb)        bf16  packed pool operator (block-diag / batch)
         bnp    (2, bt, GPb)    f32   per-column (per-level) BN scale/shift map
         wl     (nl, ls, bt)    bf16  per-level 1x1 conv weights
         ut     (nl, GPb, L)    bf16  per-level zero-padded upsample operator
         bnf0   (2, bt, 1)      f32   spp_fuse scale/shift rows for f0 chunk
         bnfl   (nl, 2, ls, 1)  f32   spp_fuse scale/shift rows per level
         wf0    (out, bt)       bf16  spp_fuse weight columns for f0 chunk
         wfl    (nl, out, ls)   bf16  spp_fuse weight columns per level
         out    (out, L)        f32
    """
    bf16 = jnp.bfloat16
    f32 = jnp.float32

    def kernel(x_ref, bn0_ref, w0_ref, pt_ref, bnp_ref, wl_ref, ut_ref,
               bnf0_ref, bnfl_ref, wf0_ref, wfl_ref, out_ref):
        # ---- spp_bn: BN(eval) + ReLU + 1x1 conv (elementwise stays f32) ----
        bn0 = bn0_ref[...]
        h0 = jnp.maximum(x_ref[...] * bn0[0] + bn0[1], 0.0)            # (Cin, L)
        f0 = jnp.dot(w0_ref[...], h0.astype(bf16),
                     preferred_element_type=f32)                       # (bt, L)

        # ---- direct (unpooled) branch straight into spp_fuse (no concat) ----
        bnf0 = bnf0_ref[...]
        hf0 = jnp.maximum(f0 * bnf0[0] + bnf0[1], 0.0)
        acc = jnp.dot(wf0_ref[...], hf0.astype(bf16),
                      preferred_element_type=f32)                      # (out, L)

        # ---- every pyramid level pooled by ONE lane-dense matmul ----
        pooled = jnp.dot(f0.astype(bf16), pt_ref[...],
                         preferred_element_type=f32)                   # (bt, GPb)
        bnp = bnp_ref[...]
        hp = jnp.maximum(pooled * bnp[0] + bnp[1], 0.0).astype(bf16)   # (bt, GPb)

        for i in range(num_levels):
            # Per-level 1x1 conv on the packed pooled block; the zero rows of
            # ut[i] cancel the columns belonging to other levels / padding.
            lev = jnp.dot(wl_ref[i], hp,
                          preferred_element_type=f32)                  # (ls, GPb)
            feat = jnp.dot(lev.astype(bf16), ut_ref[i],
                           preferred_element_type=f32)                 # (ls, L)
            bnfl = bnfl_ref[i]
            hfi = jnp.maximum(feat * bnfl[0] + bnfl[1], 0.0)
            acc = acc + jnp.dot(wfl_ref[i], hfi.astype(bf16),
                                preferred_element_type=f32)            # (out, L)

        out_ref[...] = acc

    return kernel


def _rep_spec(shape):
    # Full-array block, replicated across the grid (constant index map).
    zero = (0,) * len(shape)
    return pl.BlockSpec(shape, lambda b, _z=zero: _z)


def spatial_pyramid_pooling(x_nchw, kp, num_levels, b_blk):
    """Fused SPP forward. x_nchw: (N, Cin, H, W) f32 -> (N, out, H, W) f32."""
    n, cin, H, W = x_nchw.shape
    assert n % b_blk == 0, (n, b_blk)
    hw = H * W
    L = b_blk * hw
    out_c = kp["wf0"].shape[0]
    bt = kp["w0"].shape[0]
    ls = kp["wl"].shape[1]
    gpL = kp["pt"].shape[1]

    # Channels-major with the batch folded into the lane axis (one tiny XLA
    # transpose outside the kernel); every in-kernel dot is then lane-dense.
    x2 = jnp.transpose(x_nchw, (1, 0, 2, 3)).reshape(cin, n * hw)

    const_names = ("bn0", "w0", "pt", "bnp", "wl", "ut",
                   "bnf0", "bnfl", "wf0", "wfl")
    consts = [kp[k] for k in const_names]
    in_specs = [pl.BlockSpec((cin, L), lambda b: (0, b))]
    in_specs += [_rep_spec(c.shape) for c in consts]

    # Advisory cost estimate so XLA schedules around the fused call.
    n_blocks = n // b_blk
    flops_blk = (2 * bt * cin * L + 2 * out_c * bt * L + 2 * bt * L * gpL
                 + num_levels * (2 * ls * bt * gpL + 2 * ls * gpL * L
                                 + 2 * out_c * ls * L))
    bytes_accessed = int(x2.size * 4 + n * out_c * hw * 4
                         + sum(int(c.size) * c.dtype.itemsize for c in consts))
    cost = pl.CostEstimate(flops=int(flops_blk * n_blocks),
                           transcendentals=0,
                           bytes_accessed=bytes_accessed)

    out = pl.pallas_call(
        _make_spp_kernel(num_levels),
        out_shape=jax.ShapeDtypeStruct((out_c, n * hw), jnp.float32),
        grid=(n_blocks,),
        in_specs=in_specs,
        out_specs=pl.BlockSpec((out_c, L), lambda b: (0, b)),
        compiler_params=pltpu.CompilerParams(
            dimension_semantics=("parallel",)),
        cost_estimate=cost,
    )(x2, *consts)
    return jnp.transpose(out.reshape(out_c, n, H, W), (1, 0, 2, 3))


# --------------------------------------------------------------------------
# Parameter preparation (hoisted out of the forward, done once)
# --------------------------------------------------------------------------
def prepare_kernel_params(params, grids, num_levels, H, W, b_blk):
    ar = W / H                                  # target_size[1] / target_size[0]
    hw = H * W

    def fold(p):
        s, b, w = p
        return (np.asarray(s, np.float32), np.asarray(b, np.float32),
                np.asarray(w, np.float32))

    sc0, sh0, w0 = fold(params["spp_bn"])
    bt = w0.shape[0]
    sc_f, sh_f, wf = fold(params["spp_fuse"])
    out_c = wf.shape[0]
    ls = fold(params["spp0"])[2].shape[0]

    # Level geometry matches the module: (grids[i], max(1, round(ar*grids[i]))).
    geoms = []
    offs = [0]
    for i in range(num_levels):
        g = grids[i]
        gh, gw = g, max(1, round(ar * g))
        geoms.append((gh, gw))
        offs.append(offs[-1] + gh * gw)
    gp_sum = offs[-1]
    GP = max(128, ((gp_sum + 127) // 128) * 128)   # pad packed cells to lanes

    # Packed pool operator, per-level padded upsample, per-column BN maps.
    PT = np.zeros((hw, GP), np.float32)
    UT = np.zeros((num_levels, GP, hw), np.float32)
    sc_map = np.zeros((bt, GP), np.float32)
    sh_map = np.zeros((bt, GP), np.float32)
    wl = np.zeros((num_levels, ls, bt), np.float32)
    bnfl = np.zeros((num_levels, 2, ls, 1), np.float32)
    wfl = np.zeros((num_levels, out_c, ls), np.float32)
    for i, (gh, gw) in enumerate(geoms):
        lo, hi = offs[i], offs[i + 1]
        pool = np.kron(adaptive_pool_matrix(H, gh),
                       adaptive_pool_matrix(W, gw))            # (gp_i, hw)
        up = np.kron(bilinear_upsample_matrix(gh, H),
                     bilinear_upsample_matrix(gw, W))          # (hw, gp_i)
        PT[:, lo:hi] = pool.T
        UT[i, lo:hi, :] = up.T
        sc_i, sh_i, w_i = fold(params[f"spp{i}"])
        sc_map[:, lo:hi] = sc_i[:, None]
        sh_map[:, lo:hi] = sh_i[:, None]
        wl[i] = w_i
        flo, fhi = bt + i * ls, bt + (i + 1) * ls
        bnfl[i, 0, :, 0] = sc_f[flo:fhi]
        bnfl[i, 1, :, 0] = sh_f[flo:fhi]
        wfl[i] = wf[:, flo:fhi]

    # Fold the per-image operators block-diagonally over the batch block so the
    # kernel stays pure 2-D lane-dense matmuls (batch folded into lanes).
    PT_big = np.zeros((b_blk * hw, b_blk * GP), np.float32)
    UT_big = np.zeros((num_levels, b_blk * GP, b_blk * hw), np.float32)
    for b in range(b_blk):
        PT_big[b * hw:(b + 1) * hw, b * GP:(b + 1) * GP] = PT
        UT_big[:, b * GP:(b + 1) * GP, b * hw:(b + 1) * hw] = UT

    bf16, f32 = jnp.bfloat16, jnp.float32
    return {
        "bn0": jnp.asarray(np.stack([sc0[:, None], sh0[:, None]]), f32),
        "w0": jnp.asarray(w0, bf16),
        "pt": jnp.asarray(PT_big, bf16),
        "bnp": jnp.asarray(np.stack([np.tile(sc_map, (1, b_blk)),
                                     np.tile(sh_map, (1, b_blk))]), f32),
        "wl": jnp.asarray(wl, bf16),
        "ut": jnp.asarray(UT_big, bf16),
        "bnf0": jnp.asarray(np.stack([sc_f[:bt, None], sh_f[:bt, None]]), f32),
        "bnfl": jnp.asarray(bnfl, f32),
        "wf0": jnp.asarray(wf[:, :bt], bf16),
        "wfl": jnp.asarray(wfl, bf16),
    }


# --------------------------------------------------------------------------
# Parameter init (deterministic, synthetic) and pure-JAX reference
# --------------------------------------------------------------------------
def make_block_params(key, cin, cout):
    k1, k2, k3, k4, k5 = jax.random.split(key, 5)
    gamma = jax.random.uniform(k1, (cin,), minval=0.5, maxval=1.5)
    beta = 0.1 * jax.random.normal(k2, (cin,))
    rmean = 0.1 * jax.random.normal(k3, (cin,))
    rvar = jax.random.uniform(k4, (cin,), minval=0.5, maxval=1.5)
    w = jax.random.normal(k5, (cout, cin)) / jnp.sqrt(cin)
    eps = 1e-5
    scale = gamma / jnp.sqrt(rvar + eps)
    shift = beta - rmean * scale
    return (scale.astype(jnp.float32), shift.astype(jnp.float32),
            w.astype(jnp.float32))


def reference_forward(x, params, grids, num_levels):
    hp = jax.lax.Precision.HIGHEST

    def brc(x, p):
        scale, shift, w = p
        h = jnp.maximum(
            x * scale[None, :, None, None] + shift[None, :, None, None], 0.0)
        return jnp.einsum("nchw,oc->nohw", h, w, precision=hp)

    def rs(x, a, b):
        return jnp.einsum("ih,nchw,jw->ncij",
                          jnp.asarray(a), x, jnp.asarray(b), precision=hp)

    n, c, H, W = x.shape
    ar = W / H
    x = brc(x, params["spp_bn"])
    levels = [x]
    for i in range(num_levels):
        g = grids[i]
        gh, gw = g, max(1, round(ar * g))
        xp = rs(x, adaptive_pool_matrix(H, gh), adaptive_pool_matrix(W, gw))
        lv = brc(xp, params[f"spp{i}"])
        lv = rs(lv, bilinear_upsample_matrix(gh, H),
                bilinear_upsample_matrix(gw, W))
        levels.append(lv)
    x = jnp.concatenate(levels, axis=1)
    return brc(x, params["spp_fuse"])


# --------------------------------------------------------------------------
if __name__ == "__main__":
    key = jax.random.PRNGKey(0)
    N, Cin, H, W = 4, 8, 16, 16
    num_levels = 3
    bt_size, level_size, out_size = 32, 16, 16
    grids = (6, 3, 2, 1)
    b_blk = 2                    # images per grid step; grid length = N//b_blk

    keys = jax.random.split(key, 3 + num_levels)
    x = jax.random.normal(keys[0], (N, Cin, H, W), dtype=jnp.float32)

    params = {"spp_bn": make_block_params(keys[1], Cin, bt_size)}
    for i in range(num_levels):
        params[f"spp{i}"] = make_block_params(keys[2 + i], bt_size, level_size)
    final_size = bt_size + num_levels * level_size
    params["spp_fuse"] = make_block_params(keys[2 + num_levels],
                                           final_size, out_size)

    kp = prepare_kernel_params(params, grids, num_levels, H, W, b_blk)
    out = spatial_pyramid_pooling(x, kp, num_levels, b_blk)
    out = jax.block_until_ready(out)

    ref = reference_forward(x, params, grids, num_levels)
    assert out.shape == (N, out_size, H, W), out.shape
    assert bool(jnp.all(jnp.isfinite(out)))
    # bf16 MXU operands (f32 accumulation) vs a HIGHEST-precision f32 reference.
    assert bool(jnp.allclose(out, ref, atol=5e-2, rtol=5e-2)), \
        float(jnp.max(jnp.abs(out - ref)))
    print("KERNEL_OK")
</pallas_src>

<mosaic_0001>
module attributes {stable_mosaic.version = 11 : i64} {
  func.func @kernel(%arg0: i32, %arg1: memref<8x512xf32, #tpu.memory_space<vmem>>, %arg2: memref<2x8x1xf32, #tpu.memory_space<vmem>>, %arg3: memref<32x8xbf16, #tpu.memory_space<vmem>>, %arg4: memref<512x256xbf16, #tpu.memory_space<vmem>>, %arg5: memref<2x32x256xf32, #tpu.memory_space<vmem>>, %arg6: memref<3x16x32xbf16, #tpu.memory_space<vmem>>, %arg7: memref<3x256x512xbf16, #tpu.memory_space<vmem>>, %arg8: memref<2x32x1xf32, #tpu.memory_space<vmem>>, %arg9: memref<3x2x16x1xf32, #tpu.memory_space<vmem>>, %arg10: memref<16x32xbf16, #tpu.memory_space<vmem>>, %arg11: memref<3x16x16xbf16, #tpu.memory_space<vmem>>, %arg12: memref<16x512xf32, #tpu.memory_space<vmem>>) attributes {dimension_semantics = [#tpu.dimension_semantics<parallel>], iteration_bounds = array<i64: 2>, scalar_prefetch = 0 : i64, scratch_operands = 0 : i64, tpu.core_type = #tpu.core_type<tc>, window_params = [{transform_indices = @transform_0, window_bounds = array<i64: 8, 512>}, {pipeline_mode = #tpu.pipeline_mode<synchronous>, transform_indices = @transform_1, window_bounds = array<i64: 2, 8, 1>}, {pipeline_mode = #tpu.pipeline_mode<synchronous>, transform_indices = @transform_2, window_bounds = array<i64: 32, 8>}, {pipeline_mode = #tpu.pipeline_mode<synchronous>, transform_indices = @transform_3, window_bounds = array<i64: 512, 256>}, {pipeline_mode = #tpu.pipeline_mode<synchronous>, transform_indices = @transform_4, window_bounds = array<i64: 2, 32, 256>}, {pipeline_mode = #tpu.pipeline_mode<synchronous>, transform_indices = @transform_5, window_bounds = array<i64: 3, 16, 32>}, {pipeline_mode = #tpu.pipeline_mode<synchronous>, transform_indices = @transform_6, window_bounds = array<i64: 3, 256, 512>}, {pipeline_mode = #tpu.pipeline_mode<synchronous>, transform_indices = @transform_7, window_bounds = array<i64: 2, 32, 1>}, {pipeline_mode = #tpu.pipeline_mode<synchronous>, transform_indices = @transform_8, window_bounds = array<i64: 3, 2, 16, 1>}, {pipeline_mode = #tpu.pipeline_mode<synchronous>, transform_indices = @transform_9, window_bounds = array<i64: 16, 32>}, {pipeline_mode = #tpu.pipeline_mode<synchronous>, transform_indices = @transform_10, window_bounds = array<i64: 3, 16, 16>}, {transform_indices = @transform_11, window_bounds = array<i64: 16, 512>}]} {
    %c0 = arith.constant 0 : index
    %c0_0 = arith.constant 0 : index
    %c0_1 = arith.constant 0 : index
    %0 = vector.load %arg2[%c0, %c0_0, %c0_1] : memref<2x8x1xf32, #tpu.memory_space<vmem>>, vector<2x8x1xf32>
    %c0_2 = arith.constant 0 : index
    %c0_3 = arith.constant 0 : index
    %1 = vector.load %arg1[%c0_2, %c0_3] : memref<8x512xf32, #tpu.memory_space<vmem>>, vector<8x512xf32>
    %2 = vector.extract_strided_slice %0 {offsets = [0, 0, 0], sizes = [1, 8, 1], strides = [1, 1, 1]} : vector<2x8x1xf32> to vector<1x8x1xf32>
    %3 = vector.shape_cast %2 : vector<1x8x1xf32> to vector<8x1xf32>
    %4 = vector.broadcast %3 : vector<8x1xf32> to vector<8x512xf32>
    %5 = arith.mulf %1, %4 : vector<8x512xf32>
    %6 = vector.extract_strided_slice %0 {offsets = [1, 0, 0], sizes = [1, 8, 1], strides = [1, 1, 1]} : vector<2x8x1xf32> to vector<1x8x1xf32>
    %7 = vector.shape_cast %6 : vector<1x8x1xf32> to vector<8x1xf32>
    %8 = vector.broadcast %7 : vector<8x1xf32> to vector<8x512xf32>
    %9 = arith.addf %5, %8 : vector<8x512xf32>
    %cst = arith.constant 0.000000e+00 : f32
    %10 = vector.broadcast %cst : f32 to vector<8x512xf32>
    %11 = arith.maximumf %9, %10 : vector<8x512xf32>
    %c0_4 = arith.constant 0 : index
    %c0_5 = arith.constant 0 : index
    %12 = vector.load %arg3[%c0_4, %c0_5] : memref<32x8xbf16, #tpu.memory_space<vmem>>, vector<32x8xbf16>
    %13 = arith.truncf %11 : vector<8x512xf32> to vector<8x512xbf16>
    %cst_6 = arith.constant dense<0.000000e+00> : vector<32x512xf32>
    %14 = tpu.matmul %12, %13, %cst_6 {dimension_numbers = #tpu.dot_dimension_numbers<[1], [0], [0], [1], [0, 0, 1, 1], [], []>} : vector<32x8xbf16>, vector<8x512xbf16>, vector<32x512xf32> -> vector<32x512xf32>
    %c0_7 = arith.constant 0 : index
    %c0_8 = arith.constant 0 : index
    %c0_9 = arith.constant 0 : index
    %15 = vector.load %arg8[%c0_7, %c0_8, %c0_9] : memref<2x32x1xf32, #tpu.memory_space<vmem>>, vector<2x32x1xf32>
    %16 = vector.extract_strided_slice %15 {offsets = [0, 0, 0], sizes = [1, 32, 1], strides = [1, 1, 1]} : vector<2x32x1xf32> to vector<1x32x1xf32>
    %17 = vector.shape_cast %16 : vector<1x32x1xf32> to vector<32x1xf32>
    %18 = vector.broadcast %17 : vector<32x1xf32> to vector<32x512xf32>
    %19 = arith.mulf %14, %18 : vector<32x512xf32>
    %20 = vector.extract_strided_slice %15 {offsets = [1, 0, 0], sizes = [1, 32, 1], strides = [1, 1, 1]} : vector<2x32x1xf32> to vector<1x32x1xf32>
    %21 = vector.shape_cast %20 : vector<1x32x1xf32> to vector<32x1xf32>
    %22 = vector.broadcast %21 : vector<32x1xf32> to vector<32x512xf32>
    %23 = arith.addf %19, %22 : vector<32x512xf32>
    %cst_10 = arith.constant 0.000000e+00 : f32
    %24 = vector.broadcast %cst_10 : f32 to vector<32x512xf32>
    %25 = arith.maximumf %23, %24 : vector<32x512xf32>
    %c0_11 = arith.constant 0 : index
    %c0_12 = arith.constant 0 : index
    %26 = vector.load %arg10[%c0_11, %c0_12] : memref<16x32xbf16, #tpu.memory_space<vmem>>, vector<16x32xbf16>
    %27 = arith.truncf %25 : vector<32x512xf32> to vector<32x512xbf16>
    %cst_13 = arith.constant dense<0.000000e+00> : vector<16x512xf32>
    %28 = tpu.matmul %26, %27, %cst_13 {dimension_numbers = #tpu.dot_dimension_numbers<[1], [0], [0], [1], [0, 0, 1, 1], [], []>} : vector<16x32xbf16>, vector<32x512xbf16>, vector<16x512xf32> -> vector<16x512xf32>
    %29 = arith.truncf %14 : vector<32x512xf32> to vector<32x512xbf16>
    %c0_14 = arith.constant 0 : index
    %c0_15 = arith.constant 0 : index
    %30 = vector.load %arg4[%c0_14, %c0_15] : memref<512x256xbf16, #tpu.memory_space<vmem>>, vector<512x256xbf16>
    %cst_16 = arith.constant dense<0.000000e+00> : vector<32x256xf32>
    %31 = tpu.matmul %29, %30, %cst_16 {dimension_numbers = #tpu.dot_dimension_numbers<[1], [0], [0], [1], [0, 0, 1, 1], [], []>} : vector<32x512xbf16>, vector<512x256xbf16>, vector<32x256xf32> -> vector<32x256xf32>
    %c0_17 = arith.constant 0 : index
    %c0_18 = arith.constant 0 : index
    %c0_19 = arith.constant 0 : index
    %32 = vector.load %arg5[%c0_17, %c0_18, %c0_19] : memref<2x32x256xf32, #tpu.memory_space<vmem>>, vector<2x32x256xf32>
    %33 = vector.extract_strided_slice %32 {offsets = [0, 0, 0], sizes = [1, 32, 256], strides = [1, 1, 1]} : vector<2x32x256xf32> to vector<1x32x256xf32>
    %34 = vector.shape_cast %33 : vector<1x32x256xf32> to vector<32x256xf32>
    %35 = arith.mulf %31, %34 : vector<32x256xf32>
    %36 = vector.extract_strided_slice %32 {offsets = [1, 0, 0], sizes = [1, 32, 256], strides = [1, 1, 1]} : vector<2x32x256xf32> to vector<1x32x256xf32>
    %37 = vector.shape_cast %36 : vector<1x32x256xf32> to vector<32x256xf32>
    %38 = arith.addf %35, %37 : vector<32x256xf32>
    %cst_20 = arith.constant 0.000000e+00 : f32
    %39 = vector.broadcast %cst_20 : f32 to vector<32x256xf32>
    %40 = arith.maximumf %38, %39 : vector<32x256xf32>
    %41 = arith.truncf %40 : vector<32x256xf32> to vector<32x256xbf16>
    %c0_21 = arith.constant 0 : index
    %c0_22 = arith.constant 0 : index
    %c0_23 = arith.constant 0 : index
    %42 = vector.load %arg6[%c0_21, %c0_22, %c0_23] : memref<3x16x32xbf16, #tpu.memory_space<vmem>>, vector<1x16x32xbf16>
    %43 = vector.shape_cast %42 : vector<1x16x32xbf16> to vector<16x32xbf16>
    %cst_24 = arith.constant dense<0.000000e+00> : vector<16x256xf32>
    %44 = tpu.matmul %43, %41, %cst_24 {dimension_numbers = #tpu.dot_dimension_numbers<[1], [0], [0], [1], [0, 0, 1, 1], [], []>} : vector<16x32xbf16>, vector<32x256xbf16>, vector<16x256xf32> -> vector<16x256xf32>
    %45 = arith.truncf %44 : vector<16x256xf32> to vector<16x256xbf16>
    %c0_25 = arith.constant 0 : index
    %c0_26 = arith.constant 0 : index
    %c0_27 = arith.constant 0 : index
    %46 = vector.load %arg7[%c0_25, %c0_26, %c0_27] : memref<3x256x512xbf16, #tpu.memory_space<vmem>>, vector<1x256x512xbf16>
    %47 = vector.shape_cast %46 : vector<1x256x512xbf16> to vector<256x512xbf16>
    %cst_28 = arith.constant dense<0.000000e+00> : vector<16x512xf32>
    %48 = tpu.matmul %45, %47, %cst_28 {dimension_numbers = #tpu.dot_dimension_numbers<[1], [0], [0], [1], [0, 0, 1, 1], [], []>} : vector<16x256xbf16>, vector<256x512xbf16>, vector<16x512xf32> -> vector<16x512xf32>
    %c0_29 = arith.constant 0 : index
    %c0_30 = arith.constant 0 : index
    %c0_31 = arith.constant 0 : index
    %c0_32 = arith.constant 0 : index
    %49 = vector.load %arg9[%c0_29, %c0_30, %c0_31, %c0_32] : memref<3x2x16x1xf32, #tpu.memory_space<vmem>>, vector<1x2x16x1xf32>
    %50 = vector.shape_cast %49 : vector<1x2x16x1xf32> to vector<2x16x1xf32>
    %51 = vector.extract_strided_slice %50 {offsets = [0, 0, 0], sizes = [1, 16, 1], strides = [1, 1, 1]} : vector<2x16x1xf32> to vector<1x16x1xf32>
    %52 = vector.shape_cast %51 : vector<1x16x1xf32> to vector<16x1xf32>
    %53 = vector.broadcast %52 : vector<16x1xf32> to vector<16x512xf32>
    %54 = arith.mulf %48, %53 : vector<16x512xf32>
    %55 = vector.extract_strided_slice %50 {offsets = [1, 0, 0], sizes = [1, 16, 1], strides = [1, 1, 1]} : vector<2x16x1xf32> to vector<1x16x1xf32>
    %56 = vector.shape_cast %55 : vector<1x16x1xf32> to vector<16x1xf32>
    %57 = vector.broadcast %56 : vector<16x1xf32> to vector<16x512xf32>
    %58 = arith.addf %54, %57 : vector<16x512xf32>
    %cst_33 = arith.constant 0.000000e+00 : f32
    %59 = vector.broadcast %cst_33 : f32 to vector<16x512xf32>
    %60 = arith.maximumf %58, %59 : vector<16x512xf32>
    %c0_34 = arith.constant 0 : index
    %c0_35 = arith.constant 0 : index
    %c0_36 = arith.constant 0 : index
    %61 = vector.load %arg11[%c0_34, %c0_35, %c0_36] : memref<3x16x16xbf16, #tpu.memory_space<vmem>>, vector<1x16x16xbf16>
    %62 = vector.shape_cast %61 : vector<1x16x16xbf16> to vector<16x16xbf16>
    %63 = arith.truncf %60 : vector<16x512xf32> to vector<16x512xbf16>
    %cst_37 = arith.constant dense<0.000000e+00> : vector<16x512xf32>
    %64 = tpu.matmul %62, %63, %cst_37 {dimension_numbers = #tpu.dot_dimension_numbers<[1], [0], [0], [1], [0, 0, 1, 1], [], []>} : vector<16x16xbf16>, vector<16x512xbf16>, vector<16x512xf32> -> vector<16x512xf32>
    %65 = arith.addf %28, %64 : vector<16x512xf32>
    %c1 = arith.constant 1 : index
    %c0_38 = arith.constant 0 : index
    %c0_39 = arith.constant 0 : index
    %66 = vector.load %arg6[%c1, %c0_38, %c0_39] : memref<3x16x32xbf16, #tpu.memory_space<vmem>>, vector<1x16x32xbf16>
    %67 = vector.shape_cast %66 : vector<1x16x32xbf16> to vector<16x32xbf16>
    %cst_40 = arith.constant dense<0.000000e+00> : vector<16x256xf32>
    %68 = tpu.matmul %67, %41, %cst_40 {dimension_numbers = #tpu.dot_dimension_numbers<[1], [0], [0], [1], [0, 0, 1, 1], [], []>} : vector<16x32xbf16>, vector<32x256xbf16>, vector<16x256xf32> -> vector<16x256xf32>
    %69 = arith.truncf %68 : vector<16x256xf32> to vector<16x256xbf16>
    %c1_41 = arith.constant 1 : index
    %c0_42 = arith.constant 0 : index
    %c0_43 = arith.constant 0 : index
    %70 = vector.load %arg7[%c1_41, %c0_42, %c0_43] : memref<3x256x512xbf16, #tpu.memory_space<vmem>>, vector<1x256x512xbf16>
    %71 = vector.shape_cast %70 : vector<1x256x512xbf16> to vector<256x512xbf16>
    %cst_44 = arith.constant dense<0.000000e+00> : vector<16x512xf32>
    %72 = tpu.matmul %69, %71, %cst_44 {dimension_numbers = #tpu.dot_dimension_numbers<[1], [0], [0], [1], [0, 0, 1, 1], [], []>} : vector<16x256xbf16>, vector<256x512xbf16>, vector<16x512xf32> -> vector<16x512xf32>
    %c1_45 = arith.constant 1 : index
    %c0_46 = arith.constant 0 : index
    %c0_47 = arith.constant 0 : index
    %c0_48 = arith.constant 0 : index
    %73 = vector.load %arg9[%c1_45, %c0_46, %c0_47, %c0_48] : memref<3x2x16x1xf32, #tpu.memory_space<vmem>>, vector<1x2x16x1xf32>
    %74 = vector.shape_cast %73 : vector<1x2x16x1xf32> to vector<2x16x1xf32>
    %75 = vector.extract_strided_slice %74 {offsets = [0, 0, 0], sizes = [1, 16, 1], strides = [1, 1, 1]} : vector<2x16x1xf32> to vector<1x16x1xf32>
    %76 = vector.shape_cast %75 : vector<1x16x1xf32> to vector<16x1xf32>
    %77 = vector.broadcast %76 : vector<16x1xf32> to vector<16x512xf32>
    %78 = arith.mulf %72, %77 : vector<16x512xf32>
    %79 = vector.extract_strided_slice %74 {offsets = [1, 0, 0], sizes = [1, 16, 1], strides = [1, 1, 1]} : vector<2x16x1xf32> to vector<1x16x1xf32>
    %80 = vector.shape_cast %79 : vector<1x16x1xf32> to vector<16x1xf32>
    %81 = vector.broadcast %80 : vector<16x1xf32> to vector<16x512xf32>
    %82 = arith.addf %78, %81 : vector<16x512xf32>
    %cst_49 = arith.constant 0.000000e+00 : f32
    %83 = vector.broadcast %cst_49 : f32 to vector<16x512xf32>
    %84 = arith.maximumf %82, %83 : vector<16x512xf32>
    %c1_50 = arith.constant 1 : index
    %c0_51 = arith.constant 0 : index
    %c0_52 = arith.constant 0 : index
    %85 = vector.load %arg11[%c1_50, %c0_51, %c0_52] : memref<3x16x16xbf16, #tpu.memory_space<vmem>>, vector<1x16x16xbf16>
    %86 = vector.shape_cast %85 : vector<1x16x16xbf16> to vector<16x16xbf16>
    %87 = arith.truncf %84 : vector<16x512xf32> to vector<16x512xbf16>
    %cst_53 = arith.constant dense<0.000000e+00> : vector<16x512xf32>
    %88 = tpu.matmul %86, %87, %cst_53 {dimension_numbers = #tpu.dot_dimension_numbers<[1], [0], [0], [1], [0, 0, 1, 1], [], []>} : vector<16x16xbf16>, vector<16x512xbf16>, vector<16x512xf32> -> vector<16x512xf32>
    %89 = arith.addf %65, %88 : vector<16x512xf32>
    %c2 = arith.constant 2 : index
    %c0_54 = arith.constant 0 : index
    %c0_55 = arith.constant 0 : index
    %90 = vector.load %arg6[%c2, %c0_54, %c0_55] : memref<3x16x32xbf16, #tpu.memory_space<vmem>>, vector<1x16x32xbf16>
    %91 = vector.shape_cast %90 : vector<1x16x32xbf16> to vector<16x32xbf16>
    %cst_56 = arith.constant dense<0.000000e+00> : vector<16x256xf32>
    %92 = tpu.matmul %91, %41, %cst_56 {dimension_numbers = #tpu.dot_dimension_numbers<[1], [0], [0], [1], [0, 0, 1, 1], [], []>} : vector<16x32xbf16>, vector<32x256xbf16>, vector<16x256xf32> -> vector<16x256xf32>
    %93 = arith.truncf %92 : vector<16x256xf32> to vector<16x256xbf16>
    %c2_57 = arith.constant 2 : index
    %c0_58 = arith.constant 0 : index
    %c0_59 = arith.constant 0 : index
    %94 = vector.load %arg7[%c2_57, %c0_58, %c0_59] : memref<3x256x512xbf16, #tpu.memory_space<vmem>>, vector<1x256x512xbf16>
    %95 = vector.shape_cast %94 : vector<1x256x512xbf16> to vector<256x512xbf16>
    %cst_60 = arith.constant dense<0.000000e+00> : vector<16x512xf32>
    %96 = tpu.matmul %93, %95, %cst_60 {dimension_numbers = #tpu.dot_dimension_numbers<[1], [0], [0], [1], [0, 0, 1, 1], [], []>} : vector<16x256xbf16>, vector<256x512xbf16>, vector<16x512xf32> -> vector<16x512xf32>
    %c2_61 = arith.constant 2 : index
    %c0_62 = arith.constant 0 : index
    %c0_63 = arith.constant 0 : index
    %c0_64 = arith.constant 0 : index
    %97 = vector.load %arg9[%c2_61, %c0_62, %c0_63, %c0_64] : memref<3x2x16x1xf32, #tpu.memory_space<vmem>>, vector<1x2x16x1xf32>
    %98 = vector.shape_cast %97 : vector<1x2x16x1xf32> to vector<2x16x1xf32>
    %99 = vector.extract_strided_slice %98 {offsets = [0, 0, 0], sizes = [1, 16, 1], strides = [1, 1, 1]} : vector<2x16x1xf32> to vector<1x16x1xf32>
    %100 = vector.shape_cast %99 : vector<1x16x1xf32> to vector<16x1xf32>
    %101 = vector.broadcast %100 : vector<16x1xf32> to vector<16x512xf32>
    %102 = arith.mulf %96, %101 : vector<16x512xf32>
    %103 = vector.extract_strided_slice %98 {offsets = [1, 0, 0], sizes = [1, 16, 1], strides = [1, 1, 1]} : vector<2x16x1xf32> to vector<1x16x1xf32>
    %104 = vector.shape_cast %103 : vector<1x16x1xf32> to vector<16x1xf32>
    %105 = vector.broadcast %104 : vector<16x1xf32> to vector<16x512xf32>
    %106 = arith.addf %102, %105 : vector<16x512xf32>
    %cst_65 = arith.constant 0.000000e+00 : f32
    %107 = vector.broadcast %cst_65 : f32 to vector<16x512xf32>
    %108 = arith.maximumf %106, %107 : vector<16x512xf32>
    %c2_66 = arith.constant 2 : index
    %c0_67 = arith.constant 0 : index
    %c0_68 = arith.constant 0 : index
    %109 = vector.load %arg11[%c2_66, %c0_67, %c0_68] : memref<3x16x16xbf16, #tpu.memory_space<vmem>>, vector<1x16x16xbf16>
    %110 = vector.shape_cast %109 : vector<1x16x16xbf16> to vector<16x16xbf16>
    %111 = arith.truncf %108 : vector<16x512xf32> to vector<16x512xbf16>
    %cst_69 = arith.constant dense<0.000000e+00> : vector<16x512xf32>
    %112 = tpu.matmul %110, %111, %cst_69 {dimension_numbers = #tpu.dot_dimension_numbers<[1], [0], [0], [1], [0, 0, 1, 1], [], []>} : vector<16x16xbf16>, vector<16x512xbf16>, vector<16x512xf32> -> vector<16x512xf32>
    %113 = arith.addf %89, %112 : vector<16x512xf32>
    %c0_70 = arith.constant 0 : index
    %c0_71 = arith.constant 0 : index
    %114 = vector.load %arg12[%c0_70, %c0_71] : memref<16x512xf32, #tpu.memory_space<vmem>>, vector<16x512xf32>
    tpu.vector_store %arg12[%c0_70, %c0_71], %113 {strides = array<i32>} : memref<16x512xf32, #tpu.memory_space<vmem>>, vector<16x512xf32>,
    return
  }
  func.func @transform_0(%arg0: i32) -> (i32, i32) {
    %c0_i32 = arith.constant 0 : i32
    %c0_i32_0 = arith.constant 0 : i32
    return %c0_i32, %arg0 : i32, i32
  }
  func.func @transform_1(%arg0: i32) -> (i32, i32, i32) {
    %c0_i32 = arith.constant 0 : i32
    %c0_i32_0 = arith.constant 0 : i32
    %c0_i32_1 = arith.constant 0 : i32
    %c0_i32_2 = arith.constant 0 : i32
    return %c0_i32, %c0_i32_0, %c0_i32_1 : i32, i32, i32
  }
  func.func @transform_2(%arg0: i32) -> (i32, i32) {
    %c0_i32 = arith.constant 0 : i32
    %c0_i32_0 = arith.constant 0 : i32
    %c0_i32_1 = arith.constant 0 : i32
    return %c0_i32, %c0_i32_0 : i32, i32
  }
  func.func @transform_3(%arg0: i32) -> (i32, i32) {
    %c0_i32 = arith.constant 0 : i32
    %c0_i32_0 = arith.constant 0 : i32
    %c0_i32_1 = arith.constant 0 : i32
    return %c0_i32, %c0_i32_0 : i32, i32
  }
  func.func @transform_4(%arg0: i32) -> (i32, i32, i32) {
    %c0_i32 = arith.constant 0 : i32
    %c0_i32_0 = arith.constant 0 : i32
    %c0_i32_1 = arith.constant 0 : i32
    %c0_i32_2 = arith.constant 0 : i32
    return %c0_i32, %c0_i32_0, %c0_i32_1 : i32, i32, i32
  }
  func.func @transform_5(%arg0: i32) -> (i32, i32, i32) {
    %c0_i32 = arith.constant 0 : i32
    %c0_i32_0 = arith.constant 0 : i32
    %c0_i32_1 = arith.constant 0 : i32
    %c0_i32_2 = arith.constant 0 : i32
    return %c0_i32, %c0_i32_0, %c0_i32_1 : i32, i32, i32
  }
  func.func @transform_6(%arg0: i32) -> (i32, i32, i32) {
    %c0_i32 = arith.constant 0 : i32
    %c0_i32_0 = arith.constant 0 : i32
    %c0_i32_1 = arith.constant 0 : i32
    %c0_i32_2 = arith.constant 0 : i32
    return %c0_i32, %c0_i32_0, %c0_i32_1 : i32, i32, i32
  }
  func.func @transform_7(%arg0: i32) -> (i32, i32, i32) {
    %c0_i32 = arith.constant 0 : i32
    %c0_i32_0 = arith.constant 0 : i32
    %c0_i32_1 = arith.constant 0 : i32
    %c0_i32_2 = arith.constant 0 : i32
    return %c0_i32, %c0_i32_0, %c0_i32_1 : i32, i32, i32
  }
  func.func @transform_8(%arg0: i32) -> (i32, i32, i32, i32) {
    %c0_i32 = arith.constant 0 : i32
    %c0_i32_0 = arith.constant 0 : i32
    %c0_i32_1 = arith.constant 0 : i32
    %c0_i32_2 = arith.constant 0 : i32
    %c0_i32_3 = arith.constant 0 : i32
    return %c0_i32, %c0_i32_0, %c0_i32_1, %c0_i32_2 : i32, i32, i32, i32
  }
  func.func @transform_9(%arg0: i32) -> (i32, i32) {
    %c0_i32 = arith.constant 0 : i32
    %c0_i32_0 = arith.constant 0 : i32
    %c0_i32_1 = arith.constant 0 : i32
    return %c0_i32, %c0_i32_0 : i32, i32
  }
  func.func @transform_10(%arg0: i32) -> (i32, i32, i32) {
    %c0_i32 = arith.constant 0 : i32
    %c0_i32_0 = arith.constant 0 : i32
    %c0_i32_1 = arith.constant 0 : i32
    %c0_i32_2 = arith.constant 0 : i32
    return %c0_i32, %c0_i32_0, %c0_i32_1 : i32, i32, i32
  }
  func.func @transform_11(%arg0: i32) -> (i32, i32) {
    %c0_i32 = arith.constant 0 : i32
    %c0_i32_0 = arith.constant 0 : i32
    return %c0_i32, %arg0 : i32, i32
  }
}

</mosaic_0001>

<llo_original>
// kernel: tpu_custom_call.1
$region0: #{tpu_custom_call.1}
  #allocation0 [shape = 'u32[]', space=smem, size = 0x4, offset = 0x4, fixed_abs, tag = 'smem constant byte address 0x4 - core index']
  #allocation1 [shape = 'u32[144,128]{1,0:T(1,128)}', space=vmem, size = 0x12000, scoped, tag = 'internal scratch']
  %s0 = inlined_call_operand.vmem [shape: f32[8,1024], index: 0, kind: input, shape index: {}]
  %s1 = inlined_call_operand.vmem [shape: f32[2,8,1], index: 1, kind: input, shape index: {}]
  %s2 = inlined_call_operand.vmem [shape: bf16[32,8], index: 2, kind: input, shape index: {}]
  %s3 = inlined_call_operand.hbm [shape: bf16[512,256], index: 3, kind: input, shape index: {}]
  %s4 = inlined_call_operand.vmem [shape: f32[2,32,256], index: 4, kind: input, shape index: {}]
  %s5 = inlined_call_operand.vmem [shape: bf16[3,16,32], index: 5, kind: input, shape index: {}]
  %s6 = inlined_call_operand.hbm [shape: bf16[3,256,512], index: 6, kind: input, shape index: {}]
  %s7 = inlined_call_operand.vmem [shape: f32[2,32,1], index: 7, kind: input, shape index: {}]
  %s8 = inlined_call_operand.vmem [shape: f32[3,2,16,1], index: 8, kind: input, shape index: {}]
  %s9 = inlined_call_operand.hbm [shape: bf16[16,32], index: 9, kind: input, shape index: {}]
  %s10 = inlined_call_operand.vmem [shape: bf16[3,16,16], index: 10, kind: input, shape index: {}]
  %s11 = inlined_call_operand.hbm [shape: f32[16,1024], index: 11, kind: output, shape index: {}]
  %s12 = sld [smem:[#allocation0]]
  $region89: #{tpu_custom_call.1} parent=0
    _
  %s14 = ssub.s32 1, %s12
  %s15 = scalar_select 0, %s14, %s12
  $region1: #{tpu_custom_call.1} parent=0
    #allocation2 [shape = 'u8[262144]{0}', space=vmem, size = 0x40000, scoped, tag = 'input window, operand 3, single buffered']
    #allocation3 [shape = 's32[2]{0}', space=sflag, size = 0x8, scoped, tag = 'scoped memory for tpu_custom_call.1']
    #allocation4 [shape = 's32[2]{0}', space=sflag, size = 0x8, scoped, tag = 'scoped memory for tpu_custom_call.1']
    #allocation5 [shape = 'u8[786432]{0}', space=vmem, size = 0xc0000, scoped, tag = 'input window, operand 6, single buffered']
    #allocation6 [shape = 's32[1]{0}', space=sflag, size = 0x4, scoped, tag = 'scoped memory for tpu_custom_call.1']
    #allocation7 [shape = 'u8[4096]{0}', space=vmem, size = 0x1000, scoped, tag = 'input window, operand 9, single buffered']
    #allocation8 [shape = 'u8[65536]{0}', space=vmem, size = 0x10000, scoped, tag = 'output window, operand 0']
    %16 = vsyncpa [#allocation3], 0
    %17 = vsyncpa [#allocation6], 0
    %18 = vsyncpa [#allocation4], 0
    %s19 = scalar_lea.sflag [#allocation4], 1
    %20 = vsyncpa %s19, 0
    loop: start=0, step=1, limit=4
    $region2: #{tpu_custom_call.1} parent=1 // loop_pre_header
      _
    $region3: #{tpu_custom_call.1} parent=1 // loop_header
      %s22 = sphi 0, %s26
      %p23 = scmp.ge.s32.totalorder %s22, 4
      %s32 = sphi 0, %s34
      %s35 = sphi 0, %s32
      %s36 = sphi 0, %s35
      %s52 = sphi 0, %s36
      %s56 = sphi 0, %s56
      %s58 = sphi 0, %s56
      %s59 = sphi 0, %s58
      %s73 = sphi 0, %s59
      %s77 = sphi 0, %s77
      %s79 = sphi 0, %s77
      %s80 = sphi 0, %s79
      %s94 = sphi 0, %s80
      %s98 = sphi 0, %s98
      %s100 = sphi 0, %s98
      %s101 = sphi 0, %s100
      %s115 = sphi 0, %s101
      %s119 = sphi 0, %s119
      %s121 = sphi 0, %s119
      %s122 = sphi 0, %s121
      %s136 = sphi 0, %s122
      %s140 = sphi 0, %s140
      %s142 = sphi 0, %s140
      %s143 = sphi 0, %s142
      %s157 = sphi 0, %s143
      %s161 = sphi 0, %s161
      %s163 = sphi 0, %s161
      %s164 = sphi 0, %s163
      %s178 = sphi 0, %s164
      %s182 = sphi 0, %s182
      %s184 = sphi 0, %s182
      %s185 = sphi 0, %s184
      %s199 = sphi 0, %s185
      %s203 = sphi 0, %s203
      %s205 = sphi 0, %s203
      %s206 = sphi 0, %s205
      %s220 = sphi 0, %s206
      %s224 = sphi 0, %s224
      %s226 = sphi 0, %s224
      %s227 = sphi 0, %s226
      %s241 = sphi 0, %s227
      %s245 = sphi 0, %s245
      %s247 = sphi 0, %s245
      %s248 = sphi 0, %s247
      %s262 = sphi 0, %s248
      %s268 = sphi 0, %s270
      %s271 = sphi 0, %s268
      %s272 = sphi 0, %s271
      %s288 = sphi 0, %s272
    $region4: #{tpu_custom_call.1} parent=1 // loop_header_branch
      %25 = sbr.rel (%p23) target = $region8
    $region5: #{tpu_custom_call.1} parent=1 // loop_body
      %s27 = ssub.s32 %s22, 1
      %s28 = ssub.s32 %s22, 2
      %s29 = sadd.s32 %s22, 1
      %s30 = ssub.s32 %s22, %s29
      %p31 = scmp.eq.s32.totalorder %s30, 0
      %s33 = sadd.s32 %s32, 1
      %s34 = scalar_select %p31, %s32, %s33
      %p37 = pneg %p31
      %p38 = scmp.eq.s32.totalorder %s22, 1
      %p39 = por %p37, %p38
      %p40 = scmp.ne.s32.totalorder %s32, %s35
      %p41 = scmp.eq.s32.totalorder %s22, 0
      %p42 = por %p40, %p41
      %p43 = scmp.ne.s32.totalorder %s32, %s35
      %p44 = scmp.eq.s32.totalorder %s27, 1
      %p45 = por %p43, %p44
      %p46 = scmp.ne.s32.totalorder %s35, %s36
      %p47 = scmp.eq.s32.totalorder %s27, 0
      %p48 = por %p46, %p47
      %p49 = scmp.ne.s32.totalorder %s35, %s36
      %p50 = scmp.eq.s32.totalorder %s28, 1
      %p51 = por %p49, %p50
      %p53 = scmp.ne.s32.totalorder %s36, %s52
      %p54 = scmp.eq.s32.totalorder %s28, 0
      %p55 = por %p53, %p54
      %s57 = sadd.s32 %s56, 1
      %p60 = scmp.eq.s32.totalorder %s22, 1
      %p61 = scmp.ne.s32.totalorder %s56, %s58
      %p62 = scmp.eq.s32.totalorder %s22, 0
      %p63 = por %p61, %p62
      %p64 = scmp.ne.s32.totalorder %s56, %s58
      %p65 = scmp.eq.s32.totalorder %s27, 1
      %p66 = por %p64, %p65
      %p67 = scmp.ne.s32.totalorder %s58, %s59
      %p68 = scmp.eq.s32.totalorder %s27, 0
      %p69 = por %p67, %p68
      %p70 = scmp.ne.s32.totalorder %s58, %s59
      %p71 = scmp.eq.s32.totalorder %s28, 1
      %p72 = por %p70, %p71
      %p74 = scmp.ne.s32.totalorder %s59, %s73
      %p75 = scmp.eq.s32.totalorder %s28, 0
      %p76 = por %p74, %p75
      %s78 = sadd.s32 %s77, 1
      %p81 = scmp.eq.s32.totalorder %s22, 1
      %p82 = scmp.ne.s32.totalorder %s77, %s79
      %p83 = scmp.eq.s32.totalorder %s22, 0
      %p84 = por %p82, %p83
      %p85 = scmp.ne.s32.totalorder %s77, %s79
      %p86 = scmp.eq.s32.totalorder %s27, 1
      %p87 = por %p85, %p86
      %p88 = scmp.ne.s32.totalorder %s79, %s80
      %p89 = scmp.eq.s32.totalorder %s27, 0
      %p90 = por %p88, %p89
      %p91 = scmp.ne.s32.totalorder %s79, %s80
      %p92 = scmp.eq.s32.totalorder %s28, 1
      %p93 = por %p91, %p92
      %p95 = scmp.ne.s32.totalorder %s80, %s94
      %p96 = scmp.eq.s32.totalorder %s28, 0
      %p97 = por %p95, %p96
      %s99 = sadd.s32 %s98, 1
      %p102 = scmp.eq.s32.totalorder %s22, 1
      %p103 = scmp.ne.s32.totalorder %s98, %s100
      %p104 = scmp.eq.s32.totalorder %s22, 0
      %p105 = por %p103, %p104
      %p106 = scmp.ne.s32.totalorder %s98, %s100
      %p107 = scmp.eq.s32.totalorder %s27, 1
      %p108 = por %p106, %p107
      %p109 = scmp.ne.s32.totalorder %s100, %s101
      %p110 = scmp.eq.s32.totalorder %s27, 0
      %p111 = por %p109, %p110
      %p112 = scmp.ne.s32.totalorder %s100, %s101
      %p113 = scmp.eq.s32.totalorder %s28, 1
      %p114 = por %p112, %p113
      %p116 = scmp.ne.s32.totalorder %s101, %s115
      %p117 = scmp.eq.s32.totalorder %s28, 0
      %p118 = por %p116, %p117
      %s120 = sadd.s32 %s119, 1
      %p123 = scmp.eq.s32.totalorder %s22, 1
      %p124 = scmp.ne.s32.totalorder %s119, %s121
      %p125 = scmp.eq.s32.totalorder %s22, 0
      %p126 = por %p124, %p125
      %p127 = scmp.ne.s32.totalorder %s119, %s121
      %p128 = scmp.eq.s32.totalorder %s27, 1
      %p129 = por %p127, %p128
      %p130 = scmp.ne.s32.totalorder %s121, %s122
      %p131 = scmp.eq.s32.totalorder %s27, 0
      %p132 = por %p130, %p131
      %p133 = scmp.ne.s32.totalorder %s121, %s122
      %p134 = scmp.eq.s32.totalorder %s28, 1
      %p135 = por %p133, %p134
      %p137 = scmp.ne.s32.totalorder %s122, %s136
      %p138 = scmp.eq.s32.totalorder %s28, 0
      %p139 = por %p137, %p138
      %s141 = sadd.s32 %s140, 1
      %p144 = scmp.eq.s32.totalorder %s22, 1
      %p145 = scmp.ne.s32.totalorder %s140, %s142
      %p146 = scmp.eq.s32.totalorder %s22, 0
      %p147 = por %p145, %p146
      %p148 = scmp.ne.s32.totalorder %s140, %s142
      %p149 = scmp.eq.s32.totalorder %s27, 1
      %p150 = por %p148, %p149
      %p151 = scmp.ne.s32.totalorder %s142, %s143
      %p152 = scmp.eq.s32.totalorder %s27, 0
      %p153 = por %p151, %p152
      %p154 = scmp.ne.s32.totalorder %s142, %s143
      %p155 = scmp.eq.s32.totalorder %s28, 1
      %p156 = por %p154, %p155
      %p158 = scmp.ne.s32.totalorder %s143, %s157
      %p159 = scmp.eq.s32.totalorder %s28, 0
      %p160 = por %p158, %p159
      %s162 = sadd.s32 %s161, 1
      %p165 = scmp.eq.s32.totalorder %s22, 1
      %p166 = scmp.ne.s32.totalorder %s161, %s163
      %p167 = scmp.eq.s32.totalorder %s22, 0
      %p168 = por %p166, %p167
      %p169 = scmp.ne.s32.totalorder %s161, %s163
      %p170 = scmp.eq.s32.totalorder %s27, 1
      %p171 = por %p169, %p170
      %p172 = scmp.ne.s32.totalorder %s163, %s164
      %p173 = scmp.eq.s32.totalorder %s27, 0
      %p174 = por %p172, %p173
      %p175 = scmp.ne.s32.totalorder %s163, %s164
      %p176 = scmp.eq.s32.totalorder %s28, 1
      %p177 = por %p175, %p176
      %p179 = scmp.ne.s32.totalorder %s164, %s178
      %p180 = scmp.eq.s32.totalorder %s28, 0
      %p181 = por %p179, %p180
      %s183 = sadd.s32 %s182, 1
      %p186 = scmp.eq.s32.totalorder %s22, 1
      %p187 = scmp.ne.s32.totalorder %s182, %s184
      %p188 = scmp.eq.s32.totalorder %s22, 0
      %p189 = por %p187, %p188
      %p190 = scmp.ne.s32.totalorder %s182, %s184
      %p191 = scmp.eq.s32.totalorder %s27, 1
      %p192 = por %p190, %p191
      %p193 = scmp.ne.s32.totalorder %s184, %s185
      %p194 = scmp.eq.s32.totalorder %s27, 0
      %p195 = por %p193, %p194
      %p196 = scmp.ne.s32.totalorder %s184, %s185
      %p197 = scmp.eq.s32.totalorder %s28, 1
      %p198 = por %p196, %p197
      %p200 = scmp.ne.s32.totalorder %s185, %s199
      %p201 = scmp.eq.s32.totalorder %s28, 0
      %p202 = por %p200, %p201
      %s204 = sadd.s32 %s203, 1
      %p207 = scmp.eq.s32.totalorder %s22, 1
      %p208 = scmp.ne.s32.totalorder %s203, %s205
      %p209 = scmp.eq.s32.totalorder %s22, 0
      %p210 = por %p208, %p209
      %p211 = scmp.ne.s32.totalorder %s203, %s205
      %p212 = scmp.eq.s32.totalorder %s27, 1
      %p213 = por %p211, %p212
      %p214 = scmp.ne.s32.totalorder %s205, %s206
      %p215 = scmp.eq.s32.totalorder %s27, 0
      %p216 = por %p214, %p215
      %p217 = scmp.ne.s32.totalorder %s205, %s206
      %p218 = scmp.eq.s32.totalorder %s28, 1
      %p219 = por %p217, %p218
      %p221 = scmp.ne.s32.totalorder %s206, %s220
      %p222 = scmp.eq.s32.totalorder %s28, 0
      %p223 = por %p221, %p222
      %s225 = sadd.s32 %s224, 1
      %p228 = scmp.eq.s32.totalorder %s22, 1
      %p229 = scmp.ne.s32.totalorder %s224, %s226
      %p230 = scmp.eq.s32.totalorder %s22, 0
      %p231 = por %p229, %p230
      %p232 = scmp.ne.s32.totalorder %s224, %s226
      %p233 = scmp.eq.s32.totalorder %s27, 1
      %p234 = por %p232, %p233
      %p235 = scmp.ne.s32.totalorder %s226, %s227
      %p236 = scmp.eq.s32.totalorder %s27, 0
      %p237 = por %p235, %p236
      %p238 = scmp.ne.s32.totalorder %s226, %s227
      %p239 = scmp.eq.s32.totalorder %s28, 1
      %p240 = por %p238, %p239
      %p242 = scmp.ne.s32.totalorder %s227, %s241
      %p243 = scmp.eq.s32.totalorder %s28, 0
      %p244 = por %p242, %p243
      %s246 = sadd.s32 %s245, 1
      %p249 = scmp.eq.s32.totalorder %s22, 1
      %p250 = scmp.ne.s32.totalorder %s245, %s247
      %p251 = scmp.eq.s32.totalorder %s22, 0
      %p252 = por %p250, %p251
      %p253 = scmp.ne.s32.totalorder %s245, %s247
      %p254 = scmp.eq.s32.totalorder %s27, 1
      %p255 = por %p253, %p254
      %p256 = scmp.ne.s32.totalorder %s247, %s248
      %p257 = scmp.eq.s32.totalorder %s27, 0
      %p258 = por %p256, %p257
      %p259 = scmp.ne.s32.totalorder %s247, %s248
      %p260 = scmp.eq.s32.totalorder %s28, 1
      %p261 = por %p259, %p260
      %p263 = scmp.ne.s32.totalorder %s248, %s262
      %p264 = scmp.eq.s32.totalorder %s28, 0
      %p265 = por %p263, %p264
      %s266 = ssub.s32 %s22, %s29
      %p267 = scmp.eq.s32.totalorder %s266, 0
      %s269 = sadd.s32 %s268, 1
      %s270 = scalar_select %p267, %s268, %s269
      %p273 = pneg %p267
      %p274 = scmp.eq.s32.totalorder %s22, 1
      %p275 = por %p273, %p274
      %p276 = scmp.ne.s32.totalorder %s268, %s271
      %p277 = scmp.eq.s32.totalorder %s22, 0
      %p278 = por %p276, %p277
      %p279 = scmp.ne.s32.totalorder %s268, %s271
      %p280 = scmp.eq.s32.totalorder %s27, 1
      %p281 = por %p279, %p280
      %p282 = scmp.ne.s32.totalorder %s271, %s272
      %p283 = scmp.eq.s32.totalorder %s27, 0
      %p284 = por %p282, %p283
      %p285 = scmp.ne.s32.totalorder %s271, %s272
      %p286 = scmp.eq.s32.totalorder %s28, 1
      %p287 = por %p285, %p286
      %p289 = scmp.ne.s32.totalorder %s272, %s288
      %p290 = scmp.eq.s32.totalorder %s28, 0
      %p291 = por %p289, %p290
      %p292 = scmp.le.s32.totalorder 1, %s22
      %p293 = scmp.lt.s32.totalorder %s22, 3
      %p294 = pnand %p292, %p293
      %p295 = pneg %p294
      // Predicated region
      $region9: #{tpu_custom_call.1} parent=5 // pred_check
        _
      $region10: #{tpu_custom_call.1} parent=5 // pred_check_branch
        %297 = sbr.rel (%p294) target = $region12
      $region11: #{tpu_custom_call.1} parent=5 // pred_region
        %s298 = ssub.s32 %s22, 1
        // Predicated region
        $region13: #{tpu_custom_call.1} parent=11 // pred_check
          %p299 = pneg %p69
        $region14: #{tpu_custom_call.1} parent=11 // pred_check_branch
          %301 = sbr.rel (%p299) target = $region16
        $region15: #{tpu_custom_call.1} parent=11 // pred_region
          _
        $region16: #{tpu_custom_call.1} parent=11 // pred_fallthru
          _
        // Predicated region
        $region17: #{tpu_custom_call.1} parent=11 // pred_check
          %p302 = pneg %p90
        $region18: #{tpu_custom_call.1} parent=11 // pred_check_branch
          %304 = sbr.rel (%p302) target = $region20
        $region19: #{tpu_custom_call.1} parent=11 // pred_region
          _
        $region20: #{tpu_custom_call.1} parent=11 // pred_fallthru
          _
        // Predicated region
        $region21: #{tpu_custom_call.1} parent=11 // pred_check
          %p305 = pneg %p111
        $region22: #{tpu_custom_call.1} parent=11 // pred_check_branch
          %307 = sbr.rel (%p305) target = $region24
        $region23: #{tpu_custom_call.1} parent=11 // pred_region
          %s309 = ssub.s32 8192, 8192
          %310 = vsyncadd [#allocation3], %s309
          %s311 = sshll.u32 [#allocation2], 4
          %s312 = int_to_ptr.vmem [resolvable:$true] %s311
          %317 = dma.hbm_to_vmem [thread:$0]  %s3, 8192, %s312, [#allocation3], 128, 128, 8
        $region24: #{tpu_custom_call.1} parent=11 // pred_fallthru
          _
        // Predicated region
        $region25: #{tpu_custom_call.1} parent=11 // pred_check
          %p318 = pneg %p132
        $region26: #{tpu_custom_call.1} parent=11 // pred_check_branch
          %320 = sbr.rel (%p318) target = $region28
        $region27: #{tpu_custom_call.1} parent=11 // pred_region
          _
        $region28: #{tpu_custom_call.1} parent=11 // pred_fallthru
          _
        // Predicated region
        $region29: #{tpu_custom_call.1} parent=11 // pred_check
          %p321 = pneg %p153
        $region30: #{tpu_custom_call.1} parent=11 // pred_check_branch
          %323 = sbr.rel (%p321) target = $region32
        $region31: #{tpu_custom_call.1} parent=11 // pred_region
          _
        $region32: #{tpu_custom_call.1} parent=11 // pred_fallthru
          _
        // Predicated region
        $region33: #{tpu_custom_call.1} parent=11 // pred_check
          %p324 = pneg %p174
        $region34: #{tpu_custom_call.1} parent=11 // pred_check_branch
          %326 = sbr.rel (%p324) target = $region36
        $region35: #{tpu_custom_call.1} parent=11 // pred_region
          %s328 = ssub.s32 24576, 24576
          %329 = vsyncadd [#allocation6], %s328
          %s330 = sshll.u32 [#allocation5], 4
          %s331 = int_to_ptr.vmem [resolvable:$true] %s330
          %336 = dma.hbm_to_vmem [thread:$0]  %s6, 24576, %s331, [#allocation6], 256, 256, 16
        $region36: #{tpu_custom_call.1} parent=11 // pred_fallthru
          _
        // Predicated region
        $region37: #{tpu_custom_call.1} parent=11 // pred_check
          %p337 = pneg %p195
        $region38: #{tpu_custom_call.1} parent=11 // pred_check_branch
          %339 = sbr.rel (%p337) target = $region40
        $region39: #{tpu_custom_call.1} parent=11 // pred_region
          _
        $region40: #{tpu_custom_call.1} parent=11 // pred_fallthru
          _
        // Predicated region
        $region41: #{tpu_custom_call.1} parent=11 // pred_check
          %p340 = pneg %p216
        $region42: #{tpu_custom_call.1} parent=11 // pred_check_branch
          %342 = sbr.rel (%p340) target = $region44
        $region43: #{tpu_custom_call.1} parent=11 // pred_region
          _
        $region44: #{tpu_custom_call.1} parent=11 // pred_fallthru
          _
        // Predicated region
        $region45: #{tpu_custom_call.1} parent=11 // pred_check
          %p343 = pneg %p237
        $region46: #{tpu_custom_call.1} parent=11 // pred_check_branch
          %345 = sbr.rel (%p343) target = $region48
        $region47: #{tpu_custom_call.1} parent=11 // pred_region
          %s347 = ssub.s32 128, 128
          %348 = vsyncadd [#allocation6], %s347
          %s349 = sshll.u32 [#allocation7], 4
          %s350 = int_to_ptr.vmem [resolvable:$true] %s349
          %355 = dma.hbm_to_vmem [thread:$0]  %s9, 128, %s350, [#allocation6], 64, 64, 4
        $region48: #{tpu_custom_call.1} parent=11 // pred_fallthru
          _
        // Predicated region
        $region49: #{tpu_custom_call.1} parent=11 // pred_check
          %p356 = pneg %p258
        $region50: #{tpu_custom_call.1} parent=11 // pred_check_branch
          %358 = sbr.rel (%p356) target = $region52
        $region51: #{tpu_custom_call.1} parent=11 // pred_region
          _
        $region52: #{tpu_custom_call.1} parent=11 // pred_fallthru
          _
      $region12: #{tpu_custom_call.1} parent=5 // pred_fallthru
        _
      %p359 = scmp.lt.s32.totalorder %s22, 2
      // Predicated region
      $region53: #{tpu_custom_call.1} parent=5 // pred_check
        %p360 = pneg %p359
      $region54: #{tpu_custom_call.1} parent=5 // pred_check_branch
        %362 = sbr.rel (%p360) target = $region56
      $region55: #{tpu_custom_call.1} parent=5 // pred_region
        // Predicated region
        $region57: #{tpu_custom_call.1} parent=55 // pred_check
          %p363 = pneg %p42
        $region58: #{tpu_custom_call.1} parent=55 // pred_check_branch
          %365 = sbr.rel (%p363) target = $region60
        $region59: #{tpu_custom_call.1} parent=55 // pred_region
          %s366 = smul.u32 4, %s22
          %p367 = scmp.lt.s32.totalorder %s366, 7
          %s368 = scalar_select %p367, %s366, 7
          %s369 = smul.addr %s368, 8
          %s370 = scalar_lea.vmem %s0, %s369
          %s371 = smul.u32 4, %s22
        $region60: #{tpu_custom_call.1} parent=55 // pred_fallthru
          _
      $region56: #{tpu_custom_call.1} parent=5 // pred_fallthru
        _
      %p372 = scmp.le.s32.totalorder 1, %s22
      %p373 = scmp.lt.s32.totalorder %s22, 3
      %p374 = pnand %p372, %p373
      %p375 = pneg %p374
      // Predicated region
      $region61: #{tpu_custom_call.1} parent=5 // pred_check
        _
      $region62: #{tpu_custom_call.1} parent=5 // pred_check_branch
        %377 = sbr.rel (%p374) target = $region64
      $region63: #{tpu_custom_call.1} parent=5 // pred_region
        %s378 = ssub.s32 %s22, 1
        // Predicated region
        $region65: #{tpu_custom_call.1} parent=63 // pred_check
          %p379 = pneg %p111
        $region66: #{tpu_custom_call.1} parent=63 // pred_check_branch
          %381 = sbr.rel (%p379) target = $region68
        $region67: #{tpu_custom_call.1} parent=63 // pred_region
          %382 = dma.done [#allocation3], 8192
        $region68: #{tpu_custom_call.1} parent=63 // pred_fallthru
          _
        // Predicated region
        $region69: #{tpu_custom_call.1} parent=63 // pred_check
          %p383 = pneg %p174
        $region70: #{tpu_custom_call.1} parent=63 // pred_check_branch
          %385 = sbr.rel (%p383) target = $region72
        $region71: #{tpu_custom_call.1} parent=63 // pred_region
          %386 = dma.done [#allocation6], 24576
        $region72: #{tpu_custom_call.1} parent=63 // pred_fallthru
          _
        // Predicated region
        $region73: #{tpu_custom_call.1} parent=63 // pred_check
          %p387 = pneg %p237
        $region74: #{tpu_custom_call.1} parent=63 // pred_check_branch
          %389 = sbr.rel (%p387) target = $region76
        $region75: #{tpu_custom_call.1} parent=63 // pred_region
          %390 = dma.done [#allocation6], 128
        $region76: #{tpu_custom_call.1} parent=63 // pred_fallthru
          _
        %s391 = smul.u32 4, %s27
        %p392 = scmp.lt.s32.totalorder %s391, 7
        %s393 = scalar_select %p392, %s391, 7
        %s394 = smul.addr %s393, 8
        %s395 = scalar_lea.vmem %s0, %s394
        %p396 = pneg %p48
        %p397 = pneg %p45
        %p398 = pneg %p69
        %p399 = pneg %p66
        %p400 = pneg %p90
        %p401 = pneg %p87
        %p402 = pneg %p111
        %p403 = pneg %p108
        %p404 = pneg %p132
        %p405 = pneg %p129
        %p406 = pneg %p153
        %p407 = pneg %p150
        %p408 = pneg %p174
        %p409 = pneg %p171
        %p410 = pneg %p195
        %p411 = pneg %p192
        %p412 = pneg %p216
        %p413 = pneg %p213
        %p414 = pneg %p237
        %p415 = pneg %p234
        %p416 = pneg %p258
        %p417 = pneg %p255
        %p418 = pneg %p284
        %p419 = pneg %p281
        %s420 = sand.u32 %s271, 1
        %s421 = scalar_lea.sflag [#allocation4], %s420
        %s422 = sand.u32 %s271, 1
        %s423 = smul.addr %s422, 64
        %s424 = scalar_lea.vmem [#allocation8], %s423
        %s425 = smul.u32 4, %s27
        %p426 = scmp.lt.s32.totalorder %s425, 7
        %s427 = scalar_select %p426, %s425, 7
        %s428 = smul.addr %s427, 8
        %s429 = scalar_lea.vmem %s0, %s428
        %s430 = smul.u32 4, %s27
        %s431 = smul.u32 4, %s27
        %v433 = vld [vmem:[%s1] sm:$0xff]
        %v434 = vld [vmem:[%s1 + $0x8] sm:$0xff]
        %v435 = vld [vmem:[%s429] sm:$0xff]
        %v436 = vld [vmem:[%s429 + $0x8] sm:$0xff]
        %v437 = vld [vmem:[%s429 + $0x10] sm:$0xff]
        %v438 = vld [vmem:[%s429 + $0x18] sm:$0xff]
        %440 = vset.pattern.permute.xlu0 0
        %441 = vperm.xlu0 %440, %v433
        %v442 = vpop.permute.xlu0 %441
        %v444 = vmul.f32 %v435, %v442
        %v445 = vmul.f32 %v436, %v442
        %v446 = vmul.f32 %v437, %v442
        %v447 = vmul.f32 %v438, %v442
        %449 = vset.pattern.permute.xlu0 0
        %450 = vperm.xlu0 %449, %v434
        %v451 = vpop.permute.xlu0 %450
        %v453 = vadd.f32 %v444, %v451
        %v454 = vadd.f32 %v445, %v451
        %v455 = vadd.f32 %v446, %v451
        %v456 = vadd.f32 %v447, %v451
        %v457 = vmax.f32 %v453, 0.0
        %v458 = vmax.f32 %v454, 0.0
        %v459 = vmax.f32 %v455, 0.0
        %v460 = vmax.f32 %v456, 0.0
        %v461 = vld [vmem:[%s2] sm:$0xf]
        %v462 = vld [vmem:[%s2 + $0x4] sm:$0xf]
        %v463 = vld [vmem:[%s2 + $0x8] sm:$0xf]
        %v464 = vld [vmem:[%s2 + $0xc] sm:$0xf]
        %v465 = vpack.c.bf16 %v457, %v457
        %v466 = vpack.c.bf16 %v458, %v458
        %v467 = vpack.c.bf16 %v459, %v459
        %v468 = vpack.c.bf16 %v460, %v460
        %v473 = vunpack.c.l.b16 %v461
        %v474 = vunpack.c.l.b16 %v462
        %v475 = vunpack.c.l.b16 %v463
        %v476 = vunpack.c.l.b16 %v464
        %v477 = vpack.c.b16 %v474, %v473
        %v478 = vpack.c.b16 %v476, %v475
        %vm479 = vcmask 64512
        %v481 = vsel %vm479, %v477, 0
        %v484 = vsel %vm479, %v478, 0
        %vm486 = vcmask 1043456
        %v488 = vsel %vm486, %v465, 0
        %v491 = vsel %vm486, %v466, 0
        %v494 = vsel %vm486, %v467, 0
        %v497 = vsel %vm486, %v468, 0
        %499 = vmatprep.subr.bf16.mxu0 %v491
        %500 = vmatpush1.bf16.msra.mxu0 %v488
        %501 = vmatprep.subr.bf16.mxu0 0
        %502 = vmatpush1.bf16.msra.mxu0 0
        %503 = vmatprep.subr.bf16.mxu0 0
        %504 = vmatpush1.bf16.msra.mxu0 0
        %505 = vmatprep.subr.bf16.mxu0 0
        %506 = vmatpush1.bf16.msra.mxu0 0
        %507 = vmatprep.subr.bf16.mxu0 0
        %508 = vmatpush1.bf16.msra.mxu0 0
        %509 = vmatprep.subr.bf16.mxu0 0
        %510 = vmatpush1.bf16.msra.mxu0 0
        %511 = vmatprep.subr.bf16.mxu0 0
        %512 = vmatpush1.bf16.msra.mxu0 0
        %513 = vmatprep.subr.bf16.mxu0 0
        %514 = vmatpush1.bf16.msra.mxu0 0
        %515 = vmatprep.subr.bf16.mxu0 0
        %516 = vmatpush1.bf16.msra.mxu0 0
        %517 = vmatprep.subr.bf16.mxu0 0
        %518 = vmatpush1.bf16.msra.mxu0 0
        %519 = vmatprep.subr.bf16.mxu0 0
        %520 = vmatpush1.bf16.msra.mxu0 0
        %521 = vmatprep.subr.bf16.mxu0 0
        %522 = vmatpush1.bf16.msra.mxu0 0
        %523 = vmatprep.subr.bf16.mxu0 0
        %524 = vmatpush1.bf16.msra.mxu0 0
        %525 = vmatprep.subr.bf16.mxu0 0
        %526 = vmatpush1.bf16.msra.mxu0 0
        %527 = vmatprep.subr.bf16.mxu0 0
        %528 = vmatpush1.bf16.msra.mxu0 0
        %529 = vmatprep.subr.bf16.mxu0 0
        %530 = vmatpush1.bf16.msra.mxu0 0
        %531 = vmatprep.mubr.bf16.mxu0 0
        %532 = vmatmul.mubr.bf16.gmra.mrb[0].mxu0 %v481
        %v533 = vpop.f32.mrb[0].mxu0
        %v534 = vadd.f32 0.0, %v533
        %v535 = vpop.f32.mrb[0].mxu0
        %v536 = vadd.f32 0.0, %v535
        %v537 = vpop.f32.mrb[0].mxu0
        %v538 = vadd.f32 0.0, %v537
        %v539 = vpop.f32.mrb[0].mxu0
        %v540 = vadd.f32 0.0, %v539
        %541 = vmatprep.mubr.bf16.mxu0 0
        %542 = vmatmul.mubr.bf16.gmra.mrb[0].mxu0 %v484
        %v543 = vpop.f32.mrb[0].mxu0
        %v544 = vadd.f32 0.0, %v543
        %v545 = vpop.f32.mrb[0].mxu0
        %v546 = vadd.f32 0.0, %v545
        %v547 = vpop.f32.mrb[0].mxu0
        %v548 = vadd.f32 0.0, %v547
        %v549 = vpop.f32.mrb[0].mxu0
        %v550 = vadd.f32 0.0, %v549
        %551 = vdwg.mxu0
        %552 = vmatprep.subr.bf16.mxu0 %v497
        %553 = vmatpush1.bf16.msra.mxu0 %v494
        %554 = vmatprep.subr.bf16.mxu0 0
        %555 = vmatpush1.bf16.msra.mxu0 0
        %556 = vmatprep.subr.bf16.mxu0 0
        %557 = vmatpush1.bf16.msra.mxu0 0
        %558 = vmatprep.subr.bf16.mxu0 0
        %559 = vmatpush1.bf16.msra.mxu0 0
        %560 = vmatprep.subr.bf16.mxu0 0
        %561 = vmatpush1.bf16.msra.mxu0 0
        %562 = vmatprep.subr.bf16.mxu0 0
        %563 = vmatpush1.bf16.msra.mxu0 0
        %564 = vmatprep.subr.bf16.mxu0 0
        %565 = vmatpush1.bf16.msra.mxu0 0
        %566 = vmatprep.subr.bf16.mxu0 0
        %567 = vmatpush1.bf16.msra.mxu0 0
        %568 = vmatprep.subr.bf16.mxu0 0
        %569 = vmatpush1.bf16.msra.mxu0 0
        %570 = vmatprep.subr.bf16.mxu0 0
        %571 = vmatpush1.bf16.msra.mxu0 0
        %572 = vmatprep.subr.bf16.mxu0 0
        %573 = vmatpush1.bf16.msra.mxu0 0
        %574 = vmatprep.subr.bf16.mxu0 0
        %575 = vmatpush1.bf16.msra.mxu0 0
        %576 = vmatprep.subr.bf16.mxu0 0
        %577 = vmatpush1.bf16.msra.mxu0 0
        %578 = vmatprep.subr.bf16.mxu0 0
        %579 = vmatpush1.bf16.msra.mxu0 0
        %580 = vmatprep.subr.bf16.mxu0 0
        %581 = vmatpush1.bf16.msra.mxu0 0
        %582 = vmatprep.subr.bf16.mxu0 0
        %583 = vmatpush1.bf16.msra.mxu0 0
        %584 = vmatprep.mubr.bf16.mxu0 0
        %585 = vmatmul.mubr.bf16.gmra.mrb[0].mxu0 %v481
        %v586 = vpop.f32.mrb[0].mxu0
        %v587 = vadd.f32 0.0, %v586
        %v588 = vpop.f32.mrb[0].mxu0
        %v589 = vadd.f32 0.0, %v588
        %v590 = vpop.f32.mrb[0].mxu0
        %v591 = vadd.f32 0.0, %v590
        %v592 = vpop.f32.mrb[0].mxu0
        %v593 = vadd.f32 0.0, %v592
        %594 = vmatprep.mubr.bf16.mxu0 0
        %595 = vmatmul.mubr.bf16.gmra.mrb[0].mxu0 %v484
        %v596 = vpop.f32.mrb[0].mxu0
        %v597 = vadd.f32 0.0, %v596
        %v598 = vpop.f32.mrb[0].mxu0
        %v599 = vadd.f32 0.0, %v598
        %v600 = vpop.f32.mrb[0].mxu0
        %v601 = vadd.f32 0.0, %v600
        %v602 = vpop.f32.mrb[0].mxu0
        %v603 = vadd.f32 0.0, %v602
        %604 = vdwg.mxu0
        %v605 = vld [vmem:[%s7] sm:$0xff]
        %v606 = vld [vmem:[%s7 + $0x8] sm:$0xff]
        %v607 = vld [vmem:[%s7 + $0x10] sm:$0xff]
        %v608 = vld [vmem:[%s7 + $0x18] sm:$0xff]
        %v609 = vld [vmem:[%s7 + $0x20] sm:$0xff]
        %v610 = vld [vmem:[%s7 + $0x28] sm:$0xff]
        %v611 = vld [vmem:[%s7 + $0x30] sm:$0xff]
        %v612 = vld [vmem:[%s7 + $0x38] sm:$0xff]
        %614 = vset.pattern.permute.xlu0 0
        %615 = vperm.xlu0 %614, %v605
        %v616 = vpop.permute.xlu0 %615
        %619 = vset.pattern.permute.xlu0 0
        %620 = vperm.xlu0 %619, %v606
        %v621 = vpop.permute.xlu0 %620
        %624 = vset.pattern.permute.xlu0 0
        %625 = vperm.xlu0 %624, %v607
        %v626 = vpop.permute.xlu0 %625
        %629 = vset.pattern.permute.xlu0 0
        %630 = vperm.xlu0 %629, %v608
        %v631 = vpop.permute.xlu0 %630
        %v633 = vmul.f32 %v534, %v616
        %v634 = vmul.f32 %v536, %v616
        %v635 = vmul.f32 %v587, %v616
        %v636 = vmul.f32 %v589, %v616
        %v637 = vmul.f32 %v538, %v621
        %v638 = vmul.f32 %v540, %v621
        %v639 = vmul.f32 %v591, %v621
        %v640 = vmul.f32 %v593, %v621
        %v641 = vmul.f32 %v544, %v626
        %v642 = vmul.f32 %v546, %v626
        %v643 = vmul.f32 %v597, %v626
        %v644 = vmul.f32 %v599, %v626
        %v645 = vmul.f32 %v548, %v631
        %v646 = vmul.f32 %v550, %v631
        %v647 = vmul.f32 %v601, %v631
        %v648 = vmul.f32 %v603, %v631
        %650 = vset.pattern.permute.xlu0 0
        %651 = vperm.xlu0 %650, %v609
        %v652 = vpop.permute.xlu0 %651
        %655 = vset.pattern.permute.xlu0 0
        %656 = vperm.xlu0 %655, %v610
        %v657 = vpop.permute.xlu0 %656
        %660 = vset.pattern.permute.xlu0 0
        %661 = vperm.xlu0 %660, %v611
        %v662 = vpop.permute.xlu0 %661
        %665 = vset.pattern.permute.xlu0 0
        %666 = vperm.xlu0 %665, %v612
        %v667 = vpop.permute.xlu0 %666
        %v669 = vadd.f32 %v633, %v652
        %v670 = vadd.f32 %v634, %v652
        %v671 = vadd.f32 %v635, %v652
        %v672 = vadd.f32 %v636, %v652
        %v673 = vadd.f32 %v637, %v657
        %v674 = vadd.f32 %v638, %v657
        %v675 = vadd.f32 %v639, %v657
        %v676 = vadd.f32 %v640, %v657
        %v677 = vadd.f32 %v641, %v662
        %v678 = vadd.f32 %v642, %v662
        %v679 = vadd.f32 %v643, %v662
        %v680 = vadd.f32 %v644, %v662
        %v681 = vadd.f32 %v645, %v667
        %v682 = vadd.f32 %v646, %v667
        %v683 = vadd.f32 %v647, %v667
        %v684 = vadd.f32 %v648, %v667
        %v685 = vmax.f32 %v669, 0.0
        %v686 = vmax.f32 %v670, 0.0
        %v687 = vmax.f32 %v671, 0.0
        %v688 = vmax.f32 %v672, 0.0
        %v689 = vmax.f32 %v673, 0.0
        %v690 = vmax.f32 %v674, 0.0
        %v691 = vmax.f32 %v675, 0.0
        %v692 = vmax.f32 %v676, 0.0
        %v693 = vmax.f32 %v677, 0.0
        %v694 = vmax.f32 %v678, 0.0
        %v695 = vmax.f32 %v679, 0.0
        %v696 = vmax.f32 %v680, 0.0
        %v697 = vmax.f32 %v681, 0.0
        %v698 = vmax.f32 %v682, 0.0
        %v699 = vmax.f32 %v683, 0.0
        %v700 = vmax.f32 %v684, 0.0
        %v701 = vld [vmem:[#allocation7] sm:$0xf]
        %v702 = vld [vmem:[#allocation7 + $0x4] sm:$0xf]
        %v703 = vpack.c.bf16 %v689, %v685
        %v704 = vpack.c.bf16 %v690, %v686
        %v705 = vpack.c.bf16 %v691, %v687
        %v706 = vpack.c.bf16 %v692, %v688
        %v707 = vpack.c.bf16 %v697, %v693
        %v708 = vpack.c.bf16 %v698, %v694
        %v709 = vpack.c.bf16 %v699, %v695
        %v710 = vpack.c.bf16 %v700, %v696
        %v711 = vpack.c.bf16 %v538, %v534
        %v712 = vpack.c.bf16 %v540, %v536
        %v713 = vpack.c.bf16 %v591, %v587
        %v714 = vpack.c.bf16 %v593, %v589
        %v715 = vpack.c.bf16 %v548, %v544
        %v716 = vpack.c.bf16 %v550, %v546
        %v717 = vpack.c.bf16 %v601, %v597
        %v718 = vpack.c.bf16 %v603, %v599
        %v719 = vld [vmem:[#allocation2] sm:$0xff]
        %v720 = vld [vmem:[#allocation2 + $0x8] sm:$0xff]
        %v721 = vld [vmem:[#allocation2 + $0x10] sm:$0xff]
        %v722 = vld [vmem:[#allocation2 + $0x18] sm:$0xff]
        %v723 = vld [vmem:[#allocation2 + $0x20] sm:$0xff]
        %v724 = vld [vmem:[#allocation2 + $0x28] sm:$0xff]
        %v725 = vld [vmem:[#allocation2 + $0x30] sm:$0xff]
        %v726 = vld [vmem:[#allocation2 + $0x38] sm:$0xff]
        %v727 = vld [vmem:[#allocation2 + $0x40] sm:$0xff]
        %v728 = vld [vmem:[#allocation2 + $0x48] sm:$0xff]
        %v729 = vld [vmem:[#allocation2 + $0x50] sm:$0xff]
        %v730 = vld [vmem:[#allocation2 + $0x58] sm:$0xff]
        %v731 = vld [vmem:[#allocation2 + $0x60] sm:$0xff]
        %v732 = vld [vmem:[#allocation2 + $0x68] sm:$0xff]
        %v733 = vld [vmem:[#allocation2 + $0x70] sm:$0xff]
        %v734 = vld [vmem:[#allocation2 + $0x78] sm:$0xff]
        %v735 = vld [vmem:[#allocation2 + $0x80] sm:$0xff]
        %v736 = vld [vmem:[#allocation2 + $0x88] sm:$0xff]
        %v737 = vld [vmem:[#allocation2 + $0x90] sm:$0xff]
        %v738 = vld [vmem:[#allocation2 + $0x98] sm:$0xff]
        %v739 = vld [vmem:[#allocation2 + $0xa0] sm:$0xff]
        %v740 = vld [vmem:[#allocation2 + $0xa8] sm:$0xff]
        %v741 = vld [vmem:[#allocation2 + $0xb0] sm:$0xff]
        %v742 = vld [vmem:[#allocation2 + $0xb8] sm:$0xff]
        %v743 = vld [vmem:[#allocation2 + $0xc0] sm:$0xff]
        %v744 = vld [vmem:[#allocation2 + $0xc8] sm:$0xff]
        %v745 = vld [vmem:[#allocation2 + $0xd0] sm:$0xff]
        %v746 = vld [vmem:[#allocation2 + $0xd8] sm:$0xff]
        %v747 = vld [vmem:[#allocation2 + $0xe0] sm:$0xff]
        %v748 = vld [vmem:[#allocation2 + $0xe8] sm:$0xff]
        %v749 = vld [vmem:[#allocation2 + $0xf0] sm:$0xff]
        %v750 = vld [vmem:[#allocation2 + $0xf8] sm:$0xff]
        %v751 = vld [vmem:[#allocation2 + $0x100] sm:$0xff]
        %v752 = vld [vmem:[#allocation2 + $0x108] sm:$0xff]
        %v753 = vld [vmem:[#allocation2 + $0x110] sm:$0xff]
        %v754 = vld [vmem:[#allocation2 + $0x118] sm:$0xff]
        %v755 = vld [vmem:[#allocation2 + $0x120] sm:$0xff]
        %v756 = vld [vmem:[#allocation2 + $0x128] sm:$0xff]
        %v757 = vld [vmem:[#allocation2 + $0x130] sm:$0xff]
        %v758 = vld [vmem:[#allocation2 + $0x138] sm:$0xff]
        %v759 = vld [vmem:[#allocation2 + $0x140] sm:$0xff]
        %v760 = vld [vmem:[#allocation2 + $0x148] sm:$0xff]
        %v761 = vld [vmem:[#allocation2 + $0x150] sm:$0xff]
        %v762 = vld [vmem:[#allocation2 + $0x158] sm:$0xff]
        %v763 = vld [vmem:[#allocation2 + $0x160] sm:$0xff]
        %v764 = vld [vmem:[#allocation2 + $0x168] sm:$0xff]
        %v765 = vld [vmem:[#allocation2 + $0x170] sm:$0xff]
        %v766 = vld [vmem:[#allocation2 + $0x178] sm:$0xff]
        %v767 = vld [vmem:[#allocation2 + $0x180] sm:$0xff]
        %v768 = vld [vmem:[#allocation2 + $0x188] sm:$0xff]
        %v769 = vld [vmem:[#allocation2 + $0x190] sm:$0xff]
        %v770 = vld [vmem:[#allocation2 + $0x198] sm:$0xff]
        %v771 = vld [vmem:[#allocation2 + $0x1a0] sm:$0xff]
        %v772 = vld [vmem:[#allocation2 + $0x1a8] sm:$0xff]
        %v773 = vld [vmem:[#allocation2 + $0x1b0] sm:$0xff]
        %v774 = vld [vmem:[#allocation2 + $0x1b8] sm:$0xff]
        %v775 = vld [vmem:[#allocation2 + $0x1c0] sm:$0xff]
        %v776 = vld [vmem:[#allocation2 + $0x1c8] sm:$0xff]
        %v777 = vld [vmem:[#allocation2 + $0x1d0] sm:$0xff]
        %v778 = vld [vmem:[#allocation2 + $0x1d8] sm:$0xff]
        %v779 = vld [vmem:[#allocation2 + $0x1e0] sm:$0xff]
        %v780 = vld [vmem:[#allocation2 + $0x1e8] sm:$0xff]
        %v781 = vld [vmem:[#allocation2 + $0x1f0] sm:$0xff]
        %v782 = vld [vmem:[#allocation2 + $0x1f8] sm:$0xff]
        %v847 = vunpack.c.l.b16 %v719
        %v848 = vunpack.c.h.b16 %v719
        %v849 = vunpack.c.l.b16 %v720
        %v850 = vunpack.c.h.b16 %v720
        %v851 = vunpack.c.l.b16 %v721
        %v852 = vunpack.c.h.b16 %v721
        %v853 = vunpack.c.l.b16 %v722
        %v854 = vunpack.c.h.b16 %v722
        %v855 = vunpack.c.l.b16 %v723
        %v856 = vunpack.c.h.b16 %v723
        %v857 = vunpack.c.l.b16 %v724
        %v858 = vunpack.c.h.b16 %v724
        %v859 = vunpack.c.l.b16 %v725
        %v860 = vunpack.c.h.b16 %v725
        %v861 = vunpack.c.l.b16 %v726
        %v862 = vunpack.c.h.b16 %v726
        %v863 = vunpack.c.l.b16 %v727
        %v864 = vunpack.c.h.b16 %v727
        %v865 = vunpack.c.l.b16 %v728
        %v866 = vunpack.c.h.b16 %v728
        %v867 = vunpack.c.l.b16 %v729
        %v868 = vunpack.c.h.b16 %v729
        %v869 = vunpack.c.l.b16 %v730
        %v870 = vunpack.c.h.b16 %v730
        %v871 = vunpack.c.l.b16 %v731
        %v872 = vunpack.c.h.b16 %v731
        %v873 = vunpack.c.l.b16 %v732
        %v874 = vunpack.c.h.b16 %v732
        %v875 = vunpack.c.l.b16 %v733
        %v876 = vunpack.c.h.b16 %v733
        %v877 = vunpack.c.l.b16 %v734
        %v878 = vunpack.c.h.b16 %v734
        %v879 = vunpack.c.l.b16 %v735
        %v880 = vunpack.c.h.b16 %v735
        %v881 = vunpack.c.l.b16 %v736
        %v882 = vunpack.c.h.b16 %v736
        %v883 = vunpack.c.l.b16 %v737
        %v884 = vunpack.c.h.b16 %v737
        %v885 = vunpack.c.l.b16 %v738
        %v886 = vunpack.c.h.b16 %v738
        %v887 = vunpack.c.l.b16 %v739
        %v888 = vunpack.c.h.b16 %v739
        %v889 = vunpack.c.l.b16 %v740
        %v890 = vunpack.c.h.b16 %v740
        %v891 = vunpack.c.l.b16 %v741
        %v892 = vunpack.c.h.b16 %v741
        %v893 = vunpack.c.l.b16 %v742
        %v894 = vunpack.c.h.b16 %v742
        %v895 = vunpack.c.l.b16 %v743
        %v896 = vunpack.c.h.b16 %v743
        %v897 = vunpack.c.l.b16 %v744
        %v898 = vunpack.c.h.b16 %v744
        %v899 = vunpack.c.l.b16 %v745
        %v900 = vunpack.c.h.b16 %v745
        %v901 = vunpack.c.l.b16 %v746
        %v902 = vunpack.c.h.b16 %v746
        %v903 = vunpack.c.l.b16 %v747
        %v904 = vunpack.c.h.b16 %v747
        %v905 = vunpack.c.l.b16 %v748
        %v906 = vunpack.c.h.b16 %v748
        %v907 = vunpack.c.l.b16 %v749
        %v908 = vunpack.c.h.b16 %v749
        %v909 = vunpack.c.l.b16 %v750
        %v910 = vunpack.c.h.b16 %v750
        %v911 = vunpack.c.l.b16 %v751
        %v912 = vunpack.c.h.b16 %v751
        %v913 = vunpack.c.l.b16 %v752
        %v914 = vunpack.c.h.b16 %v752
        %v915 = vunpack.c.l.b16 %v753
        %v916 = vunpack.c.h.b16 %v753
        %v917 = vunpack.c.l.b16 %v754
        %v918 = vunpack.c.h.b16 %v754
        %v919 = vunpack.c.l.b16 %v755
        %v920 = vunpack.c.h.b16 %v755
        %v921 = vunpack.c.l.b16 %v756
        %v922 = vunpack.c.h.b16 %v756
        %v923 = vunpack.c.l.b16 %v757
        %v924 = vunpack.c.h.b16 %v757
        %v925 = vunpack.c.l.b16 %v758
        %v926 = vunpack.c.h.b16 %v758
        %v927 = vunpack.c.l.b16 %v759
        %v928 = vunpack.c.h.b16 %v759
        %v929 = vunpack.c.l.b16 %v760
        %v930 = vunpack.c.h.b16 %v760
        %v931 = vunpack.c.l.b16 %v761
        %v932 = vunpack.c.h.b16 %v761
        %v933 = vunpack.c.l.b16 %v762
        %v934 = vunpack.c.h.b16 %v762
        %v935 = vunpack.c.l.b16 %v763
        %v936 = vunpack.c.h.b16 %v763
        %v937 = vunpack.c.l.b16 %v764
        %v938 = vunpack.c.h.b16 %v764
        %v939 = vunpack.c.l.b16 %v765
        %v940 = vunpack.c.h.b16 %v765
        %v941 = vunpack.c.l.b16 %v766
        %v942 = vunpack.c.h.b16 %v766
        %v943 = vunpack.c.l.b16 %v767
        %v944 = vunpack.c.h.b16 %v767
        %v945 = vunpack.c.l.b16 %v768
        %v946 = vunpack.c.h.b16 %v768
        %v947 = vunpack.c.l.b16 %v769
        %v948 = vunpack.c.h.b16 %v769
        %v949 = vunpack.c.l.b16 %v770
        %v950 = vunpack.c.h.b16 %v770
        %v951 = vunpack.c.l.b16 %v771
        %v952 = vunpack.c.h.b16 %v771
        %v953 = vunpack.c.l.b16 %v772
        %v954 = vunpack.c.h.b16 %v772
        %v955 = vunpack.c.l.b16 %v773
        %v956 = vunpack.c.h.b16 %v773
        %v957 = vunpack.c.l.b16 %v774
        %v958 = vunpack.c.h.b16 %v774
        %v959 = vunpack.c.l.b16 %v775
        %v960 = vunpack.c.h.b16 %v775
        %v961 = vunpack.c.l.b16 %v776
        %v962 = vunpack.c.h.b16 %v776
        %v963 = vunpack.c.l.b16 %v777
        %v964 = vunpack.c.h.b16 %v777
        %v965 = vunpack.c.l.b16 %v778
        %v966 = vunpack.c.h.b16 %v778
        %v967 = vunpack.c.l.b16 %v779
        %v968 = vunpack.c.h.b16 %v779
        %v969 = vunpack.c.l.b16 %v780
        %v970 = vunpack.c.h.b16 %v780
        %v971 = vunpack.c.l.b16 %v781
        %v972 = vunpack.c.h.b16 %v781
        %v973 = vunpack.c.l.b16 %v782
        %v974 = vunpack.c.h.b16 %v782
        %v975 = vpack.c.b16 %v849, %v847
        %v976 = vpack.c.b16 %v850, %v848
        %v977 = vpack.c.b16 %v853, %v851
        %v978 = vpack.c.b16 %v854, %v852
        %v979 = vpack.c.b16 %v857, %v855
        %v980 = vpack.c.b16 %v858, %v856
        %v981 = vpack.c.b16 %v861, %v859
        %v982 = vpack.c.b16 %v862, %v860
        %v983 = vpack.c.b16 %v865, %v863
        %v984 = vpack.c.b16 %v866, %v864
        %v985 = vpack.c.b16 %v869, %v867
        %v986 = vpack.c.b16 %v870, %v868
        %v987 = vpack.c.b16 %v873, %v871
        %v988 = vpack.c.b16 %v874, %v872
        %v989 = vpack.c.b16 %v877, %v875
        %v990 = vpack.c.b16 %v878, %v876
        %v991 = vpack.c.b16 %v881, %v879
        %v992 = vpack.c.b16 %v882, %v880
        %v993 = vpack.c.b16 %v885, %v883
        %v994 = vpack.c.b16 %v886, %v884
        %v995 = vpack.c.b16 %v889, %v887
        %v996 = vpack.c.b16 %v890, %v888
        %v997 = vpack.c.b16 %v893, %v891
        %v998 = vpack.c.b16 %v894, %v892
        %v999 = vpack.c.b16 %v897, %v895
        %v1000 = vpack.c.b16 %v898, %v896
        %v1001 = vpack.c.b16 %v901, %v899
        %v1002 = vpack.c.b16 %v902, %v900
        %v1003 = vpack.c.b16 %v905, %v903
        %v1004 = vpack.c.b16 %v906, %v904
        %v1005 = vpack.c.b16 %v909, %v907
        %v1006 = vpack.c.b16 %v910, %v908
        %v1007 = vpack.c.b16 %v913, %v911
        %v1008 = vpack.c.b16 %v914, %v912
        %v1009 = vpack.c.b16 %v917, %v915
        %v1010 = vpack.c.b16 %v918, %v916
        %v1011 = vpack.c.b16 %v921, %v919
        %v1012 = vpack.c.b16 %v922, %v920
        %v1013 = vpack.c.b16 %v925, %v923
        %v1014 = vpack.c.b16 %v926, %v924
        %v1015 = vpack.c.b16 %v929, %v927
        %v1016 = vpack.c.b16 %v930, %v928
        %v1017 = vpack.c.b16 %v933, %v931
        %v1018 = vpack.c.b16 %v934, %v932
        %v1019 = vpack.c.b16 %v937, %v935
        %v1020 = vpack.c.b16 %v938, %v936
        %v1021 = vpack.c.b16 %v941, %v939
        %v1022 = vpack.c.b16 %v942, %v940
        %v1023 = vpack.c.b16 %v945, %v943
        %v1024 = vpack.c.b16 %v946, %v944
        %v1025 = vpack.c.b16 %v949, %v947
        %v1026 = vpack.c.b16 %v950, %v948
        %v1027 = vpack.c.b16 %v953, %v951
        %v1028 = vpack.c.b16 %v954, %v952
        %v1029 = vpack.c.b16 %v957, %v955
        %v1030 = vpack.c.b16 %v958, %v956
        %v1031 = vpack.c.b16 %v961, %v959
        %v1032 = vpack.c.b16 %v962, %v960
        %v1033 = vpack.c.b16 %v965, %v963
        %v1034 = vpack.c.b16 %v966, %v964
        %v1035 = vpack.c.b16 %v969, %v967
        %v1036 = vpack.c.b16 %v970, %v968
        %v1037 = vpack.c.b16 %v973, %v971
        %v1038 = vpack.c.b16 %v974, %v972
        %1103 = vmatprep.subr.bf16.mxu0 %v976
        %1104 = vmatpush1.bf16.msra.mxu0 %v975
        %1105 = vmatprep.subr.bf16.mxu0 %v978
        %1106 = vmatpush1.bf16.msra.mxu0 %v977
        %1107 = vmatprep.subr.bf16.mxu0 %v980
        %1108 = vmatpush1.bf16.msra.mxu0 %v979
        %1109 = vmatprep.subr.bf16.mxu0 %v982
        %1110 = vmatpush1.bf16.msra.mxu0 %v981
        %1111 = vmatprep.subr.bf16.mxu0 %v984
        %1112 = vmatpush1.bf16.msra.mxu0 %v983
        %1113 = vmatprep.subr.bf16.mxu0 %v986
        %1114 = vmatpush1.bf16.msra.mxu0 %v985
        %1115 = vmatprep.subr.bf16.mxu0 %v988
        %1116 = vmatpush1.bf16.msra.mxu0 %v987
        %1117 = vmatprep.subr.bf16.mxu0 %v990
        %1118 = vmatpush1.bf16.msra.mxu0 %v989
        %1119 = vmatprep.subr.bf16.mxu0 %v992
        %1120 = vmatpush1.bf16.msra.mxu0 %v991
        %1121 = vmatprep.subr.bf16.mxu0 %v994
        %1122 = vmatpush1.bf16.msra.mxu0 %v993
        %1123 = vmatprep.subr.bf16.mxu0 %v996
        %1124 = vmatpush1.bf16.msra.mxu0 %v995
        %1125 = vmatprep.subr.bf16.mxu0 %v998
        %1126 = vmatpush1.bf16.msra.mxu0 %v997
        %1127 = vmatprep.subr.bf16.mxu0 %v1000
        %1128 = vmatpush1.bf16.msra.mxu0 %v999
        %1129 = vmatprep.subr.bf16.mxu0 %v1002
        %1130 = vmatpush1.bf16.msra.mxu0 %v1001
        %1131 = vmatprep.subr.bf16.mxu0 %v1004
        %1132 = vmatpush1.bf16.msra.mxu0 %v1003
        %1133 = vmatprep.subr.bf16.mxu0 %v1006
        %1134 = vmatpush1.bf16.msra.mxu0 %v1005
        %1135 = vmatprep.mubr.bf16.mxu0 %v712
        %1136 = vmatmul.mubr.bf16.gmra.mrb[0].mxu0 %v711
        %v1137 = vpop.f32.mrb[0].mxu0
        %v1138 = vadd.f32 0.0, %v1137
        %v1139 = vpop.f32.mrb[0].mxu0
        %v1140 = vadd.f32 0.0, %v1139
        %v1141 = vpop.f32.mrb[0].mxu0
        %v1142 = vadd.f32 0.0, %v1141
        %v1143 = vpop.f32.mrb[0].mxu0
        %v1144 = vadd.f32 0.0, %v1143
        %1145 = vmatprep.mubr.bf16.mxu0 %v716
        %1146 = vmatmul.mubr.bf16.gmra.mrb[0].mxu0 %v715
        %v1147 = vpop.f32.mrb[0].mxu0
        %v1148 = vadd.f32 0.0, %v1147
        %v1149 = vpop.f32.mrb[0].mxu0
        %v1150 = vadd.f32 0.0, %v1149
        %v1151 = vpop.f32.mrb[0].mxu0
        %v1152 = vadd.f32 0.0, %v1151
        %v1153 = vpop.f32.mrb[0].mxu0
        %v1154 = vadd.f32 0.0, %v1153
        %1155 = vdwg.mxu0
        %1156 = vmatprep.subr.bf16.mxu0 %v1008
        %1157 = vmatpush1.bf16.msra.mxu0 %v1007
        %1158 = vmatprep.subr.bf16.mxu0 %v1010
        %1159 = vmatpush1.bf16.msra.mxu0 %v1009
        %1160 = vmatprep.subr.bf16.mxu0 %v1012
        %1161 = vmatpush1.bf16.msra.mxu0 %v1011
        %1162 = vmatprep.subr.bf16.mxu0 %v1014
        %1163 = vmatpush1.bf16.msra.mxu0 %v1013
        %1164 = vmatprep.subr.bf16.mxu0 %v1016
        %1165 = vmatpush1.bf16.msra.mxu0 %v1015
        %1166 = vmatprep.subr.bf16.mxu0 %v1018
        %1167 = vmatpush1.bf16.msra.mxu0 %v1017
        %1168 = vmatprep.subr.bf16.mxu0 %v1020
        %1169 = vmatpush1.bf16.msra.mxu0 %v1019
        %1170 = vmatprep.subr.bf16.mxu0 %v1022
        %1171 = vmatpush1.bf16.msra.mxu0 %v1021
        %1172 = vmatprep.subr.bf16.mxu0 %v1024
        %1173 = vmatpush1.bf16.msra.mxu0 %v1023
        %1174 = vmatprep.subr.bf16.mxu0 %v1026
        %1175 = vmatpush1.bf16.msra.mxu0 %v1025
        %1176 = vmatprep.subr.bf16.mxu0 %v1028
        %1177 = vmatpush1.bf16.msra.mxu0 %v1027
        %1178 = vmatprep.subr.bf16.mxu0 %v1030
        %1179 = vmatpush1.bf16.msra.mxu0 %v1029
        %1180 = vmatprep.subr.bf16.mxu0 %v1032
        %1181 = vmatpush1.bf16.msra.mxu0 %v1031
        %1182 = vmatprep.subr.bf16.mxu0 %v1034
        %1183 = vmatpush1.bf16.msra.mxu0 %v1033
        %1184 = vmatprep.subr.bf16.mxu0 %v1036
        %1185 = vmatpush1.bf16.msra.mxu0 %v1035
        %1186 = vmatprep.subr.bf16.mxu0 %v1038
        %1187 = vmatpush1.bf16.msra.mxu0 %v1037
        %1188 = vmatprep.mubr.bf16.mxu0 %v714
        %1189 = vmatmul.mubr.bf16.gmra.mrb[0].mxu0 %v713
        %v1190 = vpop.f32.mrb[0].mxu0
        %v1191 = vadd.f32 %v1138, %v1190
        %v1192 = vpop.f32.mrb[0].mxu0
        %v1193 = vadd.f32 %v1140, %v1192
        %v1194 = vpop.f32.mrb[0].mxu0
        %v1195 = vadd.f32 %v1142, %v1194
        %v1196 = vpop.f32.mrb[0].mxu0
        %v1197 = vadd.f32 %v1144, %v1196
        %1198 = vmatprep.mubr.bf16.mxu0 %v718
        %1199 = vmatmul.mubr.bf16.gmra.mrb[0].mxu0 %v717
        %v1200 = vpop.f32.mrb[0].mxu0
        %v1201 = vadd.f32 %v1148, %v1200
        %v1202 = vpop.f32.mrb[0].mxu0
        %v1203 = vadd.f32 %v1150, %v1202
        %v1204 = vpop.f32.mrb[0].mxu0
        %v1205 = vadd.f32 %v1152, %v1204
        %v1206 = vpop.f32.mrb[0].mxu0
        %v1207 = vadd.f32 %v1154, %v1206
        %1208 = vdwg.mxu0
        %v1209 = vld [vmem:[%s4] sm:$0xff]
        %v1210 = vld [vmem:[%s4 + $0x8] sm:$0xff]
        %v1211 = vld [vmem:[%s4 + $0x10] sm:$0xff]
        %v1212 = vld [vmem:[%s4 + $0x18] sm:$0xff]
        %v1213 = vld [vmem:[%s4 + $0x20] sm:$0xff]
        %v1214 = vld [vmem:[%s4 + $0x28] sm:$0xff]
        %v1215 = vld [vmem:[%s4 + $0x30] sm:$0xff]
        %v1216 = vld [vmem:[%s4 + $0x38] sm:$0xff]
        %v1217 = vld [vmem:[%s4 + $0x40] sm:$0xff]
        %v1218 = vld [vmem:[%s4 + $0x48] sm:$0xff]
        %v1219 = vld [vmem:[%s4 + $0x50] sm:$0xff]
        %v1220 = vld [vmem:[%s4 + $0x58] sm:$0xff]
        %v1221 = vld [vmem:[%s4 + $0x60] sm:$0xff]
        %v1222 = vld [vmem:[%s4 + $0x68] sm:$0xff]
        %v1223 = vld [vmem:[%s4 + $0x70] sm:$0xff]
        %v1224 = vld [vmem:[%s4 + $0x78] sm:$0xff]
        %v1225 = vmul.f32 %v1191, %v1209
        %v1226 = vmul.f32 %v1193, %v1210
        %v1227 = vmul.f32 %v1195, %v1211
        %v1228 = vmul.f32 %v1197, %v1212
        %v1229 = vmul.f32 %v1201, %v1213
        %v1230 = vmul.f32 %v1203, %v1214
        %v1231 = vmul.f32 %v1205, %v1215
        %v1232 = vmul.f32 %v1207, %v1216
        %v1233 = vadd.f32 %v1225, %v1217
        %v1234 = vadd.f32 %v1226, %v1218
        %v1235 = vadd.f32 %v1227, %v1219
        %v1236 = vadd.f32 %v1228, %v1220
        %v1237 = vadd.f32 %v1229, %v1221
        %v1238 = vadd.f32 %v1230, %v1222
        %v1239 = vadd.f32 %v1231, %v1223
        %v1240 = vadd.f32 %v1232, %v1224
        %v1241 = vmax.f32 %v1233, 0.0
        %v1242 = vmax.f32 %v1234, 0.0
        %v1243 = vmax.f32 %v1235, 0.0
        %v1244 = vmax.f32 %v1236, 0.0
        %v1245 = vmax.f32 %v1237, 0.0
        %v1246 = vmax.f32 %v1238, 0.0
        %v1247 = vmax.f32 %v1239, 0.0
        %v1248 = vmax.f32 %v1240, 0.0
        %v1249 = vpack.c.bf16 %v1243, %v1241
        %v1250 = vpack.c.bf16 %v1244, %v1242
        %v1251 = vpack.c.bf16 %v1247, %v1245
        %v1252 = vpack.c.bf16 %v1248, %v1246
        %v1253 = vld [vmem:[%s5] sm:$0xf]
        %v1254 = vld [vmem:[%s5 + $0x4] sm:$0xf]
        %v1257 = vunpack.c.l.b16 %v1253
        %v1258 = vunpack.c.l.b16 %v1254
        %v1259 = vpack.c.b16 %v1258, %v1257
        %vm1260 = vcmask 261120
        %v1262 = vsel %vm1260, %v1259, 0
        %1264 = vmatprep.subr.bf16.mxu0 %v1250
        %1265 = vmatpush1.bf16.msra.mxu0 %v1249
        %1266 = vmatprep.subr.bf16.mxu0 %v1252
        %1267 = vmatpush1.bf16.msra.mxu0 %v1251
        %1268 = vmatprep.subr.bf16.mxu0 0
        %1269 = vmatpush1.bf16.msra.mxu0 0
        %1270 = vmatprep.subr.bf16.mxu0 0
        %1271 = vmatpush1.bf16.msra.mxu0 0
        %1272 = vmatprep.subr.bf16.mxu0 0
        %1273 = vmatpush1.bf16.msra.mxu0 0
        %1274 = vmatprep.subr.bf16.mxu0 0
        %1275 = vmatpush1.bf16.msra.mxu0 0
        %1276 = vmatprep.subr.bf16.mxu0 0
        %1277 = vmatpush1.bf16.msra.mxu0 0
        %1278 = vmatprep.subr.bf16.mxu0 0
        %1279 = vmatpush1.bf16.msra.mxu0 0
        %1280 = vmatprep.subr.bf16.mxu0 0
        %1281 = vmatpush1.bf16.msra.mxu0 0
        %1282 = vmatprep.subr.bf16.mxu0 0
        %1283 = vmatpush1.bf16.msra.mxu0 0
        %1284 = vmatprep.subr.bf16.mxu0 0
        %1285 = vmatpush1.bf16.msra.mxu0 0
        %1286 = vmatprep.subr.bf16.mxu0 0
        %1287 = vmatpush1.bf16.msra.mxu0 0
        %1288 = vmatprep.subr.bf16.mxu0 0
        %1289 = vmatpush1.bf16.msra.mxu0 0
        %1290 = vmatprep.subr.bf16.mxu0 0
        %1291 = vmatpush1.bf16.msra.mxu0 0
        %1292 = vmatprep.subr.bf16.mxu0 0
        %1293 = vmatpush1.bf16.msra.mxu0 0
        %1294 = vmatprep.subr.bf16.mxu0 0
        %1295 = vmatpush1.bf16.msra.mxu0 0
        %1296 = vmatprep.mubr.bf16.mxu0 0
        %1297 = vmatmul.mubr.bf16.gmra.mrb[0].mxu0 %v1262
        %v1298 = vpop.f32.mrb[0].mxu0
        %v1299 = vadd.f32 0.0, %v1298
        %v1300 = vpop.f32.mrb[0].mxu0
        %v1301 = vadd.f32 0.0, %v1300
        %v1302 = vpop.f32.mrb[0].mxu0
        %v1303 = vadd.f32 0.0, %v1302
        %v1304 = vpop.f32.mrb[0].mxu0
        %v1305 = vadd.f32 0.0, %v1304
        %1306 = vdwg.mxu0
        %v1307 = vpack.c.bf16 %v1303, %v1299
        %v1308 = vpack.c.bf16 %v1305, %v1301
        %v1309 = vld [vmem:[#allocation5] sm:$0xff]
        %v1310 = vld [vmem:[#allocation5 + $0x8] sm:$0xff]
        %v1311 = vld [vmem:[#allocation5 + $0x10] sm:$0xff]
        %v1312 = vld [vmem:[#allocation5 + $0x18] sm:$0xff]
        %v1313 = vld [vmem:[#allocation5 + $0x20] sm:$0xff]
        %v1314 = vld [vmem:[#allocation5 + $0x28] sm:$0xff]
        %v1315 = vld [vmem:[#allocation5 + $0x30] sm:$0xff]
        %v1316 = vld [vmem:[#allocation5 + $0x38] sm:$0xff]
        %v1317 = vld [vmem:[#allocation5 + $0x40] sm:$0xff]
        %v1318 = vld [vmem:[#allocation5 + $0x48] sm:$0xff]
        %v1319 = vld [vmem:[#allocation5 + $0x50] sm:$0xff]
        %v1320 = vld [vmem:[#allocation5 + $0x58] sm:$0xff]
        %v1321 = vld [vmem:[#allocation5 + $0x60] sm:$0xff]
        %v1322 = vld [vmem:[#allocation5 + $0x68] sm:$0xff]
        %v1323 = vld [vmem:[#allocation5 + $0x70] sm:$0xff]
        %v1324 = vld [vmem:[#allocation5 + $0x78] sm:$0xff]
        %v1325 = vld [vmem:[#allocation5 + $0x80] sm:$0xff]
        %v1326 = vld [vmem:[#allocation5 + $0x88] sm:$0xff]
        %v1327 = vld [vmem:[#allocation5 + $0x90] sm:$0xff]
        %v1328 = vld [vmem:[#allocation5 + $0x98] sm:$0xff]
        %v1329 = vld [vmem:[#allocation5 + $0xa0] sm:$0xff]
        %v1330 = vld [vmem:[#allocation5 + $0xa8] sm:$0xff]
        %v1331 = vld [vmem:[#allocation5 + $0xb0] sm:$0xff]
        %v1332 = vld [vmem:[#allocation5 + $0xb8] sm:$0xff]
        %v1333 = vld [vmem:[#allocation5 + $0xc0] sm:$0xff]
        %v1334 = vld [vmem:[#allocation5 + $0xc8] sm:$0xff]
        %v1335 = vld [vmem:[#allocation5 + $0xd0] sm:$0xff]
        %v1336 = vld [vmem:[#allocation5 + $0xd8] sm:$0xff]
        %v1337 = vld [vmem:[#allocation5 + $0xe0] sm:$0xff]
        %v1338 = vld [vmem:[#allocation5 + $0xe8] sm:$0xff]
        %v1339 = vld [vmem:[#allocation5 + $0xf0] sm:$0xff]
        %v1340 = vld [vmem:[#allocation5 + $0xf8] sm:$0xff]
        %v1341 = vld [vmem:[#allocation5 + $0x100] sm:$0xff]
        %v1342 = vld [vmem:[#allocation5 + $0x108] sm:$0xff]
        %v1343 = vld [vmem:[#allocation5 + $0x110] sm:$0xff]
        %v1344 = vld [vmem:[#allocation5 + $0x118] sm:$0xff]
        %v1345 = vld [vmem:[#allocation5 + $0x120] sm:$0xff]
        %v1346 = vld [vmem:[#allocation5 + $0x128] sm:$0xff]
        %v1347 = vld [vmem:[#allocation5 + $0x130] sm:$0xff]
        %v1348 = vld [vmem:[#allocation5 + $0x138] sm:$0xff]
        %v1349 = vld [vmem:[#allocation5 + $0x140] sm:$0xff]
        %v1350 = vld [vmem:[#allocation5 + $0x148] sm:$0xff]
        %v1351 = vld [vmem:[#allocation5 + $0x150] sm:$0xff]
        %v1352 = vld [vmem:[#allocation5 + $0x158] sm:$0xff]
        %v1353 = vld [vmem:[#allocation5 + $0x160] sm:$0xff]
        %v1354 = vld [vmem:[#allocation5 + $0x168] sm:$0xff]
        %v1355 = vld [vmem:[#allocation5 + $0x170] sm:$0xff]
        %v1356 = vld [vmem:[#allocation5 + $0x178] sm:$0xff]
        %v1357 = vld [vmem:[#allocation5 + $0x180] sm:$0xff]
        %v1358 = vld [vmem:[#allocation5 + $0x188] sm:$0xff]
        %v1359 = vld [vmem:[#allocation5 + $0x190] sm:$0xff]
        %v1360 = vld [vmem:[#allocation5 + $0x198] sm:$0xff]
        %v1361 = vld [vmem:[#allocation5 + $0x1a0] sm:$0xff]
        %v1362 = vld [vmem:[#allocation5 + $0x1a8] sm:$0xff]
        %v1363 = vld [vmem:[#allocation5 + $0x1b0] sm:$0xff]
        %v1364 = vld [vmem:[#allocation5 + $0x1b8] sm:$0xff]
        %v1365 = vld [vmem:[#allocation5 + $0x1c0] sm:$0xff]
        %v1366 = vld [vmem:[#allocation5 + $0x1c8] sm:$0xff]
        %v1367 = vld [vmem:[#allocation5 + $0x1d0] sm:$0xff]
        %v1368 = vld [vmem:[#allocation5 + $0x1d8] sm:$0xff]
        %v1369 = vld [vmem:[#allocation5 + $0x1e0] sm:$0xff]
        %v1370 = vld [vmem:[#allocation5 + $0x1e8] sm:$0xff]
        %v1371 = vld [vmem:[#allocation5 + $0x1f0] sm:$0xff]
        %v1372 = vld [vmem:[#allocation5 + $0x1f8] sm:$0xff]
        %v1437 = vunpack.c.l.b16 %v1309
        %v1438 = vunpack.c.h.b16 %v1309
        %v1439 = vunpack.c.l.b16 %v1310
        %v1440 = vunpack.c.h.b16 %v1310
        %v1441 = vunpack.c.l.b16 %v1311
        %v1442 = vunpack.c.h.b16 %v1311
        %v1443 = vunpack.c.l.b16 %v1312
        %v1444 = vunpack.c.h.b16 %v1312
        %v1445 = vunpack.c.l.b16 %v1313
        %v1446 = vunpack.c.h.b16 %v1313
        %v1447 = vunpack.c.l.b16 %v1314
        %v1448 = vunpack.c.h.b16 %v1314
        %v1449 = vunpack.c.l.b16 %v1315
        %v1450 = vunpack.c.h.b16 %v1315
        %v1451 = vunpack.c.l.b16 %v1316
        %v1452 = vunpack.c.h.b16 %v1316
        %v1453 = vunpack.c.l.b16 %v1317
        %v1454 = vunpack.c.h.b16 %v1317
        %v1455 = vunpack.c.l.b16 %v1318
        %v1456 = vunpack.c.h.b16 %v1318
        %v1457 = vunpack.c.l.b16 %v1319
        %v1458 = vunpack.c.h.b16 %v1319
        %v1459 = vunpack.c.l.b16 %v1320
        %v1460 = vunpack.c.h.b16 %v1320
        %v1461 = vunpack.c.l.b16 %v1321
        %v1462 = vunpack.c.h.b16 %v1321
        %v1463 = vunpack.c.l.b16 %v1322
        %v1464 = vunpack.c.h.b16 %v1322
        %v1465 = vunpack.c.l.b16 %v1323
        %v1466 = vunpack.c.h.b16 %v1323
        %v1467 = vunpack.c.l.b16 %v1324
        %v1468 = vunpack.c.h.b16 %v1324
        %v1469 = vunpack.c.l.b16 %v1325
        %v1470 = vunpack.c.h.b16 %v1325
        %v1471 = vunpack.c.l.b16 %v1326
        %v1472 = vunpack.c.h.b16 %v1326
        %v1473 = vunpack.c.l.b16 %v1327
        %v1474 = vunpack.c.h.b16 %v1327
        %v1475 = vunpack.c.l.b16 %v1328
        %v1476 = vunpack.c.h.b16 %v1328
        %v1477 = vunpack.c.l.b16 %v1329
        %v1478 = vunpack.c.h.b16 %v1329
        %v1479 = vunpack.c.l.b16 %v1330
        %v1480 = vunpack.c.h.b16 %v1330
        %v1481 = vunpack.c.l.b16 %v1331
        %v1482 = vunpack.c.h.b16 %v1331
        %v1483 = vunpack.c.l.b16 %v1332
        %v1484 = vunpack.c.h.b16 %v1332
        %v1485 = vunpack.c.l.b16 %v1333
        %v1486 = vunpack.c.h.b16 %v1333
        %v1487 = vunpack.c.l.b16 %v1334
        %v1488 = vunpack.c.h.b16 %v1334
        %v1489 = vunpack.c.l.b16 %v1335
        %v1490 = vunpack.c.h.b16 %v1335
        %v1491 = vunpack.c.l.b16 %v1336
        %v1492 = vunpack.c.h.b16 %v1336
        %v1493 = vunpack.c.l.b16 %v1337
        %v1494 = vunpack.c.h.b16 %v1337
        %v1495 = vunpack.c.l.b16 %v1338
        %v1496 = vunpack.c.h.b16 %v1338
        %v1497 = vunpack.c.l.b16 %v1339
        %v1498 = vunpack.c.h.b16 %v1339
        %v1499 = vunpack.c.l.b16 %v1340
        %v1500 = vunpack.c.h.b16 %v1340
        %v1501 = vunpack.c.l.b16 %v1341
        %v1502 = vunpack.c.h.b16 %v1341
        %v1503 = vunpack.c.l.b16 %v1342
        %v1504 = vunpack.c.h.b16 %v1342
        %v1505 = vunpack.c.l.b16 %v1343
        %v1506 = vunpack.c.h.b16 %v1343
        %v1507 = vunpack.c.l.b16 %v1344
        %v1508 = vunpack.c.h.b16 %v1344
        %v1509 = vunpack.c.l.b16 %v1345
        %v1510 = vunpack.c.h.b16 %v1345
        %v1511 = vunpack.c.l.b16 %v1346
        %v1512 = vunpack.c.h.b16 %v1346
        %v1513 = vunpack.c.l.b16 %v1347
        %v1514 = vunpack.c.h.b16 %v1347
        %v1515 = vunpack.c.l.b16 %v1348
        %v1516 = vunpack.c.h.b16 %v1348
        %v1517 = vunpack.c.l.b16 %v1349
        %v1518 = vunpack.c.h.b16 %v1349
        %v1519 = vunpack.c.l.b16 %v1350
        %v1520 = vunpack.c.h.b16 %v1350
        %v1521 = vunpack.c.l.b16 %v1351
        %v1522 = vunpack.c.h.b16 %v1351
        %v1523 = vunpack.c.l.b16 %v1352
        %v1524 = vunpack.c.h.b16 %v1352
        %v1525 = vunpack.c.l.b16 %v1353
        %v1526 = vunpack.c.h.b16 %v1353
        %v1527 = vunpack.c.l.b16 %v1354
        %v1528 = vunpack.c.h.b16 %v1354
        %v1529 = vunpack.c.l.b16 %v1355
        %v1530 = vunpack.c.h.b16 %v1355
        %v1531 = vunpack.c.l.b16 %v1356
        %v1532 = vunpack.c.h.b16 %v1356
        %v1533 = vunpack.c.l.b16 %v1357
        %v1534 = vunpack.c.h.b16 %v1357
        %v1535 = vunpack.c.l.b16 %v1358
        %v1536 = vunpack.c.h.b16 %v1358
        %v1537 = vunpack.c.l.b16 %v1359
        %v1538 = vunpack.c.h.b16 %v1359
        %v1539 = vunpack.c.l.b16 %v1360
        %v1540 = vunpack.c.h.b16 %v1360
        %v1541 = vunpack.c.l.b16 %v1361
        %v1542 = vunpack.c.h.b16 %v1361
        %v1543 = vunpack.c.l.b16 %v1362
        %v1544 = vunpack.c.h.b16 %v1362
        %v1545 = vunpack.c.l.b16 %v1363
        %v1546 = vunpack.c.h.b16 %v1363
        %v1547 = vunpack.c.l.b16 %v1364
        %v1548 = vunpack.c.h.b16 %v1364
        %v1549 = vunpack.c.l.b16 %v1365
        %v1550 = vunpack.c.h.b16 %v1365
        %v1551 = vunpack.c.l.b16 %v1366
        %v1552 = vunpack.c.h.b16 %v1366
        %v1553 = vunpack.c.l.b16 %v1367
        %v1554 = vunpack.c.h.b16 %v1367
        %v1555 = vunpack.c.l.b16 %v1368
        %v1556 = vunpack.c.h.b16 %v1368
        %v1557 = vunpack.c.l.b16 %v1369
        %v1558 = vunpack.c.h.b16 %v1369
        %v1559 = vunpack.c.l.b16 %v1370
        %v1560 = vunpack.c.h.b16 %v1370
        %v1561 = vunpack.c.l.b16 %v1371
        %v1562 = vunpack.c.h.b16 %v1371
        %v1563 = vunpack.c.l.b16 %v1372
        %v1564 = vunpack.c.h.b16 %v1372
        %v1565 = vpack.c.b16 %v1441, %v1437
        %v1566 = vpack.c.b16 %v1442, %v1438
        %v1567 = vpack.c.b16 %v1443, %v1439
        %v1568 = vpack.c.b16 %v1444, %v1440
        %v1569 = vpack.c.b16 %v1449, %v1445
        %v1570 = vpack.c.b16 %v1450, %v1446
        %v1571 = vpack.c.b16 %v1451, %v1447
        %v1572 = vpack.c.b16 %v1452, %v1448
        %v1573 = vpack.c.b16 %v1457, %v1453
        %v1574 = vpack.c.b16 %v1458, %v1454
        %v1575 = vpack.c.b16 %v1459, %v1455
        %v1576 = vpack.c.b16 %v1460, %v1456
        %v1577 = vpack.c.b16 %v1465, %v1461
        %v1578 = vpack.c.b16 %v1466, %v1462
        %v1579 = vpack.c.b16 %v1467, %v1463
        %v1580 = vpack.c.b16 %v1468, %v1464
        %v1581 = vpack.c.b16 %v1473, %v1469
        %v1582 = vpack.c.b16 %v1474, %v1470
        %v1583 = vpack.c.b16 %v1475, %v1471
        %v1584 = vpack.c.b16 %v1476, %v1472
        %v1585 = vpack.c.b16 %v1481, %v1477
        %v1586 = vpack.c.b16 %v1482, %v1478
        %v1587 = vpack.c.b16 %v1483, %v1479
        %v1588 = vpack.c.b16 %v1484, %v1480
        %v1589 = vpack.c.b16 %v1489, %v1485
        %v1590 = vpack.c.b16 %v1490, %v1486
        %v1591 = vpack.c.b16 %v1491, %v1487
        %v1592 = vpack.c.b16 %v1492, %v1488
        %v1593 = vpack.c.b16 %v1497, %v1493
        %v1594 = vpack.c.b16 %v1498, %v1494
        %v1595 = vpack.c.b16 %v1499, %v1495
        %v1596 = vpack.c.b16 %v1500, %v1496
        %v1597 = vpack.c.b16 %v1505, %v1501
        %v1598 = vpack.c.b16 %v1506, %v1502
        %v1599 = vpack.c.b16 %v1507, %v1503
        %v1600 = vpack.c.b16 %v1508, %v1504
        %v1601 = vpack.c.b16 %v1513, %v1509
        %v1602 = vpack.c.b16 %v1514, %v1510
        %v1603 = vpack.c.b16 %v1515, %v1511
        %v1604 = vpack.c.b16 %v1516, %v1512
        %v1605 = vpack.c.b16 %v1521, %v1517
        %v1606 = vpack.c.b16 %v1522, %v1518
        %v1607 = vpack.c.b16 %v1523, %v1519
        %v1608 = vpack.c.b16 %v1524, %v1520
        %v1609 = vpack.c.b16 %v1529, %v1525
        %v1610 = vpack.c.b16 %v1530, %v1526
        %v1611 = vpack.c.b16 %v1531, %v1527
        %v1612 = vpack.c.b16 %v1532, %v1528
        %v1613 = vpack.c.b16 %v1537, %v1533
        %v1614 = vpack.c.b16 %v1538, %v1534
        %v1615 = vpack.c.b16 %v1539, %v1535
        %v1616 = vpack.c.b16 %v1540, %v1536
        %v1617 = vpack.c.b16 %v1545, %v1541
        %v1618 = vpack.c.b16 %v1546, %v1542
        %v1619 = vpack.c.b16 %v1547, %v1543
        %v1620 = vpack.c.b16 %v1548, %v1544
        %v1621 = vpack.c.b16 %v1553, %v1549
        %v1622 = vpack.c.b16 %v1554, %v1550
        %v1623 = vpack.c.b16 %v1555, %v1551
        %v1624 = vpack.c.b16 %v1556, %v1552
        %v1625 = vpack.c.b16 %v1561, %v1557
        %v1626 = vpack.c.b16 %v1562, %v1558
        %v1627 = vpack.c.b16 %v1563, %v1559
        %v1628 = vpack.c.b16 %v1564, %v1560
        %1693 = vmatprep.subr.bf16.mxu0 %v1566
        %1694 = vmatpush1.bf16.msra.mxu0 %v1565
        %1695 = vmatprep.subr.bf16.mxu0 %v1570
        %1696 = vmatpush1.bf16.msra.mxu0 %v1569
        %1697 = vmatprep.subr.bf16.mxu0 %v1574
        %1698 = vmatpush1.bf16.msra.mxu0 %v1573
        %1699 = vmatprep.subr.bf16.mxu0 %v1578
        %1700 = vmatpush1.bf16.msra.mxu0 %v1577
        %1701 = vmatprep.subr.bf16.mxu0 %v1582
        %1702 = vmatpush1.bf16.msra.mxu0 %v1581
        %1703 = vmatprep.subr.bf16.mxu0 %v1586
        %1704 = vmatpush1.bf16.msra.mxu0 %v1585
        %1705 = vmatprep.subr.bf16.mxu0 %v1590
        %1706 = vmatpush1.bf16.msra.mxu0 %v1589
        %1707 = vmatprep.subr.bf16.mxu0 %v1594
        %1708 = vmatpush1.bf16.msra.mxu0 %v1593
        %1709 = vmatprep.subr.bf16.mxu0 %v1598
        %1710 = vmatpush1.bf16.msra.mxu0 %v1597
        %1711 = vmatprep.subr.bf16.mxu0 %v1602
        %1712 = vmatpush1.bf16.msra.mxu0 %v1601
        %1713 = vmatprep.subr.bf16.mxu0 %v1606
        %1714 = vmatpush1.bf16.msra.mxu0 %v1605
        %1715 = vmatprep.subr.bf16.mxu0 %v1610
        %1716 = vmatpush1.bf16.msra.mxu0 %v1609
        %1717 = vmatprep.subr.bf16.mxu0 %v1614
        %1718 = vmatpush1.bf16.msra.mxu0 %v1613
        %1719 = vmatprep.subr.bf16.mxu0 %v1618
        %1720 = vmatpush1.bf16.msra.mxu0 %v1617
        %1721 = vmatprep.subr.bf16.mxu0 %v1622
        %1722 = vmatpush1.bf16.msra.mxu0 %v1621
        %1723 = vmatprep.subr.bf16.mxu0 %v1626
        %1724 = vmatpush1.bf16.msra.mxu0 %v1625
        %1725 = vmatprep.mubr.bf16.mxu0 %v1308
        %1726 = vmatmul.mubr.bf16.gmra.mrb[0].mxu0 %v1307
        %v1727 = vpop.f32.mrb[0].mxu0
        %v1728 = vadd.f32 0.0, %v1727
        %v1729 = vpop.f32.mrb[0].mxu0
        %v1730 = vadd.f32 0.0, %v1729
        %v1731 = vpop.f32.mrb[0].mxu0
        %v1732 = vadd.f32 0.0, %v1731
        %v1733 = vpop.f32.mrb[0].mxu0
        %v1734 = vadd.f32 0.0, %v1733
        %1735 = vdwg.mxu0
        %1736 = vmatprep.subr.bf16.mxu0 %v1568
        %1737 = vmatpush1.bf16.msra.mxu0 %v1567
        %1738 = vmatprep.subr.bf16.mxu0 %v1572
        %1739 = vmatpush1.bf16.msra.mxu0 %v1571
        %1740 = vmatprep.subr.bf16.mxu0 %v1576
        %1741 = vmatpush1.bf16.msra.mxu0 %v1575
        %1742 = vmatprep.subr.bf16.mxu0 %v1580
        %1743 = vmatpush1.bf16.msra.mxu0 %v1579
        %1744 = vmatprep.subr.bf16.mxu0 %v1584
        %1745 = vmatpush1.bf16.msra.mxu0 %v1583
        %1746 = vmatprep.subr.bf16.mxu0 %v1588
        %1747 = vmatpush1.bf16.msra.mxu0 %v1587
        %1748 = vmatprep.subr.bf16.mxu0 %v1592
        %1749 = vmatpush1.bf16.msra.mxu0 %v1591
        %1750 = vmatprep.subr.bf16.mxu0 %v1596
        %1751 = vmatpush1.bf16.msra.mxu0 %v1595
        %1752 = vmatprep.subr.bf16.mxu0 %v1600
        %1753 = vmatpush1.bf16.msra.mxu0 %v1599
        %1754 = vmatprep.subr.bf16.mxu0 %v1604
        %1755 = vmatpush1.bf16.msra.mxu0 %v1603
        %1756 = vmatprep.subr.bf16.mxu0 %v1608
        %1757 = vmatpush1.bf16.msra.mxu0 %v1607
        %1758 = vmatprep.subr.bf16.mxu0 %v1612
        %1759 = vmatpush1.bf16.msra.mxu0 %v1611
        %1760 = vmatprep.subr.bf16.mxu0 %v1616
        %1761 = vmatpush1.bf16.msra.mxu0 %v1615
        %1762 = vmatprep.subr.bf16.mxu0 %v1620
        %1763 = vmatpush1.bf16.msra.mxu0 %v1619
        %1764 = vmatprep.subr.bf16.mxu0 %v1624
        %1765 = vmatpush1.bf16.msra.mxu0 %v1623
        %1766 = vmatprep.subr.bf16.mxu0 %v1628
        %1767 = vmatpush1.bf16.msra.mxu0 %v1627
        %1768 = vmatprep.mubr.bf16.mxu0 %v1308
        %1769 = vmatmul.mubr.bf16.gmra.mrb[0].mxu0 %v1307
        %v1770 = vpop.f32.mrb[0].mxu0
        %v1771 = vadd.f32 0.0, %v1770
        %v1772 = vpop.f32.mrb[0].mxu0
        %v1773 = vadd.f32 0.0, %v1772
        %v1774 = vpop.f32.mrb[0].mxu0
        %v1775 = vadd.f32 0.0, %v1774
        %v1776 = vpop.f32.mrb[0].mxu0
        %v1777 = vadd.f32 0.0, %v1776
        %1778 = vdwg.mxu0
        %v1779 = vld [vmem:[%s8] sm:$0xff]
        %v1780 = vld [vmem:[%s8 + $0x8] sm:$0xff]
        %v1781 = vld [vmem:[%s8 + $0x10] sm:$0xff]
        %v1782 = vld [vmem:[%s8 + $0x18] sm:$0xff]
        %1784 = vset.pattern.permute.xlu0 0
        %1785 = vperm.xlu0 %1784, %v1779
        %v1786 = vpop.permute.xlu0 %1785
        %1789 = vset.pattern.permute.xlu0 0
        %1790 = vperm.xlu0 %1789, %v1780
        %v1791 = vpop.permute.xlu0 %1790
        %v1793 = vmul.f32 %v1728, %v1786
        %v1794 = vmul.f32 %v1730, %v1786
        %v1795 = vmul.f32 %v1771, %v1786
        %v1796 = vmul.f32 %v1773, %v1786
        %v1797 = vmul.f32 %v1732, %v1791
        %v1798 = vmul.f32 %v1734, %v1791
        %v1799 = vmul.f32 %v1775, %v1791
        %v1800 = vmul.f32 %v1777, %v1791
        %1802 = vset.pattern.permute.xlu0 0
        %1803 = vperm.xlu0 %1802, %v1781
        %v1804 = vpop.permute.xlu0 %1803
        %1807 = vset.pattern.permute.xlu0 0
        %1808 = vperm.xlu0 %1807, %v1782
        %v1809 = vpop.permute.xlu0 %1808
        %v1811 = vadd.f32 %v1793, %v1804
        %v1812 = vadd.f32 %v1794, %v1804
        %v1813 = vadd.f32 %v1795, %v1804
        %v1814 = vadd.f32 %v1796, %v1804
        %v1815 = vadd.f32 %v1797, %v1809
        %v1816 = vadd.f32 %v1798, %v1809
        %v1817 = vadd.f32 %v1799, %v1809
        %v1818 = vadd.f32 %v1800, %v1809
        %v1819 = vmax.f32 %v1811, 0.0
        %v1820 = vmax.f32 %v1812, 0.0
        %v1821 = vmax.f32 %v1813, 0.0
        %v1822 = vmax.f32 %v1814, 0.0
        %v1823 = vmax.f32 %v1815, 0.0
        %v1824 = vmax.f32 %v1816, 0.0
        %v1825 = vmax.f32 %v1817, 0.0
        %v1826 = vmax.f32 %v1818, 0.0
        %v1827 = vld [vmem:[%s10] sm:$0xf]
        %v1828 = vld [vmem:[%s10 + $0x4] sm:$0xf]
        %v1829 = vpack.c.bf16 %v1823, %v1819
        %v1830 = vpack.c.bf16 %v1824, %v1820
        %v1831 = vpack.c.bf16 %v1825, %v1821
        %v1832 = vpack.c.bf16 %v1826, %v1822
        %v1835 = vunpack.c.l.b16 %v1827
        %v1836 = vunpack.c.l.b16 %v1828
        %v1837 = vpack.c.b16 %v1836, %v1835
        %vm1838 = vcmask 130048
        %v1840 = vsel %vm1838, %v1837, 0
        %1842 = vmatprep.subr.bf16.mxu0 %v1830
        %1843 = vmatpush1.bf16.msra.mxu0 %v1829
        %1844 = vmatprep.subr.bf16.mxu0 0
        %1845 = vmatpush1.bf16.msra.mxu0 0
        %1846 = vmatprep.subr.bf16.mxu0 0
        %1847 = vmatpush1.bf16.msra.mxu0 0
        %1848 = vmatprep.subr.bf16.mxu0 0
        %1849 = vmatpush1.bf16.msra.mxu0 0
        %1850 = vmatprep.subr.bf16.mxu0 0
        %1851 = vmatpush1.bf16.msra.mxu0 0
        %1852 = vmatprep.subr.bf16.mxu0 0
        %1853 = vmatpush1.bf16.msra.mxu0 0
        %1854 = vmatprep.subr.bf16.mxu0 0
        %1855 = vmatpush1.bf16.msra.mxu0 0
        %1856 = vmatprep.subr.bf16.mxu0 0
        %1857 = vmatpush1.bf16.msra.mxu0 0
        %1858 = vmatprep.subr.bf16.mxu0 0
        %1859 = vmatpush1.bf16.msra.mxu0 0
        %1860 = vmatprep.subr.bf16.mxu0 0
        %1861 = vmatpush1.bf16.msra.mxu0 0
        %1862 = vmatprep.subr.bf16.mxu0 0
        %1863 = vmatpush1.bf16.msra.mxu0 0
        %1864 = vmatprep.subr.bf16.mxu0 0
        %1865 = vmatpush1.bf16.msra.mxu0 0
        %1866 = vmatprep.subr.bf16.mxu0 0
        %1867 = vmatpush1.bf16.msra.mxu0 0
        %1868 = vmatprep.subr.bf16.mxu0 0
        %1869 = vmatpush1.bf16.msra.mxu0 0
        %1870 = vmatprep.subr.bf16.mxu0 0
        %1871 = vmatpush1.bf16.msra.mxu0 0
        %1872 = vmatprep.subr.bf16.mxu0 0
        %1873 = vmatpush1.bf16.msra.mxu0 0
        %1874 = vmatprep.mubr.bf16.mxu0 0
        %1875 = vmatmul.mubr.bf16.gmra.mrb[0].mxu0 %v1840
        %v1876 = vpop.f32.mrb[0].mxu0
        %v1877 = vadd.f32 0.0, %v1876
        %v1878 = vpop.f32.mrb[0].mxu0
        %v1879 = vadd.f32 0.0, %v1878
        %v1880 = vpop.f32.mrb[0].mxu0
        %v1881 = vadd.f32 0.0, %v1880
        %v1882 = vpop.f32.mrb[0].mxu0
        %v1883 = vadd.f32 0.0, %v1882
        %1884 = vdwg.mxu0
        %1885 = vmatprep.subr.bf16.mxu0 %v1832
        %1886 = vmatpush1.bf16.msra.mxu0 %v1831
        %1887 = vmatprep.subr.bf16.mxu0 0
        %1888 = vmatpush1.bf16.msra.mxu0 0
        %1889 = vmatprep.subr.bf16.mxu0 0
        %1890 = vmatpush1.bf16.msra.mxu0 0
        %1891 = vmatprep.subr.bf16.mxu0 0
        %1892 = vmatpush1.bf16.msra.mxu0 0
        %1893 = vmatprep.subr.bf16.mxu0 0
        %1894 = vmatpush1.bf16.msra.mxu0 0
        %1895 = vmatprep.subr.bf16.mxu0 0
        %1896 = vmatpush1.bf16.msra.mxu0 0
        %1897 = vmatprep.subr.bf16.mxu0 0
        %1898 = vmatpush1.bf16.msra.mxu0 0
        %1899 = vmatprep.subr.bf16.mxu0 0
        %1900 = vmatpush1.bf16.msra.mxu0 0
        %1901 = vmatprep.subr.bf16.mxu0 0
        %1902 = vmatpush1.bf16.msra.mxu0 0
        %1903 = vmatprep.subr.bf16.mxu0 0
        %1904 = vmatpush1.bf16.msra.mxu0 0
        %1905 = vmatprep.subr.bf16.mxu0 0
        %1906 = vmatpush1.bf16.msra.mxu0 0
        %1907 = vmatprep.subr.bf16.mxu0 0
        %1908 = vmatpush1.bf16.msra.mxu0 0
        %1909 = vmatprep.subr.bf16.mxu0 0
        %1910 = vmatpush1.bf16.msra.mxu0 0
        %1911 = vmatprep.subr.bf16.mxu0 0
        %1912 = vmatpush1.bf16.msra.mxu0 0
        %1913 = vmatprep.subr.bf16.mxu0 0
        %1914 = vmatpush1.bf16.msra.mxu0 0
        %1915 = vmatprep.subr.bf16.mxu0 0
        %1916 = vmatpush1.bf16.msra.mxu0 0
        %1917 = vmatprep.mubr.bf16.mxu0 0
        %1918 = vmatmul.mubr.bf16.gmra.mrb[0].mxu0 %v1840
        %v1919 = vpop.f32.mrb[0].mxu0
        %v1920 = vadd.f32 0.0, %v1919
        %v1921 = vpop.f32.mrb[0].mxu0
        %v1922 = vadd.f32 0.0, %v1921
        %v1923 = vpop.f32.mrb[0].mxu0
        %v1924 = vadd.f32 0.0, %v1923
        %v1925 = vpop.f32.mrb[0].mxu0
        %v1926 = vadd.f32 0.0, %v1925
        %1927 = vdwg.mxu0
        %v1930 = vunpack.c.l.b16 %v701
        %v1931 = vunpack.c.l.b16 %v702
        %v1932 = vpack.c.b16 %v1931, %v1930
        %v1934 = vsel %vm1260, %v1932, 0
        %1936 = vmatprep.subr.bf16.mxu0 %v704
        %1937 = vmatpush1.bf16.msra.mxu0 %v703
        %1938 = vmatprep.subr.bf16.mxu0 %v708
        %1939 = vmatpush1.bf16.msra.mxu0 %v707
        %1940 = vmatprep.subr.bf16.mxu0 0
        %1941 = vmatpush1.bf16.msra.mxu0 0
        %1942 = vmatprep.subr.bf16.mxu0 0
        %1943 = vmatpush1.bf16.msra.mxu0 0
        %1944 = vmatprep.subr.bf16.mxu0 0
        %1945 = vmatpush1.bf16.msra.mxu0 0
        %1946 = vmatprep.subr.bf16.mxu0 0
        %1947 = vmatpush1.bf16.msra.mxu0 0
        %1948 = vmatprep.subr.bf16.mxu0 0
        %1949 = vmatpush1.bf16.msra.mxu0 0
        %1950 = vmatprep.subr.bf16.mxu0 0
        %1951 = vmatpush1.bf16.msra.mxu0 0
        %1952 = vmatprep.subr.bf16.mxu0 0
        %1953 = vmatpush1.bf16.msra.mxu0 0
        %1954 = vmatprep.subr.bf16.mxu0 0
        %1955 = vmatpush1.bf16.msra.mxu0 0
        %1956 = vmatprep.subr.bf16.mxu0 0
        %1957 = vmatpush1.bf16.msra.mxu0 0
        %1958 = vmatprep.subr.bf16.mxu0 0
        %1959 = vmatpush1.bf16.msra.mxu0 0
        %1960 = vmatprep.subr.bf16.mxu0 0
        %1961 = vmatpush1.bf16.msra.mxu0 0
        %1962 = vmatprep.subr.bf16.mxu0 0
        %1963 = vmatpush1.bf16.msra.mxu0 0
        %1964 = vmatprep.subr.bf16.mxu0 0
        %1965 = vmatpush1.bf16.msra.mxu0 0
        %1966 = vmatprep.subr.bf16.mxu0 0
        %1967 = vmatpush1.bf16.msra.mxu0 0
        %1968 = vmatprep.mubr.bf16.mxu0 0
        %1969 = vmatmul.mubr.bf16.gmra.mrb[0].mxu0 %v1934
        %v1970 = vpop.f32.mrb[0].mxu0
        %v1971 = vadd.f32 %v1877, %v1970
        %v1972 = vpop.f32.mrb[0].mxu0
        %v1973 = vadd.f32 %v1879, %v1972
        %v1974 = vpop.f32.mrb[0].mxu0
        %v1975 = vadd.f32 %v1881, %v1974
        %v1976 = vpop.f32.mrb[0].mxu0
        %v1977 = vadd.f32 %v1883, %v1976
        %1978 = vdwg.mxu0
        %1979 = vmatprep.subr.bf16.mxu0 %v706
        %1980 = vmatpush1.bf16.msra.mxu0 %v705
        %1981 = vmatprep.subr.bf16.mxu0 %v710
        %1982 = vmatpush1.bf16.msra.mxu0 %v709
        %1983 = vmatprep.subr.bf16.mxu0 0
        %1984 = vmatpush1.bf16.msra.mxu0 0
        %1985 = vmatprep.subr.bf16.mxu0 0
        %1986 = vmatpush1.bf16.msra.mxu0 0
        %1987 = vmatprep.subr.bf16.mxu0 0
        %1988 = vmatpush1.bf16.msra.mxu0 0
        %1989 = vmatprep.subr.bf16.mxu0 0
        %1990 = vmatpush1.bf16.msra.mxu0 0
        %1991 = vmatprep.subr.bf16.mxu0 0
        %1992 = vmatpush1.bf16.msra.mxu0 0
        %1993 = vmatprep.subr.bf16.mxu0 0
        %1994 = vmatpush1.bf16.msra.mxu0 0
        %1995 = vmatprep.subr.bf16.mxu0 0
        %1996 = vmatpush1.bf16.msra.mxu0 0
        %1997 = vmatprep.subr.bf16.mxu0 0
        %1998 = vmatpush1.bf16.msra.mxu0 0
        %1999 = vmatprep.subr.bf16.mxu0 0
        %2000 = vmatpush1.bf16.msra.mxu0 0
        %2001 = vmatprep.subr.bf16.mxu0 0
        %2002 = vmatpush1.bf16.msra.mxu0 0
        %2003 = vmatprep.subr.bf16.mxu0 0
        %2004 = vmatpush1.bf16.msra.mxu0 0
        %2005 = vmatprep.subr.bf16.mxu0 0
        %2006 = vmatpush1.bf16.msra.mxu0 0
        %2007 = vmatprep.subr.bf16.mxu0 0
        %2008 = vmatpush1.bf16.msra.mxu0 0
        %2009 = vmatprep.subr.bf16.mxu0 0
        %2010 = vmatpush1.bf16.msra.mxu0 0
        %2011 = vmatprep.mubr.bf16.mxu0 0
        %2012 = vmatmul.mubr.bf16.gmra.mrb[0].mxu0 %v1934
        %v2013 = vpop.f32.mrb[0].mxu0
        %v2014 = vadd.f32 %v1920, %v2013
        %v2015 = vpop.f32.mrb[0].mxu0
        %v2016 = vadd.f32 %v1922, %v2015
        %v2017 = vpop.f32.mrb[0].mxu0
        %v2018 = vadd.f32 %v1924, %v2017
        %v2019 = vpop.f32.mrb[0].mxu0
        %v2020 = vadd.f32 %v1926, %v2019
        %2021 = vdwg.mxu0
        %s2022 = scalar_lea.vmem %s5, 8
        %v2023 = vld [vmem:[%s2022] sm:$0xf]
        %v2024 = vld [vmem:[%s2022 + $0x4] sm:$0xf]
        %v2027 = vunpack.c.l.b16 %v2023
        %v2028 = vunpack.c.l.b16 %v2024
        %v2029 = vpack.c.b16 %v2028, %v2027
        %v2031 = vsel %vm1260, %v2029, 0
        %2033 = vmatprep.subr.bf16.mxu0 %v1250
        %2034 = vmatpush1.bf16.msra.mxu0 %v1249
        %2035 = vmatprep.subr.bf16.mxu0 %v1252
        %2036 = vmatpush1.bf16.msra.mxu0 %v1251
        %2037 = vmatprep.subr.bf16.mxu0 0
        %2038 = vmatpush1.bf16.msra.mxu0 0
        %2039 = vmatprep.subr.bf16.mxu0 0
        %2040 = vmatpush1.bf16.msra.mxu0 0
        %2041 = vmatprep.subr.bf16.mxu0 0
        %2042 = vmatpush1.bf16.msra.mxu0 0
        %2043 = vmatprep.subr.bf16.mxu0 0
        %2044 = vmatpush1.bf16.msra.mxu0 0
        %2045 = vmatprep.subr.bf16.mxu0 0
        %2046 = vmatpush1.bf16.msra.mxu0 0
        %2047 = vmatprep.subr.bf16.mxu0 0
        %2048 = vmatpush1.bf16.msra.mxu0 0
        %2049 = vmatprep.subr.bf16.mxu0 0
        %2050 = vmatpush1.bf16.msra.mxu0 0
        %2051 = vmatprep.subr.bf16.mxu0 0
        %2052 = vmatpush1.bf16.msra.mxu0 0
        %2053 = vmatprep.subr.bf16.mxu0 0
        %2054 = vmatpush1.bf16.msra.mxu0 0
        %2055 = vmatprep.subr.bf16.mxu0 0
        %2056 = vmatpush1.bf16.msra.mxu0 0
        %2057 = vmatprep.subr.bf16.mxu0 0
        %2058 = vmatpush1.bf16.msra.mxu0 0
        %2059 = vmatprep.subr.bf16.mxu0 0
        %2060 = vmatpush1.bf16.msra.mxu0 0
        %2061 = vmatprep.subr.bf16.mxu0 0
        %2062 = vmatpush1.bf16.msra.mxu0 0
        %2063 = vmatprep.subr.bf16.mxu0 0
        %2064 = vmatpush1.bf16.msra.mxu0 0
        %2065 = vmatprep.mubr.bf16.mxu0 0
        %2066 = vmatmul.mubr.bf16.gmra.mrb[0].mxu0 %v2031
        %v2067 = vpop.f32.mrb[0].mxu0
        %v2068 = vadd.f32 0.0, %v2067
        %v2069 = vpop.f32.mrb[0].mxu0
        %v2070 = vadd.f32 0.0, %v2069
        %v2071 = vpop.f32.mrb[0].mxu0
        %v2072 = vadd.f32 0.0, %v2071
        %v2073 = vpop.f32.mrb[0].mxu0
        %v2074 = vadd.f32 0.0, %v2073
        %2075 = vdwg.mxu0
        %v2076 = vpack.c.bf16 %v2072, %v2068
        %v2077 = vpack.c.bf16 %v2074, %v2070
        %s2078 = scalar_lea.vmem [#allocation5], 512
        %v2079 = vld [vmem:[%s2078] sm:$0xff]
        %v2080 = vld [vmem:[%s2078 + $0x8] sm:$0xff]
        %v2081 = vld [vmem:[%s2078 + $0x10] sm:$0xff]
        %v2082 = vld [vmem:[%s2078 + $0x18] sm:$0xff]
        %v2083 = vld [vmem:[%s2078 + $0x20] sm:$0xff]
        %v2084 = vld [vmem:[%s2078 + $0x28] sm:$0xff]
        %v2085 = vld [vmem:[%s2078 + $0x30] sm:$0xff]
        %v2086 = vld [vmem:[%s2078 + $0x38] sm:$0xff]
        %v2087 = vld [vmem:[%s2078 + $0x40] sm:$0xff]
        %v2088 = vld [vmem:[%s2078 + $0x48] sm:$0xff]
        %v2089 = vld [vmem:[%s2078 + $0x50] sm:$0xff]
        %v2090 = vld [vmem:[%s2078 + $0x58] sm:$0xff]
        %v2091 = vld [vmem:[%s2078 + $0x60] sm:$0xff]
        %v2092 = vld [vmem:[%s2078 + $0x68] sm:$0xff]
        %v2093 = vld [vmem:[%s2078 + $0x70] sm:$0xff]
        %v2094 = vld [vmem:[%s2078 + $0x78] sm:$0xff]
        %v2095 = vld [vmem:[%s2078 + $0x80] sm:$0xff]
        %v2096 = vld [vmem:[%s2078 + $0x88] sm:$0xff]
        %v2097 = vld [vmem:[%s2078 + $0x90] sm:$0xff]
        %v2098 = vld [vmem:[%s2078 + $0x98] sm:$0xff]
        %v2099 = vld [vmem:[%s2078 + $0xa0] sm:$0xff]
        %v2100 = vld [vmem:[%s2078 + $0xa8] sm:$0xff]
        %v2101 = vld [vmem:[%s2078 + $0xb0] sm:$0xff]
        %v2102 = vld [vmem:[%s2078 + $0xb8] sm:$0xff]
        %v2103 = vld [vmem:[%s2078 + $0xc0] sm:$0xff]
        %v2104 = vld [vmem:[%s2078 + $0xc8] sm:$0xff]
        %v2105 = vld [vmem:[%s2078 + $0xd0] sm:$0xff]
        %v2106 = vld [vmem:[%s2078 + $0xd8] sm:$0xff]
        %v2107 = vld [vmem:[%s2078 + $0xe0] sm:$0xff]
        %v2108 = vld [vmem:[%s2078 + $0xe8] sm:$0xff]
        %v2109 = vld [vmem:[%s2078 + $0xf0] sm:$0xff]
        %v2110 = vld [vmem:[%s2078 + $0xf8] sm:$0xff]
        %v2111 = vld [vmem:[%s2078 + $0x100] sm:$0xff]
        %v2112 = vld [vmem:[%s2078 + $0x108] sm:$0xff]
        %v2113 = vld [vmem:[%s2078 + $0x110] sm:$0xff]
        %v2114 = vld [vmem:[%s2078 + $0x118] sm:$0xff]
        %v2115 = vld [vmem:[%s2078 + $0x120] sm:$0xff]
        %v2116 = vld [vmem:[%s2078 + $0x128] sm:$0xff]
        %v2117 = vld [vmem:[%s2078 + $0x130] sm:$0xff]
        %v2118 = vld [vmem:[%s2078 + $0x138] sm:$0xff]
        %v2119 = vld [vmem:[%s2078 + $0x140] sm:$0xff]
        %v2120 = vld [vmem:[%s2078 + $0x148] sm:$0xff]
        %v2121 = vld [vmem:[%s2078 + $0x150] sm:$0xff]
        %v2122 = vld [vmem:[%s2078 + $0x158] sm:$0xff]
        %v2123 = vld [vmem:[%s2078 + $0x160] sm:$0xff]
        %v2124 = vld [vmem:[%s2078 + $0x168] sm:$0xff]
        %v2125 = vld [vmem:[%s2078 + $0x170] sm:$0xff]
        %v2126 = vld [vmem:[%s2078 + $0x178] sm:$0xff]
        %v2127 = vld [vmem:[%s2078 + $0x180] sm:$0xff]
        %v2128 = vld [vmem:[%s2078 + $0x188] sm:$0xff]
        %v2129 = vld [vmem:[%s2078 + $0x190] sm:$0xff]
        %v2130 = vld [vmem:[%s2078 + $0x198] sm:$0xff]
        %v2131 = vld [vmem:[%s2078 + $0x1a0] sm:$0xff]
        %v2132 = vld [vmem:[%s2078 + $0x1a8] sm:$0xff]
        %v2133 = vld [vmem:[%s2078 + $0x1b0] sm:$0xff]
        %v2134 = vld [vmem:[%s2078 + $0x1b8] sm:$0xff]
        %v2135 = vld [vmem:[%s2078 + $0x1c0] sm:$0xff]
        %v2136 = vld [vmem:[%s2078 + $0x1c8] sm:$0xff]
        %v2137 = vld [vmem:[%s2078 + $0x1d0] sm:$0xff]
        %v2138 = vld [vmem:[%s2078 + $0x1d8] sm:$0xff]
        %v2139 = vld [vmem:[%s2078 + $0x1e0] sm:$0xff]
        %v2140 = vld [vmem:[%s2078 + $0x1e8] sm:$0xff]
        %v2141 = vld [vmem:[%s2078 + $0x1f0] sm:$0xff]
        %v2142 = vld [vmem:[%s2078 + $0x1f8] sm:$0xff]
        %v2207 = vunpack.c.l.b16 %v2079
        %v2208 = vunpack.c.h.b16 %v2079
        %v2209 = vunpack.c.l.b16 %v2080
        %v2210 = vunpack.c.h.b16 %v2080
        %v2211 = vunpack.c.l.b16 %v2081
        %v2212 = vunpack.c.h.b16 %v2081
        %v2213 = vunpack.c.l.b16 %v2082
        %v2214 = vunpack.c.h.b16 %v2082
        %v2215 = vunpack.c.l.b16 %v2083
        %v2216 = vunpack.c.h.b16 %v2083
        %v2217 = vunpack.c.l.b16 %v2084
        %v2218 = vunpack.c.h.b16 %v2084
        %v2219 = vunpack.c.l.b16 %v2085
        %v2220 = vunpack.c.h.b16 %v2085
        %v2221 = vunpack.c.l.b16 %v2086
        %v2222 = vunpack.c.h.b16 %v2086
        %v2223 = vunpack.c.l.b16 %v2087
        %v2224 = vunpack.c.h.b16 %v2087
        %v2225 = vunpack.c.l.b16 %v2088
        %v2226 = vunpack.c.h.b16 %v2088
        %v2227 = vunpack.c.l.b16 %v2089
        %v2228 = vunpack.c.h.b16 %v2089
        %v2229 = vunpack.c.l.b16 %v2090
        %v2230 = vunpack.c.h.b16 %v2090
        %v2231 = vunpack.c.l.b16 %v2091
        %v2232 = vunpack.c.h.b16 %v2091
        %v2233 = vunpack.c.l.b16 %v2092
        %v2234 = vunpack.c.h.b16 %v2092
        %v2235 = vunpack.c.l.b16 %v2093
        %v2236 = vunpack.c.h.b16 %v2093
        %v2237 = vunpack.c.l.b16 %v2094
        %v2238 = vunpack.c.h.b16 %v2094
        %v2239 = vunpack.c.l.b16 %v2095
        %v2240 = vunpack.c.h.b16 %v2095
        %v2241 = vunpack.c.l.b16 %v2096
        %v2242 = vunpack.c.h.b16 %v2096
        %v2243 = vunpack.c.l.b16 %v2097
        %v2244 = vunpack.c.h.b16 %v2097
        %v2245 = vunpack.c.l.b16 %v2098
        %v2246 = vunpack.c.h.b16 %v2098
        %v2247 = vunpack.c.l.b16 %v2099
        %v2248 = vunpack.c.h.b16 %v2099
        %v2249 = vunpack.c.l.b16 %v2100
        %v2250 = vunpack.c.h.b16 %v2100
        %v2251 = vunpack.c.l.b16 %v2101
        %v2252 = vunpack.c.h.b16 %v2101
        %v2253 = vunpack.c.l.b16 %v2102
        %v2254 = vunpack.c.h.b16 %v2102
        %v2255 = vunpack.c.l.b16 %v2103
        %v2256 = vunpack.c.h.b16 %v2103
        %v2257 = vunpack.c.l.b16 %v2104
        %v2258 = vunpack.c.h.b16 %v2104
        %v2259 = vunpack.c.l.b16 %v2105
        %v2260 = vunpack.c.h.b16 %v2105
        %v2261 = vunpack.c.l.b16 %v2106
        %v2262 = vunpack.c.h.b16 %v2106
        %v2263 = vunpack.c.l.b16 %v2107
        %v2264 = vunpack.c.h.b16 %v2107
        %v2265 = vunpack.c.l.b16 %v2108
        %v2266 = vunpack.c.h.b16 %v2108
        %v2267 = vunpack.c.l.b16 %v2109
        %v2268 = vunpack.c.h.b16 %v2109
        %v2269 = vunpack.c.l.b16 %v2110
        %v2270 = vunpack.c.h.b16 %v2110
        %v2271 = vunpack.c.l.b16 %v2111
        %v2272 = vunpack.c.h.b16 %v2111
        %v2273 = vunpack.c.l.b16 %v2112
        %v2274 = vunpack.c.h.b16 %v2112
        %v2275 = vunpack.c.l.b16 %v2113
        %v2276 = vunpack.c.h.b16 %v2113
        %v2277 = vunpack.c.l.b16 %v2114
        %v2278 = vunpack.c.h.b16 %v2114
        %v2279 = vunpack.c.l.b16 %v2115
        %v2280 = vunpack.c.h.b16 %v2115
        %v2281 = vunpack.c.l.b16 %v2116
        %v2282 = vunpack.c.h.b16 %v2116
        %v2283 = vunpack.c.l.b16 %v2117
        %v2284 = vunpack.c.h.b16 %v2117
        %v2285 = vunpack.c.l.b16 %v2118
        %v2286 = vunpack.c.h.b16 %v2118
        %v2287 = vunpack.c.l.b16 %v2119
        %v2288 = vunpack.c.h.b16 %v2119
        %v2289 = vunpack.c.l.b16 %v2120
        %v2290 = vunpack.c.h.b16 %v2120
        %v2291 = vunpack.c.l.b16 %v2121
        %v2292 = vunpack.c.h.b16 %v2121
        %v2293 = vunpack.c.l.b16 %v2122
        %v2294 = vunpack.c.h.b16 %v2122
        %v2295 = vunpack.c.l.b16 %v2123
        %v2296 = vunpack.c.h.b16 %v2123
        %v2297 = vunpack.c.l.b16 %v2124
        %v2298 = vunpack.c.h.b16 %v2124
        %v2299 = vunpack.c.l.b16 %v2125
        %v2300 = vunpack.c.h.b16 %v2125
        %v2301 = vunpack.c.l.b16 %v2126
        %v2302 = vunpack.c.h.b16 %v2126
        %v2303 = vunpack.c.l.b16 %v2127
        %v2304 = vunpack.c.h.b16 %v2127
        %v2305 = vunpack.c.l.b16 %v2128
        %v2306 = vunpack.c.h.b16 %v2128
        %v2307 = vunpack.c.l.b16 %v2129
        %v2308 = vunpack.c.h.b16 %v2129
        %v2309 = vunpack.c.l.b16 %v2130
        %v2310 = vunpack.c.h.b16 %v2130
        %v2311 = vunpack.c.l.b16 %v2131
        %v2312 = vunpack.c.h.b16 %v2131
        %v2313 = vunpack.c.l.b16 %v2132
        %v2314 = vunpack.c.h.b16 %v2132
        %v2315 = vunpack.c.l.b16 %v2133
        %v2316 = vunpack.c.h.b16 %v2133
        %v2317 = vunpack.c.l.b16 %v2134
        %v2318 = vunpack.c.h.b16 %v2134
        %v2319 = vunpack.c.l.b16 %v2135
        %v2320 = vunpack.c.h.b16 %v2135
        %v2321 = vunpack.c.l.b16 %v2136
        %v2322 = vunpack.c.h.b16 %v2136
        %v2323 = vunpack.c.l.b16 %v2137
        %v2324 = vunpack.c.h.b16 %v2137
        %v2325 = vunpack.c.l.b16 %v2138
        %v2326 = vunpack.c.h.b16 %v2138
        %v2327 = vunpack.c.l.b16 %v2139
        %v2328 = vunpack.c.h.b16 %v2139
        %v2329 = vunpack.c.l.b16 %v2140
        %v2330 = vunpack.c.h.b16 %v2140
        %v2331 = vunpack.c.l.b16 %v2141
        %v2332 = vunpack.c.h.b16 %v2141
        %v2333 = vunpack.c.l.b16 %v2142
        %v2334 = vunpack.c.h.b16 %v2142
        %v2335 = vpack.c.b16 %v2211, %v2207
        %v2336 = vpack.c.b16 %v2212, %v2208
        %v2337 = vpack.c.b16 %v2213, %v2209
        %v2338 = vpack.c.b16 %v2214, %v2210
        %v2339 = vpack.c.b16 %v2219, %v2215
        %v2340 = vpack.c.b16 %v2220, %v2216
        %v2341 = vpack.c.b16 %v2221, %v2217
        %v2342 = vpack.c.b16 %v2222, %v2218
        %v2343 = vpack.c.b16 %v2227, %v2223
        %v2344 = vpack.c.b16 %v2228, %v2224
        %v2345 = vpack.c.b16 %v2229, %v2225
        %v2346 = vpack.c.b16 %v2230, %v2226
        %v2347 = vpack.c.b16 %v2235, %v2231
        %v2348 = vpack.c.b16 %v2236, %v2232
        %v2349 = vpack.c.b16 %v2237, %v2233
        %v2350 = vpack.c.b16 %v2238, %v2234
        %v2351 = vpack.c.b16 %v2243, %v2239
        %v2352 = vpack.c.b16 %v2244, %v2240
        %v2353 = vpack.c.b16 %v2245, %v2241
        %v2354 = vpack.c.b16 %v2246, %v2242
        %v2355 = vpack.c.b16 %v2251, %v2247
        %v2356 = vpack.c.b16 %v2252, %v2248
        %v2357 = vpack.c.b16 %v2253, %v2249
        %v2358 = vpack.c.b16 %v2254, %v2250
        %v2359 = vpack.c.b16 %v2259, %v2255
        %v2360 = vpack.c.b16 %v2260, %v2256
        %v2361 = vpack.c.b16 %v2261, %v2257
        %v2362 = vpack.c.b16 %v2262, %v2258
        %v2363 = vpack.c.b16 %v2267, %v2263
        %v2364 = vpack.c.b16 %v2268, %v2264
        %v2365 = vpack.c.b16 %v2269, %v2265
        %v2366 = vpack.c.b16 %v2270, %v2266
        %v2367 = vpack.c.b16 %v2275, %v2271
        %v2368 = vpack.c.b16 %v2276, %v2272
        %v2369 = vpack.c.b16 %v2277, %v2273
        %v2370 = vpack.c.b16 %v2278, %v2274
        %v2371 = vpack.c.b16 %v2283, %v2279
        %v2372 = vpack.c.b16 %v2284, %v2280
        %v2373 = vpack.c.b16 %v2285, %v2281
        %v2374 = vpack.c.b16 %v2286, %v2282
        %v2375 = vpack.c.b16 %v2291, %v2287
        %v2376 = vpack.c.b16 %v2292, %v2288
        %v2377 = vpack.c.b16 %v2293, %v2289
        %v2378 = vpack.c.b16 %v2294, %v2290
        %v2379 = vpack.c.b16 %v2299, %v2295
        %v2380 = vpack.c.b16 %v2300, %v2296
        %v2381 = vpack.c.b16 %v2301, %v2297
        %v2382 = vpack.c.b16 %v2302, %v2298
        %v2383 = vpack.c.b16 %v2307, %v2303
        %v2384 = vpack.c.b16 %v2308, %v2304
        %v2385 = vpack.c.b16 %v2309, %v2305
        %v2386 = vpack.c.b16 %v2310, %v2306
        %v2387 = vpack.c.b16 %v2315, %v2311
        %v2388 = vpack.c.b16 %v2316, %v2312
        %v2389 = vpack.c.b16 %v2317, %v2313
        %v2390 = vpack.c.b16 %v2318, %v2314
        %v2391 = vpack.c.b16 %v2323, %v2319
        %v2392 = vpack.c.b16 %v2324, %v2320
        %v2393 = vpack.c.b16 %v2325, %v2321
        %v2394 = vpack.c.b16 %v2326, %v2322
        %v2395 = vpack.c.b16 %v2331, %v2327
        %v2396 = vpack.c.b16 %v2332, %v2328
        %v2397 = vpack.c.b16 %v2333, %v2329
        %v2398 = vpack.c.b16 %v2334, %v2330
        %2463 = vmatprep.subr.bf16.mxu0 %v2336
        %2464 = vmatpush1.bf16.msra.mxu0 %v2335
        %2465 = vmatprep.subr.bf16.mxu0 %v2340
        %2466 = vmatpush1.bf16.msra.mxu0 %v2339
        %2467 = vmatprep.subr.bf16.mxu0 %v2344
        %2468 = vmatpush1.bf16.msra.mxu0 %v2343
        %2469 = vmatprep.subr.bf16.mxu0 %v2348
        %2470 = vmatpush1.bf16.msra.mxu0 %v2347
        %2471 = vmatprep.subr.bf16.mxu0 %v2352
        %2472 = vmatpush1.bf16.msra.mxu0 %v2351
        %2473 = vmatprep.subr.bf16.mxu0 %v2356
        %2474 = vmatpush1.bf16.msra.mxu0 %v2355
        %2475 = vmatprep.subr.bf16.mxu0 %v2360
        %2476 = vmatpush1.bf16.msra.mxu0 %v2359
        %2477 = vmatprep.subr.bf16.mxu0 %v2364
        %2478 = vmatpush1.bf16.msra.mxu0 %v2363
        %2479 = vmatprep.subr.bf16.mxu0 %v2368
        %2480 = vmatpush1.bf16.msra.mxu0 %v2367
        %2481 = vmatprep.subr.bf16.mxu0 %v2372
        %2482 = vmatpush1.bf16.msra.mxu0 %v2371
        %2483 = vmatprep.subr.bf16.mxu0 %v2376
        %2484 = vmatpush1.bf16.msra.mxu0 %v2375
        %2485 = vmatprep.subr.bf16.mxu0 %v2380
        %2486 = vmatpush1.bf16.msra.mxu0 %v2379
        %2487 = vmatprep.subr.bf16.mxu0 %v2384
        %2488 = vmatpush1.bf16.msra.mxu0 %v2383
        %2489 = vmatprep.subr.bf16.mxu0 %v2388
        %2490 = vmatpush1.bf16.msra.mxu0 %v2387
        %2491 = vmatprep.subr.bf16.mxu0 %v2392
        %2492 = vmatpush1.bf16.msra.mxu0 %v2391
        %2493 = vmatprep.subr.bf16.mxu0 %v2396
        %2494 = vmatpush1.bf16.msra.mxu0 %v2395
        %2495 = vmatprep.mubr.bf16.mxu0 %v2077
        %2496 = vmatmul.mubr.bf16.gmra.mrb[0].mxu0 %v2076
        %v2497 = vpop.f32.mrb[0].mxu0
        %v2498 = vadd.f32 0.0, %v2497
        %v2499 = vpop.f32.mrb[0].mxu0
        %v2500 = vadd.f32 0.0, %v2499
        %v2501 = vpop.f32.mrb[0].mxu0
        %v2502 = vadd.f32 0.0, %v2501
        %v2503 = vpop.f32.mrb[0].mxu0
        %v2504 = vadd.f32 0.0, %v2503
        %2505 = vdwg.mxu0
        %2506 = vmatprep.subr.bf16.mxu0 %v2338
        %2507 = vmatpush1.bf16.msra.mxu0 %v2337
        %2508 = vmatprep.subr.bf16.mxu0 %v2342
        %2509 = vmatpush1.bf16.msra.mxu0 %v2341
        %2510 = vmatprep.subr.bf16.mxu0 %v2346
        %2511 = vmatpush1.bf16.msra.mxu0 %v2345
        %2512 = vmatprep.subr.bf16.mxu0 %v2350
        %2513 = vmatpush1.bf16.msra.mxu0 %v2349
        %2514 = vmatprep.subr.bf16.mxu0 %v2354
        %2515 = vmatpush1.bf16.msra.mxu0 %v2353
        %2516 = vmatprep.subr.bf16.mxu0 %v2358
        %2517 = vmatpush1.bf16.msra.mxu0 %v2357
        %2518 = vmatprep.subr.bf16.mxu0 %v2362
        %2519 = vmatpush1.bf16.msra.mxu0 %v2361
        %2520 = vmatprep.subr.bf16.mxu0 %v2366
        %2521 = vmatpush1.bf16.msra.mxu0 %v2365
        %2522 = vmatprep.subr.bf16.mxu0 %v2370
        %2523 = vmatpush1.bf16.msra.mxu0 %v2369
        %2524 = vmatprep.subr.bf16.mxu0 %v2374
        %2525 = vmatpush1.bf16.msra.mxu0 %v2373
        %2526 = vmatprep.subr.bf16.mxu0 %v2378
        %2527 = vmatpush1.bf16.msra.mxu0 %v2377
        %2528 = vmatprep.subr.bf16.mxu0 %v2382
        %2529 = vmatpush1.bf16.msra.mxu0 %v2381
        %2530 = vmatprep.subr.bf16.mxu0 %v2386
        %2531 = vmatpush1.bf16.msra.mxu0 %v2385
        %2532 = vmatprep.subr.bf16.mxu0 %v2390
        %2533 = vmatpush1.bf16.msra.mxu0 %v2389
        %2534 = vmatprep.subr.bf16.mxu0 %v2394
        %2535 = vmatpush1.bf16.msra.mxu0 %v2393
        %2536 = vmatprep.subr.bf16.mxu0 %v2398
        %2537 = vmatpush1.bf16.msra.mxu0 %v2397
        %2538 = vmatprep.mubr.bf16.mxu0 %v2077
        %2539 = vmatmul.mubr.bf16.gmra.mrb[0].mxu0 %v2076
        %v2540 = vpop.f32.mrb[0].mxu0
        %v2541 = vadd.f32 0.0, %v2540
        %v2542 = vpop.f32.mrb[0].mxu0
        %v2543 = vadd.f32 0.0, %v2542
        %v2544 = vpop.f32.mrb[0].mxu0
        %v2545 = vadd.f32 0.0, %v2544
        %v2546 = vpop.f32.mrb[0].mxu0
        %v2547 = vadd.f32 0.0, %v2546
        %2548 = vdwg.mxu0
        %s2549 = scalar_lea.vmem %s8, 32
        %v2550 = vld [vmem:[%s2549] sm:$0xff]
        %v2551 = vld [vmem:[%s2549 + $0x8] sm:$0xff]
        %v2552 = vld [vmem:[%s2549 + $0x10] sm:$0xff]
        %v2553 = vld [vmem:[%s2549 + $0x18] sm:$0xff]
        %2555 = vset.pattern.permute.xlu0 0
        %2556 = vperm.xlu0 %2555, %v2550
        %v2557 = vpop.permute.xlu0 %2556
        %2560 = vset.pattern.permute.xlu0 0
        %2561 = vperm.xlu0 %2560, %v2551
        %v2562 = vpop.permute.xlu0 %2561
        %v2564 = vmul.f32 %v2498, %v2557
        %v2565 = vmul.f32 %v2500, %v2557
        %v2566 = vmul.f32 %v2541, %v2557
        %v2567 = vmul.f32 %v2543, %v2557
        %v2568 = vmul.f32 %v2502, %v2562
        %v2569 = vmul.f32 %v2504, %v2562
        %v2570 = vmul.f32 %v2545, %v2562
        %v2571 = vmul.f32 %v2547, %v2562
        %2573 = vset.pattern.permute.xlu0 0
        %2574 = vperm.xlu0 %2573, %v2552
        %v2575 = vpop.permute.xlu0 %2574
        %2578 = vset.pattern.permute.xlu0 0
        %2579 = vperm.xlu0 %2578, %v2553
        %v2580 = vpop.permute.xlu0 %2579
        %v2582 = vadd.f32 %v2564, %v2575
        %v2583 = vadd.f32 %v2565, %v2575
        %v2584 = vadd.f32 %v2566, %v2575
        %v2585 = vadd.f32 %v2567, %v2575
        %v2586 = vadd.f32 %v2568, %v2580
        %v2587 = vadd.f32 %v2569, %v2580
        %v2588 = vadd.f32 %v2570, %v2580
        %v2589 = vadd.f32 %v2571, %v2580
        %v2590 = vmax.f32 %v2582, 0.0
        %v2591 = vmax.f32 %v2583, 0.0
        %v2592 = vmax.f32 %v2584, 0.0
        %v2593 = vmax.f32 %v2585, 0.0
        %v2594 = vmax.f32 %v2586, 0.0
        %v2595 = vmax.f32 %v2587, 0.0
        %v2596 = vmax.f32 %v2588, 0.0
        %v2597 = vmax.f32 %v2589, 0.0
        %s2598 = scalar_lea.vmem %s10, 8
        %v2599 = vld [vmem:[%s2598] sm:$0xf]
        %v2600 = vld [vmem:[%s2598 + $0x4] sm:$0xf]
        %v2601 = vpack.c.bf16 %v2594, %v2590
        %v2602 = vpack.c.bf16 %v2595, %v2591
        %v2603 = vpack.c.bf16 %v2596, %v2592
        %v2604 = vpack.c.bf16 %v2597, %v2593
        %v2607 = vunpack.c.l.b16 %v2599
        %v2608 = vunpack.c.l.b16 %v2600
        %v2609 = vpack.c.b16 %v2608, %v2607
        %v2611 = vsel %vm1838, %v2609, 0
        %2613 = vmatprep.subr.bf16.mxu0 %v2602
        %2614 = vmatpush1.bf16.msra.mxu0 %v2601
        %2615 = vmatprep.subr.bf16.mxu0 0
        %2616 = vmatpush1.bf16.msra.mxu0 0
        %2617 = vmatprep.subr.bf16.mxu0 0
        %2618 = vmatpush1.bf16.msra.mxu0 0
        %2619 = vmatprep.subr.bf16.mxu0 0
        %2620 = vmatpush1.bf16.msra.mxu0 0
        %2621 = vmatprep.subr.bf16.mxu0 0
        %2622 = vmatpush1.bf16.msra.mxu0 0
        %2623 = vmatprep.subr.bf16.mxu0 0
        %2624 = vmatpush1.bf16.msra.mxu0 0
        %2625 = vmatprep.subr.bf16.mxu0 0
        %2626 = vmatpush1.bf16.msra.mxu0 0
        %2627 = vmatprep.subr.bf16.mxu0 0
        %2628 = vmatpush1.bf16.msra.mxu0 0
        %2629 = vmatprep.subr.bf16.mxu0 0
        %2630 = vmatpush1.bf16.msra.mxu0 0
        %2631 = vmatprep.subr.bf16.mxu0 0
        %2632 = vmatpush1.bf16.msra.mxu0 0
        %2633 = vmatprep.subr.bf16.mxu0 0
        %2634 = vmatpush1.bf16.msra.mxu0 0
        %2635 = vmatprep.subr.bf16.mxu0 0
        %2636 = vmatpush1.bf16.msra.mxu0 0
        %2637 = vmatprep.subr.bf16.mxu0 0
        %2638 = vmatpush1.bf16.msra.mxu0 0
        %2639 = vmatprep.subr.bf16.mxu0 0
        %2640 = vmatpush1.bf16.msra.mxu0 0
        %2641 = vmatprep.subr.bf16.mxu0 0
        %2642 = vmatpush1.bf16.msra.mxu0 0
        %2643 = vmatprep.subr.bf16.mxu0 0
        %2644 = vmatpush1.bf16.msra.mxu0 0
        %2645 = vmatprep.mubr.bf16.mxu0 0
        %2646 = vmatmul.mubr.bf16.gmra.mrb[0].mxu0 %v2611
        %v2647 = vpop.f32.mrb[0].mxu0
        %v2648 = vadd.f32 0.0, %v2647
        %v2649 = vpop.f32.mrb[0].mxu0
        %v2650 = vadd.f32 0.0, %v2649
        %v2651 = vpop.f32.mrb[0].mxu0
        %v2652 = vadd.f32 0.0, %v2651
        %v2653 = vpop.f32.mrb[0].mxu0
        %v2654 = vadd.f32 0.0, %v2653
        %2655 = vdwg.mxu0
        %2656 = vmatprep.subr.bf16.mxu0 %v2604
        %2657 = vmatpush1.bf16.msra.mxu0 %v2603
        %2658 = vmatprep.subr.bf16.mxu0 0
        %2659 = vmatpush1.bf16.msra.mxu0 0
        %2660 = vmatprep.subr.bf16.mxu0 0
        %2661 = vmatpush1.bf16.msra.mxu0 0
        %2662 = vmatprep.subr.bf16.mxu0 0
        %2663 = vmatpush1.bf16.msra.mxu0 0
        %2664 = vmatprep.subr.bf16.mxu0 0
        %2665 = vmatpush1.bf16.msra.mxu0 0
        %2666 = vmatprep.subr.bf16.mxu0 0
        %2667 = vmatpush1.bf16.msra.mxu0 0
        %2668 = vmatprep.subr.bf16.mxu0 0
        %2669 = vmatpush1.bf16.msra.mxu0 0
        %2670 = vmatprep.subr.bf16.mxu0 0
        %2671 = vmatpush1.bf16.msra.mxu0 0
        %2672 = vmatprep.subr.bf16.mxu0 0
        %2673 = vmatpush1.bf16.msra.mxu0 0
        %2674 = vmatprep.subr.bf16.mxu0 0
        %2675 = vmatpush1.bf16.msra.mxu0 0
        %2676 = vmatprep.subr.bf16.mxu0 0
        %2677 = vmatpush1.bf16.msra.mxu0 0
        %2678 = vmatprep.subr.bf16.mxu0 0
        %2679 = vmatpush1.bf16.msra.mxu0 0
        %2680 = vmatprep.subr.bf16.mxu0 0
        %2681 = vmatpush1.bf16.msra.mxu0 0
        %2682 = vmatprep.subr.bf16.mxu0 0
        %2683 = vmatpush1.bf16.msra.mxu0 0
        %2684 = vmatprep.subr.bf16.mxu0 0
        %2685 = vmatpush1.bf16.msra.mxu0 0
        %2686 = vmatprep.subr.bf16.mxu0 0
        %2687 = vmatpush1.bf16.msra.mxu0 0
        %2688 = vmatprep.mubr.bf16.mxu0 0
        %2689 = vmatmul.mubr.bf16.gmra.mrb[0].mxu0 %v2611
        %v2690 = vpop.f32.mrb[0].mxu0
        %v2691 = vadd.f32 0.0, %v2690
        %v2692 = vpop.f32.mrb[0].mxu0
        %v2693 = vadd.f32 0.0, %v2692
        %v2694 = vpop.f32.mrb[0].mxu0
        %v2695 = vadd.f32 0.0, %v2694
        %v2696 = vpop.f32.mrb[0].mxu0
        %v2697 = vadd.f32 0.0, %v2696
        %2698 = vdwg.mxu0
        %v2699 = vadd.f32 %v1971, %v2648
        %v2700 = vadd.f32 %v1973, %v2650
        %v2701 = vadd.f32 %v2014, %v2691
        %v2702 = vadd.f32 %v2016, %v2693
        %v2703 = vadd.f32 %v1975, %v2652
        %v2704 = vadd.f32 %v1977, %v2654
        %v2705 = vadd.f32 %v2018, %v2695
        %v2706 = vadd.f32 %v2020, %v2697
        %s2707 = scalar_lea.vmem %s5, 16
        %v2708 = vld [vmem:[%s2707] sm:$0xf]
        %v2709 = vld [vmem:[%s2707 + $0x4] sm:$0xf]
        %v2712 = vunpack.c.l.b16 %v2708
        %v2713 = vunpack.c.l.b16 %v2709
        %v2714 = vpack.c.b16 %v2713, %v2712
        %v2716 = vsel %vm1260, %v2714, 0
        %2718 = vmatprep.subr.bf16.mxu0 %v1250
        %2719 = vmatpush1.bf16.msra.mxu0 %v1249
        %2720 = vmatprep.subr.bf16.mxu0 %v1252
        %2721 = vmatpush1.bf16.msra.mxu0 %v1251
        %2722 = vmatprep.subr.bf16.mxu0 0
        %2723 = vmatpush1.bf16.msra.mxu0 0
        %2724 = vmatprep.subr.bf16.mxu0 0
        %2725 = vmatpush1.bf16.msra.mxu0 0
        %2726 = vmatprep.subr.bf16.mxu0 0
        %2727 = vmatpush1.bf16.msra.mxu0 0
        %2728 = vmatprep.subr.bf16.mxu0 0
        %2729 = vmatpush1.bf16.msra.mxu0 0
        %2730 = vmatprep.subr.bf16.mxu0 0
        %2731 = vmatpush1.bf16.msra.mxu0 0
        %2732 = vmatprep.subr.bf16.mxu0 0
        %2733 = vmatpush1.bf16.msra.mxu0 0
        %2734 = vmatprep.subr.bf16.mxu0 0
        %2735 = vmatpush1.bf16.msra.mxu0 0
        %2736 = vmatprep.subr.bf16.mxu0 0
        %2737 = vmatpush1.bf16.msra.mxu0 0
        %2738 = vmatprep.subr.bf16.mxu0 0
        %2739 = vmatpush1.bf16.msra.mxu0 0
        %2740 = vmatprep.subr.bf16.mxu0 0
        %2741 = vmatpush1.bf16.msra.mxu0 0
        %2742 = vmatprep.subr.bf16.mxu0 0
        %2743 = vmatpush1.bf16.msra.mxu0 0
        %2744 = vmatprep.subr.bf16.mxu0 0
        %2745 = vmatpush1.bf16.msra.mxu0 0
        %2746 = vmatprep.subr.bf16.mxu0 0
        %2747 = vmatpush1.bf16.msra.mxu0 0
        %2748 = vmatprep.subr.bf16.mxu0 0
        %2749 = vmatpush1.bf16.msra.mxu0 0
        %2750 = vmatprep.mubr.bf16.mxu0 0
        %2751 = vmatmul.mubr.bf16.gmra.mrb[0].mxu0 %v2716
        %v2752 = vpop.f32.mrb[0].mxu0
        %v2753 = vadd.f32 0.0, %v2752
        %v2754 = vpop.f32.mrb[0].mxu0
        %v2755 = vadd.f32 0.0, %v2754
        %v2756 = vpop.f32.mrb[0].mxu0
        %v2757 = vadd.f32 0.0, %v2756
        %v2758 = vpop.f32.mrb[0].mxu0
        %v2759 = vadd.f32 0.0, %v2758
        %2760 = vdwg.mxu0
        %v2761 = vpack.c.bf16 %v2757, %v2753
        %v2762 = vpack.c.bf16 %v2759, %v2755
        %s2763 = scalar_lea.vmem [#allocation5], 1024
        %v2764 = vld [vmem:[%s2763] sm:$0xff]
        %v2765 = vld [vmem:[%s2763 + $0x8] sm:$0xff]
        %v2766 = vld [vmem:[%s2763 + $0x10] sm:$0xff]
        %v2767 = vld [vmem:[%s2763 + $0x18] sm:$0xff]
        %v2768 = vld [vmem:[%s2763 + $0x20] sm:$0xff]
        %v2769 = vld [vmem:[%s2763 + $0x28] sm:$0xff]
        %v2770 = vld [vmem:[%s2763 + $0x30] sm:$0xff]
        %v2771 = vld [vmem:[%s2763 + $0x38] sm:$0xff]
        %v2772 = vld [vmem:[%s2763 + $0x40] sm:$0xff]
        %v2773 = vld [vmem:[%s2763 + $0x48] sm:$0xff]
        %v2774 = vld [vmem:[%s2763 + $0x50] sm:$0xff]
        %v2775 = vld [vmem:[%s2763 + $0x58] sm:$0xff]
        %v2776 = vld [vmem:[%s2763 + $0x60] sm:$0xff]
        %v2777 = vld [vmem:[%s2763 + $0x68] sm:$0xff]
        %v2778 = vld [vmem:[%s2763 + $0x70] sm:$0xff]
        %v2779 = vld [vmem:[%s2763 + $0x78] sm:$0xff]
        %v2780 = vld [vmem:[%s2763 + $0x80] sm:$0xff]
        %v2781 = vld [vmem:[%s2763 + $0x88] sm:$0xff]
        %v2782 = vld [vmem:[%s2763 + $0x90] sm:$0xff]
        %v2783 = vld [vmem:[%s2763 + $0x98] sm:$0xff]
        %v2784 = vld [vmem:[%s2763 + $0xa0] sm:$0xff]
        %v2785 = vld [vmem:[%s2763 + $0xa8] sm:$0xff]
        %v2786 = vld [vmem:[%s2763 + $0xb0] sm:$0xff]
        %v2787 = vld [vmem:[%s2763 + $0xb8] sm:$0xff]
        %v2788 = vld [vmem:[%s2763 + $0xc0] sm:$0xff]
        %v2789 = vld [vmem:[%s2763 + $0xc8] sm:$0xff]
        %v2790 = vld [vmem:[%s2763 + $0xd0] sm:$0xff]
        %v2791 = vld [vmem:[%s2763 + $0xd8] sm:$0xff]
        %v2792 = vld [vmem:[%s2763 + $0xe0] sm:$0xff]
        %v2793 = vld [vmem:[%s2763 + $0xe8] sm:$0xff]
        %v2794 = vld [vmem:[%s2763 + $0xf0] sm:$0xff]
        %v2795 = vld [vmem:[%s2763 + $0xf8] sm:$0xff]
        %v2796 = vld [vmem:[%s2763 + $0x100] sm:$0xff]
        %v2797 = vld [vmem:[%s2763 + $0x108] sm:$0xff]
        %v2798 = vld [vmem:[%s2763 + $0x110] sm:$0xff]
        %v2799 = vld [vmem:[%s2763 + $0x118] sm:$0xff]
        %v2800 = vld [vmem:[%s2763 + $0x120] sm:$0xff]
        %v2801 = vld [vmem:[%s2763 + $0x128] sm:$0xff]
        %v2802 = vld [vmem:[%s2763 + $0x130] sm:$0xff]
        %v2803 = vld [vmem:[%s2763 + $0x138] sm:$0xff]
        %v2804 = vld [vmem:[%s2763 + $0x140] sm:$0xff]
        %v2805 = vld [vmem:[%s2763 + $0x148] sm:$0xff]
        %v2806 = vld [vmem:[%s2763 + $0x150] sm:$0xff]
        %v2807 = vld [vmem:[%s2763 + $0x158] sm:$0xff]
        %v2808 = vld [vmem:[%s2763 + $0x160] sm:$0xff]
        %v2809 = vld [vmem:[%s2763 + $0x168] sm:$0xff]
        %v2810 = vld [vmem:[%s2763 + $0x170] sm:$0xff]
        %v2811 = vld [vmem:[%s2763 + $0x178] sm:$0xff]
        %v2812 = vld [vmem:[%s2763 + $0x180] sm:$0xff]
        %v2813 = vld [vmem:[%s2763 + $0x188] sm:$0xff]
        %v2814 = vld [vmem:[%s2763 + $0x190] sm:$0xff]
        %v2815 = vld [vmem:[%s2763 + $0x198] sm:$0xff]
        %v2816 = vld [vmem:[%s2763 + $0x1a0] sm:$0xff]
        %v2817 = vld [vmem:[%s2763 + $0x1a8] sm:$0xff]
        %v2818 = vld [vmem:[%s2763 + $0x1b0] sm:$0xff]
        %v2819 = vld [vmem:[%s2763 + $0x1b8] sm:$0xff]
        %v2820 = vld [vmem:[%s2763 + $0x1c0] sm:$0xff]
        %v2821 = vld [vmem:[%s2763 + $0x1c8] sm:$0xff]
        %v2822 = vld [vmem:[%s2763 + $0x1d0] sm:$0xff]
        %v2823 = vld [vmem:[%s2763 + $0x1d8] sm:$0xff]
        %v2824 = vld [vmem:[%s2763 + $0x1e0] sm:$0xff]
        %v2825 = vld [vmem:[%s2763 + $0x1e8] sm:$0xff]
        %v2826 = vld [vmem:[%s2763 + $0x1f0] sm:$0xff]
        %v2827 = vld [vmem:[%s2763 + $0x1f8] sm:$0xff]
        %v2892 = vunpack.c.l.b16 %v2764
        %v2893 = vunpack.c.h.b16 %v2764
        %v2894 = vunpack.c.l.b16 %v2765
        %v2895 = vunpack.c.h.b16 %v2765
        %v2896 = vunpack.c.l.b16 %v2766
        %v2897 = vunpack.c.h.b16 %v2766
        %v2898 = vunpack.c.l.b16 %v2767
        %v2899 = vunpack.c.h.b16 %v2767
        %v2900 = vunpack.c.l.b16 %v2768
        %v2901 = vunpack.c.h.b16 %v2768
        %v2902 = vunpack.c.l.b16 %v2769
        %v2903 = vunpack.c.h.b16 %v2769
        %v2904 = vunpack.c.l.b16 %v2770
        %v2905 = vunpack.c.h.b16 %v2770
        %v2906 = vunpack.c.l.b16 %v2771
        %v2907 = vunpack.c.h.b16 %v2771
        %v2908 = vunpack.c.l.b16 %v2772
        %v2909 = vunpack.c.h.b16 %v2772
        %v2910 = vunpack.c.l.b16 %v2773
        %v2911 = vunpack.c.h.b16 %v2773
        %v2912 = vunpack.c.l.b16 %v2774
        %v2913 = vunpack.c.h.b16 %v2774
        %v2914 = vunpack.c.l.b16 %v2775
        %v2915 = vunpack.c.h.b16 %v2775
        %v2916 = vunpack.c.l.b16 %v2776
        %v2917 = vunpack.c.h.b16 %v2776
        %v2918 = vunpack.c.l.b16 %v2777
        %v2919 = vunpack.c.h.b16 %v2777
        %v2920 = vunpack.c.l.b16 %v2778
        %v2921 = vunpack.c.h.b16 %v2778
        %v2922 = vunpack.c.l.b16 %v2779
        %v2923 = vunpack.c.h.b16 %v2779
        %v2924 = vunpack.c.l.b16 %v2780
        %v2925 = vunpack.c.h.b16 %v2780
        %v2926 = vunpack.c.l.b16 %v2781
        %v2927 = vunpack.c.h.b16 %v2781
        %v2928 = vunpack.c.l.b16 %v2782
        %v2929 = vunpack.c.h.b16 %v2782
        %v2930 = vunpack.c.l.b16 %v2783
        %v2931 = vunpack.c.h.b16 %v2783
        %v2932 = vunpack.c.l.b16 %v2784
        %v2933 = vunpack.c.h.b16 %v2784
        %v2934 = vunpack.c.l.b16 %v2785
        %v2935 = vunpack.c.h.b16 %v2785
        %v2936 = vunpack.c.l.b16 %v2786
        %v2937 = vunpack.c.h.b16 %v2786
        %v2938 = vunpack.c.l.b16 %v2787
        %v2939 = vunpack.c.h.b16 %v2787
        %v2940 = vunpack.c.l.b16 %v2788
        %v2941 = vunpack.c.h.b16 %v2788
        %v2942 = vunpack.c.l.b16 %v2789
        %v2943 = vunpack.c.h.b16 %v2789
        %v2944 = vunpack.c.l.b16 %v2790
        %v2945 = vunpack.c.h.b16 %v2790
        %v2946 = vunpack.c.l.b16 %v2791
        %v2947 = vunpack.c.h.b16 %v2791
        %v2948 = vunpack.c.l.b16 %v2792
        %v2949 = vunpack.c.h.b16 %v2792
        %v2950 = vunpack.c.l.b16 %v2793
        %v2951 = vunpack.c.h.b16 %v2793
        %v2952 = vunpack.c.l.b16 %v2794
        %v2953 = vunpack.c.h.b16 %v2794
        %v2954 = vunpack.c.l.b16 %v2795
        %v2955 = vunpack.c.h.b16 %v2795
        %v2956 = vunpack.c.l.b16 %v2796
        %v2957 = vunpack.c.h.b16 %v2796
        %v2958 = vunpack.c.l.b16 %v2797
        %v2959 = vunpack.c.h.b16 %v2797
        %v2960 = vunpack.c.l.b16 %v2798
        %v2961 = vunpack.c.h.b16 %v2798
        %v2962 = vunpack.c.l.b16 %v2799
        %v2963 = vunpack.c.h.b16 %v2799
        %v2964 = vunpack.c.l.b16 %v2800
        %v2965 = vunpack.c.h.b16 %v2800
        %v2966 = vunpack.c.l.b16 %v2801
        %v2967 = vunpack.c.h.b16 %v2801
        %v2968 = vunpack.c.l.b16 %v2802
        %v2969 = vunpack.c.h.b16 %v2802
        %v2970 = vunpack.c.l.b16 %v2803
        %v2971 = vunpack.c.h.b16 %v2803
        %v2972 = vunpack.c.l.b16 %v2804
        %v2973 = vunpack.c.h.b16 %v2804
        %v2974 = vunpack.c.l.b16 %v2805
        %v2975 = vunpack.c.h.b16 %v2805
        %v2976 = vunpack.c.l.b16 %v2806
        %v2977 = vunpack.c.h.b16 %v2806
        %v2978 = vunpack.c.l.b16 %v2807
        %v2979 = vunpack.c.h.b16 %v2807
        %v2980 = vunpack.c.l.b16 %v2808
        %v2981 = vunpack.c.h.b16 %v2808
        %v2982 = vunpack.c.l.b16 %v2809
        %v2983 = vunpack.c.h.b16 %v2809
        %v2984 = vunpack.c.l.b16 %v2810
        %v2985 = vunpack.c.h.b16 %v2810
        %v2986 = vunpack.c.l.b16 %v2811
        %v2987 = vunpack.c.h.b16 %v2811
        %v2988 = vunpack.c.l.b16 %v2812
        %v2989 = vunpack.c.h.b16 %v2812
        %v2990 = vunpack.c.l.b16 %v2813
        %v2991 = vunpack.c.h.b16 %v2813
        %v2992 = vunpack.c.l.b16 %v2814
        %v2993 = vunpack.c.h.b16 %v2814
        %v2994 = vunpack.c.l.b16 %v2815
        %v2995 = vunpack.c.h.b16 %v2815
        %v2996 = vunpack.c.l.b16 %v2816
        %v2997 = vunpack.c.h.b16 %v2816
        %v2998 = vunpack.c.l.b16 %v2817
        %v2999 = vunpack.c.h.b16 %v2817
        %v3000 = vunpack.c.l.b16 %v2818
        %v3001 = vunpack.c.h.b16 %v2818
        %v3002 = vunpack.c.l.b16 %v2819
        %v3003 = vunpack.c.h.b16 %v2819
        %v3004 = vunpack.c.l.b16 %v2820
        %v3005 = vunpack.c.h.b16 %v2820
        %v3006 = vunpack.c.l.b16 %v2821
        %v3007 = vunpack.c.h.b16 %v2821
        %v3008 = vunpack.c.l.b16 %v2822
        %v3009 = vunpack.c.h.b16 %v2822
        %v3010 = vunpack.c.l.b16 %v2823
        %v3011 = vunpack.c.h.b16 %v2823
        %v3012 = vunpack.c.l.b16 %v2824
        %v3013 = vunpack.c.h.b16 %v2824
        %v3014 = vunpack.c.l.b16 %v2825
        %v3015 = vunpack.c.h.b16 %v2825
        %v3016 = vunpack.c.l.b16 %v2826
        %v3017 = vunpack.c.h.b16 %v2826
        %v3018 = vunpack.c.l.b16 %v2827
        %v3019 = vunpack.c.h.b16 %v2827
        %v3020 = vpack.c.b16 %v2896, %v2892
        %v3021 = vpack.c.b16 %v2897, %v2893
        %v3022 = vpack.c.b16 %v2898, %v2894
        %v3023 = vpack.c.b16 %v2899, %v2895
        %v3024 = vpack.c.b16 %v2904, %v2900
        %v3025 = vpack.c.b16 %v2905, %v2901
        %v3026 = vpack.c.b16 %v2906, %v2902
        %v3027 = vpack.c.b16 %v2907, %v2903
        %v3028 = vpack.c.b16 %v2912, %v2908
        %v3029 = vpack.c.b16 %v2913, %v2909
        %v3030 = vpack.c.b16 %v2914, %v2910
        %v3031 = vpack.c.b16 %v2915, %v2911
        %v3032 = vpack.c.b16 %v2920, %v2916
        %v3033 = vpack.c.b16 %v2921, %v2917
        %v3034 = vpack.c.b16 %v2922, %v2918
        %v3035 = vpack.c.b16 %v2923, %v2919
        %v3036 = vpack.c.b16 %v2928, %v2924
        %v3037 = vpack.c.b16 %v2929, %v2925
        %v3038 = vpack.c.b16 %v2930, %v2926
        %v3039 = vpack.c.b16 %v2931, %v2927
        %v3040 = vpack.c.b16 %v2936, %v2932
        %v3041 = vpack.c.b16 %v2937, %v2933
        %v3042 = vpack.c.b16 %v2938, %v2934
        %v3043 = vpack.c.b16 %v2939, %v2935
        %v3044 = vpack.c.b16 %v2944, %v2940
        %v3045 = vpack.c.b16 %v2945, %v2941
        %v3046 = vpack.c.b16 %v2946, %v2942
        %v3047 = vpack.c.b16 %v2947, %v2943
        %v3048 = vpack.c.b16 %v2952, %v2948
        %v3049 = vpack.c.b16 %v2953, %v2949
        %v3050 = vpack.c.b16 %v2954, %v2950
        %v3051 = vpack.c.b16 %v2955, %v2951
        %v3052 = vpack.c.b16 %v2960, %v2956
        %v3053 = vpack.c.b16 %v2961, %v2957
        %v3054 = vpack.c.b16 %v2962, %v2958
        %v3055 = vpack.c.b16 %v2963, %v2959
        %v3056 = vpack.c.b16 %v2968, %v2964
        %v3057 = vpack.c.b16 %v2969, %v2965
        %v3058 = vpack.c.b16 %v2970, %v2966
        %v3059 = vpack.c.b16 %v2971, %v2967
        %v3060 = vpack.c.b16 %v2976, %v2972
        %v3061 = vpack.c.b16 %v2977, %v2973
        %v3062 = vpack.c.b16 %v2978, %v2974
        %v3063 = vpack.c.b16 %v2979, %v2975
        %v3064 = vpack.c.b16 %v2984, %v2980
        %v3065 = vpack.c.b16 %v2985, %v2981
        %v3066 = vpack.c.b16 %v2986, %v2982
        %v3067 = vpack.c.b16 %v2987, %v2983
        %v3068 = vpack.c.b16 %v2992, %v2988
        %v3069 = vpack.c.b16 %v2993, %v2989
        %v3070 = vpack.c.b16 %v2994, %v2990
        %v3071 = vpack.c.b16 %v2995, %v2991
        %v3072 = vpack.c.b16 %v3000, %v2996
        %v3073 = vpack.c.b16 %v3001, %v2997
        %v3074 = vpack.c.b16 %v3002, %v2998
        %v3075 = vpack.c.b16 %v3003, %v2999
        %v3076 = vpack.c.b16 %v3008, %v3004
        %v3077 = vpack.c.b16 %v3009, %v3005
        %v3078 = vpack.c.b16 %v3010, %v3006
        %v3079 = vpack.c.b16 %v3011, %v3007
        %v3080 = vpack.c.b16 %v3016, %v3012
        %v3081 = vpack.c.b16 %v3017, %v3013
        %v3082 = vpack.c.b16 %v3018, %v3014
        %v3083 = vpack.c.b16 %v3019, %v3015
        %3148 = vmatprep.subr.bf16.mxu0 %v3021
        %3149 = vmatpush1.bf16.msra.mxu0 %v3020
        %3150 = vmatprep.subr.bf16.mxu0 %v3025
        %3151 = vmatpush1.bf16.msra.mxu0 %v3024
        %3152 = vmatprep.subr.bf16.mxu0 %v3029
        %3153 = vmatpush1.bf16.msra.mxu0 %v3028
        %3154 = vmatprep.subr.bf16.mxu0 %v3033
        %3155 = vmatpush1.bf16.msra.mxu0 %v3032
        %3156 = vmatprep.subr.bf16.mxu0 %v3037
        %3157 = vmatpush1.bf16.msra.mxu0 %v3036
        %3158 = vmatprep.subr.bf16.mxu0 %v3041
        %3159 = vmatpush1.bf16.msra.mxu0 %v3040
        %3160 = vmatprep.subr.bf16.mxu0 %v3045
        %3161 = vmatpush1.bf16.msra.mxu0 %v3044
        %3162 = vmatprep.subr.bf16.mxu0 %v3049
        %3163 = vmatpush1.bf16.msra.mxu0 %v3048
        %3164 = vmatprep.subr.bf16.mxu0 %v3053
        %3165 = vmatpush1.bf16.msra.mxu0 %v3052
        %3166 = vmatprep.subr.bf16.mxu0 %v3057
        %3167 = vmatpush1.bf16.msra.mxu0 %v3056
        %3168 = vmatprep.subr.bf16.mxu0 %v3061
        %3169 = vmatpush1.bf16.msra.mxu0 %v3060
        %3170 = vmatprep.subr.bf16.mxu0 %v3065
        %3171 = vmatpush1.bf16.msra.mxu0 %v3064
        %3172 = vmatprep.subr.bf16.mxu0 %v3069
        %3173 = vmatpush1.bf16.msra.mxu0 %v3068
        %3174 = vmatprep.subr.bf16.mxu0 %v3073
        %3175 = vmatpush1.bf16.msra.mxu0 %v3072
        %3176 = vmatprep.subr.bf16.mxu0 %v3077
        %3177 = vmatpush1.bf16.msra.mxu0 %v3076
        %3178 = vmatprep.subr.bf16.mxu0 %v3081
        %3179 = vmatpush1.bf16.msra.mxu0 %v3080
        %3180 = vmatprep.mubr.bf16.mxu0 %v2762
        %3181 = vmatmul.mubr.bf16.gmra.mrb[0].mxu0 %v2761
        %v3182 = vpop.f32.mrb[0].mxu0
        %v3183 = vadd.f32 0.0, %v3182
        %v3184 = vpop.f32.mrb[0].mxu0
        %v3185 = vadd.f32 0.0, %v3184
        %v3186 = vpop.f32.mrb[0].mxu0
        %v3187 = vadd.f32 0.0, %v3186
        %v3188 = vpop.f32.mrb[0].mxu0
        %v3189 = vadd.f32 0.0, %v3188
        %3190 = vdwg.mxu0
        %3191 = vmatprep.subr.bf16.mxu0 %v3023
        %3192 = vmatpush1.bf16.msra.mxu0 %v3022
        %3193 = vmatprep.subr.bf16.mxu0 %v3027
        %3194 = vmatpush1.bf16.msra.mxu0 %v3026
        %3195 = vmatprep.subr.bf16.mxu0 %v3031
        %3196 = vmatpush1.bf16.msra.mxu0 %v3030
        %3197 = vmatprep.subr.bf16.mxu0 %v3035
        %3198 = vmatpush1.bf16.msra.mxu0 %v3034
        %3199 = vmatprep.subr.bf16.mxu0 %v3039
        %3200 = vmatpush1.bf16.msra.mxu0 %v3038
        %3201 = vmatprep.subr.bf16.mxu0 %v3043
        %3202 = vmatpush1.bf16.msra.mxu0 %v3042
        %3203 = vmatprep.subr.bf16.mxu0 %v3047
        %3204 = vmatpush1.bf16.msra.mxu0 %v3046
        %3205 = vmatprep.subr.bf16.mxu0 %v3051
        %3206 = vmatpush1.bf16.msra.mxu0 %v3050
        %3207 = vmatprep.subr.bf16.mxu0 %v3055
        %3208 = vmatpush1.bf16.msra.mxu0 %v3054
        %3209 = vmatprep.subr.bf16.mxu0 %v3059
        %3210 = vmatpush1.bf16.msra.mxu0 %v3058
        %3211 = vmatprep.subr.bf16.mxu0 %v3063
        %3212 = vmatpush1.bf16.msra.mxu0 %v3062
        %3213 = vmatprep.subr.bf16.mxu0 %v3067
        %3214 = vmatpush1.bf16.msra.mxu0 %v3066
        %3215 = vmatprep.subr.bf16.mxu0 %v3071
        %3216 = vmatpush1.bf16.msra.mxu0 %v3070
        %3217 = vmatprep.subr.bf16.mxu0 %v3075
        %3218 = vmatpush1.bf16.msra.mxu0 %v3074
        %3219 = vmatprep.subr.bf16.mxu0 %v3079
        %3220 = vmatpush1.bf16.msra.mxu0 %v3078
        %3221 = vmatprep.subr.bf16.mxu0 %v3083
        %3222 = vmatpush1.bf16.msra.mxu0 %v3082
        %3223 = vmatprep.mubr.bf16.mxu0 %v2762
        %3224 = vmatmul.mubr.bf16.gmra.mrb[0].mxu0 %v2761
        %v3225 = vpop.f32.mrb[0].mxu0
        %v3226 = vadd.f32 0.0, %v3225
        %v3227 = vpop.f32.mrb[0].mxu0
        %v3228 = vadd.f32 0.0, %v3227
        %v3229 = vpop.f32.mrb[0].mxu0
        %v3230 = vadd.f32 0.0, %v3229
        %v3231 = vpop.f32.mrb[0].mxu0
        %v3232 = vadd.f32 0.0, %v3231
        %3233 = vdwg.mxu0
        %s3234 = scalar_lea.vmem %s8, 64
        %v3235 = vld [vmem:[%s3234] sm:$0xff]
        %v3236 = vld [vmem:[%s3234 + $0x8] sm:$0xff]
        %v3237 = vld [vmem:[%s3234 + $0x10] sm:$0xff]
        %v3238 = vld [vmem:[%s3234 + $0x18] sm:$0xff]
        %3240 = vset.pattern.permute.xlu0 0
        %3241 = vperm.xlu0 %3240, %v3235
        %v3242 = vpop.permute.xlu0 %3241
        %3245 = vset.pattern.permute.xlu0 0
        %3246 = vperm.xlu0 %3245, %v3236
        %v3247 = vpop.permute.xlu0 %3246
        %v3249 = vmul.f32 %v3183, %v3242
        %v3250 = vmul.f32 %v3185, %v3242
        %v3251 = vmul.f32 %v3226, %v3242
        %v3252 = vmul.f32 %v3228, %v3242
        %v3253 = vmul.f32 %v3187, %v3247
        %v3254 = vmul.f32 %v3189, %v3247
        %v3255 = vmul.f32 %v3230, %v3247
        %v3256 = vmul.f32 %v3232, %v3247
        %3258 = vset.pattern.permute.xlu0 0
        %3259 = vperm.xlu0 %3258, %v3237
        %v3260 = vpop.permute.xlu0 %3259
        %3263 = vset.pattern.permute.xlu0 0
        %3264 = vperm.xlu0 %3263, %v3238
        %v3265 = vpop.permute.xlu0 %3264
        %v3267 = vadd.f32 %v3249, %v3260
        %v3268 = vadd.f32 %v3250, %v3260
        %v3269 = vadd.f32 %v3251, %v3260
        %v3270 = vadd.f32 %v3252, %v3260
        %v3271 = vadd.f32 %v3253, %v3265
        %v3272 = vadd.f32 %v3254, %v3265
        %v3273 = vadd.f32 %v3255, %v3265
        %v3274 = vadd.f32 %v3256, %v3265
        %v3275 = vmax.f32 %v3267, 0.0
        %v3276 = vmax.f32 %v3268, 0.0
        %v3277 = vmax.f32 %v3269, 0.0
        %v3278 = vmax.f32 %v3270, 0.0
        %v3279 = vmax.f32 %v3271, 0.0
        %v3280 = vmax.f32 %v3272, 0.0
        %v3281 = vmax.f32 %v3273, 0.0
        %v3282 = vmax.f32 %v3274, 0.0
        %s3283 = scalar_lea.vmem %s10, 16
        %v3284 = vld [vmem:[%s3283] sm:$0xf]
        %v3285 = vld [vmem:[%s3283 + $0x4] sm:$0xf]
        %v3286 = vpack.c.bf16 %v3279, %v3275
        %v3287 = vpack.c.bf16 %v3280, %v3276
        %v3288 = vpack.c.bf16 %v3281, %v3277
        %v3289 = vpack.c.bf16 %v3282, %v3278
        %v3292 = vunpack.c.l.b16 %v3284
        %v3293 = vunpack.c.l.b16 %v3285
        %v3294 = vpack.c.b16 %v3293, %v3292
        %v3296 = vsel %vm1838, %v3294, 0
        %3298 = vmatprep.subr.bf16.mxu0 %v3287
        %3299 = vmatpush1.bf16.msra.mxu0 %v3286
        %3300 = vmatprep.subr.bf16.mxu0 0
        %3301 = vmatpush1.bf16.msra.mxu0 0
        %3302 = vmatprep.subr.bf16.mxu0 0
        %3303 = vmatpush1.bf16.msra.mxu0 0
        %3304 = vmatprep.subr.bf16.mxu0 0
        %3305 = vmatpush1.bf16.msra.mxu0 0
        %3306 = vmatprep.subr.bf16.mxu0 0
        %3307 = vmatpush1.bf16.msra.mxu0 0
        %3308 = vmatprep.subr.bf16.mxu0 0
        %3309 = vmatpush1.bf16.msra.mxu0 0
        %3310 = vmatprep.subr.bf16.mxu0 0
        %3311 = vmatpush1.bf16.msra.mxu0 0
        %3312 = vmatprep.subr.bf16.mxu0 0
        %3313 = vmatpush1.bf16.msra.mxu0 0
        %3314 = vmatprep.subr.bf16.mxu0 0
        %3315 = vmatpush1.bf16.msra.mxu0 0
        %3316 = vmatprep.subr.bf16.mxu0 0
        %3317 = vmatpush1.bf16.msra.mxu0 0
        %3318 = vmatprep.subr.bf16.mxu0 0
        %3319 = vmatpush1.bf16.msra.mxu0 0
        %3320 = vmatprep.subr.bf16.mxu0 0
        %3321 = vmatpush1.bf16.msra.mxu0 0
        %3322 = vmatprep.subr.bf16.mxu0 0
        %3323 = vmatpush1.bf16.msra.mxu0 0
        %3324 = vmatprep.subr.bf16.mxu0 0
        %3325 = vmatpush1.bf16.msra.mxu0 0
        %3326 = vmatprep.subr.bf16.mxu0 0
        %3327 = vmatpush1.bf16.msra.mxu0 0
        %3328 = vmatprep.subr.bf16.mxu0 0
        %3329 = vmatpush1.bf16.msra.mxu0 0
        %3330 = vmatprep.mubr.bf16.mxu0 0
        %3331 = vmatmul.mubr.bf16.gmra.mrb[0].mxu0 %v3296
        %v3332 = vpop.f32.mrb[0].mxu0
        %v3333 = vadd.f32 0.0, %v3332
        %v3334 = vpop.f32.mrb[0].mxu0
        %v3335 = vadd.f32 0.0, %v3334
        %v3336 = vpop.f32.mrb[0].mxu0
        %v3337 = vadd.f32 0.0, %v3336
        %v3338 = vpop.f32.mrb[0].mxu0
        %v3339 = vadd.f32 0.0, %v3338
        %3340 = vdwg.mxu0
        %3341 = vmatprep.subr.bf16.mxu0 %v3289
        %3342 = vmatpush1.bf16.msra.mxu0 %v3288
        %3343 = vmatprep.subr.bf16.mxu0 0
        %3344 = vmatpush1.bf16.msra.mxu0 0
        %3345 = vmatprep.subr.bf16.mxu0 0
        %3346 = vmatpush1.bf16.msra.mxu0 0
        %3347 = vmatprep.subr.bf16.mxu0 0
        %3348 = vmatpush1.bf16.msra.mxu0 0
        %3349 = vmatprep.subr.bf16.mxu0 0
        %3350 = vmatpush1.bf16.msra.mxu0 0
        %3351 = vmatprep.subr.bf16.mxu0 0
        %3352 = vmatpush1.bf16.msra.mxu0 0
        %3353 = vmatprep.subr.bf16.mxu0 0
        %3354 = vmatpush1.bf16.msra.mxu0 0
        %3355 = vmatprep.subr.bf16.mxu0 0
        %3356 = vmatpush1.bf16.msra.mxu0 0
        %3357 = vmatprep.subr.bf16.mxu0 0
        %3358 = vmatpush1.bf16.msra.mxu0 0
        %3359 = vmatprep.subr.bf16.mxu0 0
        %3360 = vmatpush1.bf16.msra.mxu0 0
        %3361 = vmatprep.subr.bf16.mxu0 0
        %3362 = vmatpush1.bf16.msra.mxu0 0
        %3363 = vmatprep.subr.bf16.mxu0 0
        %3364 = vmatpush1.bf16.msra.mxu0 0
        %3365 = vmatprep.subr.bf16.mxu0 0
        %3366 = vmatpush1.bf16.msra.mxu0 0
        %3367 = vmatprep.subr.bf16.mxu0 0
        %3368 = vmatpush1.bf16.msra.mxu0 0
        %3369 = vmatprep.subr.bf16.mxu0 0
        %3370 = vmatpush1.bf16.msra.mxu0 0
        %3371 = vmatprep.subr.bf16.mxu0 0
        %3372 = vmatpush1.bf16.msra.mxu0 0
        %3373 = vmatprep.mubr.bf16.mxu0 0
        %3374 = vmatmul.mubr.bf16.gmra.mrb[0].mxu0 %v3296
        %v3375 = vpop.f32.mrb[0].mxu0
        %v3376 = vadd.f32 0.0, %v3375
        %v3377 = vpop.f32.mrb[0].mxu0
        %v3378 = vadd.f32 0.0, %v3377
        %v3379 = vpop.f32.mrb[0].mxu0
        %v3380 = vadd.f32 0.0, %v3379
        %v3381 = vpop.f32.mrb[0].mxu0
        %v3382 = vadd.f32 0.0, %v3381
        %3383 = vdwg.mxu0
        %v3384 = vadd.f32 %v2699, %v3333
        %v3385 = vadd.f32 %v2700, %v3335
        %v3386 = vadd.f32 %v2701, %v3376
        %v3387 = vadd.f32 %v2702, %v3378
        %v3388 = vadd.f32 %v2703, %v3337
        %v3389 = vadd.f32 %v2704, %v3339
        %v3390 = vadd.f32 %v2705, %v3380
        %v3391 = vadd.f32 %v2706, %v3382
        %3392 = vst [vmem:[%s424] sm:$0xff] %v3384
        %3393 = vst [vmem:[%s424 + $0x8] sm:$0xff] %v3385
        %3394 = vst [vmem:[%s424 + $0x10] sm:$0xff] %v3386
        %3395 = vst [vmem:[%s424 + $0x18] sm:$0xff] %v3387
        %3396 = vst [vmem:[%s424 + $0x20] sm:$0xff] %v3388
        %3397 = vst [vmem:[%s424 + $0x28] sm:$0xff] %v3389
        %3398 = vst [vmem:[%s424 + $0x30] sm:$0xff] %v3390
        %3399 = vst [vmem:[%s424 + $0x38] sm:$0xff] %v3391
        %s3400 = sand.u32 %s271, 1
        %s3401 = scalar_lea.sflag [#allocation4], %s3400
        %s3402 = sand.u32 %s271, 1
        %s3403 = smul.addr %s3402, 64
        %s3404 = scalar_lea.vmem [#allocation8], %s3403
        // Predicated region
        $region77: #{tpu_custom_call.1} parent=63 // pred_check
          %p3405 = pneg %p281
        $region78: #{tpu_custom_call.1} parent=63 // pred_check_branch
          %3407 = sbr.rel (%p3405) target = $region80
        $region79: #{tpu_custom_call.1} parent=63 // pred_region
          %s3408 = smul.u32 4, %s27
          %s3410 = ssub.s32 1024, 1024
          %3411 = vsyncadd %s3401, %s3410
          %s3412 = smul.addr %s3408, 128
          %s3413 = scalar_lea.hbm %s11, %s3412
          %s3414 = sshll.u32 %s3404, 4
          %s3415 = int_to_ptr.vmem [resolvable:$true] %s3414
          %3420 = dma.vmem_to_hbm [thread:$0]  %s3415, 1024, %s3413, %s3401, 512, 1024, 32
        $region80: #{tpu_custom_call.1} parent=63 // pred_fallthru
          _
      $region64: #{tpu_custom_call.1} parent=5 // pred_fallthru
        _
      %p3421 = scmp.le.s32.totalorder 2, %s22
      // Predicated region
      $region81: #{tpu_custom_call.1} parent=5 // pred_check
        %p3422 = pneg %p3421
      $region82: #{tpu_custom_call.1} parent=5 // pred_check_branch
        %3424 = sbr.rel (%p3422) target = $region84
      $region83: #{tpu_custom_call.1} parent=5 // pred_region
        %s3425 = ssub.s32 %s22, 2
        // Predicated region
        $region85: #{tpu_custom_call.1} parent=83 // pred_check
          %p3426 = pneg %p287
        $region86: #{tpu_custom_call.1} parent=83 // pred_check_branch
          %3428 = sbr.rel (%p3426) target = $region88
        $region87: #{tpu_custom_call.1} parent=83 // pred_region
          %s3429 = sand.u32 %s272, 1
          %s3430 = scalar_lea.sflag [#allocation4], %s3429
          %s3431 = sand.u32 %s272, 1
          %s3432 = smul.addr %s3431, 64
          %s3433 = scalar_lea.vmem [#allocation8], %s3432
          %3434 = dma.done %s3430, 1024
        $region88: #{tpu_custom_call.1} parent=83 // pred_fallthru
          _
      $region84: #{tpu_custom_call.1} parent=5 // pred_fallthru
        _
    $region6: #{tpu_custom_call.1} parent=1 // loop_footer
      %s26 = sadd.s32 1, %s22
    $region7: #{tpu_custom_call.1} parent=1 // loop_footer_branch
      %21 = sbr.rel target = $region3
    $region8: #{tpu_custom_call.1} parent=1 // loop_exit
      _
    %3435 = vsyncpa [#allocation3], 1
    %s3436 = scalar_lea.sflag [#allocation3], 1
    %3437 = vsyncpa %s3436, 1
    %3438 = vsyncpa [#allocation6], 1
    %3439 = vsyncpa [#allocation4], 1
    %s3440 = scalar_lea.sflag [#allocation4], 1
    %3441 = vsyncpa %s3440, 1

</llo_original>
